<compile_context>
chip_gen: v7x
topology: tpu7x:2x2x1
jax: 0.10.0
libtpu: 0.0.40
codegen_flags: <defaults>
</compile_context>

<pallas_src>
import math

import jax
import jax.numpy as jnp
from jax.experimental import pallas as pl
from jax.experimental.pallas import tpu as pltpu

# ----------------------- small DistilBERT-like config -----------------------
B, S = 2, 8                 # batch, sequence length
H = 64                      # hidden size
NH, DH = 4, 16              # heads, head dim
FFN = 128                   # feed-forward inner dim
LAYERS = 2                  # transformer blocks
VOCAB = 100                 # vocab size
MAXPOS = 32                 # max position embeddings
NUM_CLASSES = 4
LOGIT_PAD = 128             # lane-dense padded logits width
EPS = 1e-12                 # DistilBERT LayerNorm eps


def _layernorm(x, g, b):
    # f32 LayerNorm (VPU); g/b are (1, H) and broadcast over rows.
    mu = jnp.mean(x, axis=-1, keepdims=True)
    var = jnp.mean((x - mu) ** 2, axis=-1, keepdims=True)
    return (x - mu) * jax.lax.rsqrt(var + EPS) * g + b


def _gelu_exact(x):
    # Exact (erf) GELU matching DistilBERT. erf via the Abramowitz–Stegun
    # 7.1.26 polynomial (|err| < 1.5e-7) so only mul/add/exp are needed.
    z = x * 0.7071067811865476
    a = jnp.abs(z)
    t = 1.0 / (1.0 + 0.3275911 * a)
    poly = t * (0.254829592 + t * (-0.284496736 + t * (1.421413741
               + t * (-1.453152027 + t * 1.061405429))))
    erf_abs = 1.0 - poly * jnp.exp(-a * a)
    erf = jnp.where(z >= 0.0, erf_abs, -erf_abs)
    return 0.5 * x * (1.0 + erf)


# ------------------------------ fused kernel ---------------------------------
def fused_forward_kernel(
    we_ref,                      # (B*S, H)  f32  gathered word embeddings
    pe_ref,                      # (S, H)    f32  position embeddings
    bias_ref,                    # (B, S)    f32  additive attention bias
    emb_g_ref, emb_b_ref,        # (1, H)    f32  embedding LayerNorm
    wqkv_ref, bqkv_ref,          # (L, H, 3H) bf16 / (L, 1, 3H) f32 (scale folded)
    wo_ref, bo_ref,              # (L, H, H)  bf16 / (L, 1, H)  f32
    ln1_g_ref, ln1_b_ref,        # (L, 1, H)  f32
    w1_ref, bf1_ref,             # (L, H, FFN) bf16 / (L, 1, FFN) f32
    w2_ref, bf2_ref,             # (L, FFN, H) bf16 / (L, 1, H)  f32
    ln2_g_ref, ln2_b_ref,        # (L, 1, H)  f32
    cls_w_ref, cls_b_ref,        # (H, 128) bf16 / (1, 128) f32 (zero-padded)
    o_ref,                       # (B, 128)  f32 padded logits
):
    f32 = jnp.float32
    bf16 = jnp.bfloat16

    # ---------------- embeddings: word + position, then LayerNorm ------------
    pe = jnp.concatenate([pe_ref[...]] * B, axis=0)           # (B*S, H)
    x = we_ref[...] + pe                                       # (B*S, H) f32
    x = _layernorm(x, emb_g_ref[...], emb_b_ref[...])

    # Additive mask bias stacked to match the (b, h) block ordering of the
    # score matrix: shape (B*NH*S, S). Built once (outside the layer loop).
    bias = bias_ref[...]                                       # (B, S)
    bias_stack = jnp.concatenate(
        [jnp.broadcast_to(bias[b:b + 1, :], (S, S))
         for b in range(B) for _ in range(NH)], axis=0)        # (B*NH*S, S)

    # ---------------- transformer layers (statically unrolled) ---------------
    for l in range(LAYERS):
        # Fused QKV projection: one (B*S,H)@(H,3H) MXU matmul, bf16 in/f32 acc.
        qkv = jnp.dot(x.astype(bf16), wqkv_ref[l],
                      preferred_element_type=f32) + bqkv_ref[l]      # (B*S, 3H)
        q = qkv[:, 0:H].astype(bf16)          # 1/sqrt(DH) folded into weights
        k = qkv[:, H:2 * H].astype(bf16)
        v = qkv[:, 2 * H:3 * H].astype(bf16)

        # Scores for every (batch, head) pair, stacked along sublanes so the
        # softmax is a single pass over (B*NH*S, S).
        score_blocks = []
        for b in range(B):
            rows = slice(b * S, (b + 1) * S)
            for hd in range(NH):
                cols = slice(hd * DH, (hd + 1) * DH)
                score_blocks.append(jax.lax.dot_general(       # q_h @ k_h^T
                    q[rows, cols], k[rows, cols],
                    dimension_numbers=(((1,), (1,)), ((), ())),
                    preferred_element_type=f32))               # (S, S)
        scores = jnp.concatenate(score_blocks, axis=0) + bias_stack
        scores = scores - jnp.max(scores, axis=-1, keepdims=True)
        p = jnp.exp(scores)
        p = p * pl.reciprocal(jnp.sum(p, axis=-1, keepdims=True), approx=True)

        # Context: per-(b, h) P @ V, reassembled purely in vregs (no scratch).
        ctx_rows = []
        for b in range(B):
            rows = slice(b * S, (b + 1) * S)
            head_ctx = []
            for hd in range(NH):
                blk = b * NH + hd
                cols = slice(hd * DH, (hd + 1) * DH)
                p_blk = p[blk * S:(blk + 1) * S, :].astype(bf16)     # (S, S)
                head_ctx.append(jnp.dot(p_blk, v[rows, cols],
                                        preferred_element_type=f32))  # (S, DH)
            ctx_rows.append(jnp.concatenate(head_ctx, axis=-1))       # (S, H)
        ctx = jnp.concatenate(ctx_rows, axis=0)                       # (B*S, H)

        attn = jnp.dot(ctx.astype(bf16), wo_ref[l],
                       preferred_element_type=f32) + bo_ref[l]        # (B*S, H)
        sa = _layernorm(x + attn, ln1_g_ref[l], ln1_b_ref[l])

        hdn = jnp.dot(sa.astype(bf16), w1_ref[l],
                      preferred_element_type=f32) + bf1_ref[l]        # (B*S, FFN)
        hdn = _gelu_exact(hdn)
        ffn = jnp.dot(hdn.astype(bf16), w2_ref[l],
                      preferred_element_type=f32) + bf2_ref[l]        # (B*S, H)
        x = _layernorm(sa + ffn, ln2_g_ref[l], ln2_b_ref[l])

    # ------------------------------ classifier --------------------------------
    cls = jnp.concatenate([x[b * S:b * S + 1, :] for b in range(B)], axis=0)
    logits = jnp.dot(cls.astype(bf16), cls_w_ref[...],
                     preferred_element_type=f32) + cls_b_ref[...]     # (B, 128)
    o_ref[...] = logits        # lane-dense (128-wide) store; wrapper slices :4


# ------------------------------ parameter init -------------------------------
def init_params(key):
    def nrm(k, shape):
        return jax.random.normal(k, shape, jnp.float32) * 0.02

    keys = iter(jax.random.split(key, 3 + 4 * LAYERS))
    params = {
        'word_emb': nrm(next(keys), (VOCAB, H)),
        'pos_emb': nrm(next(keys), (MAXPOS, H)),
        'emb_ln_g': jnp.ones((1, H), jnp.float32),
        'emb_ln_b': jnp.zeros((1, H), jnp.float32),
    }
    cls_w = nrm(next(keys), (H, NUM_CLASSES))
    params['cls_w'] = jnp.pad(
        cls_w, ((0, 0), (0, LOGIT_PAD - NUM_CLASSES))).astype(jnp.bfloat16)
    params['cls_b'] = jnp.zeros((1, LOGIT_PAD), jnp.float32)

    scale = 1.0 / math.sqrt(DH)
    wqkv, wo, w1, w2 = [], [], [], []
    for _ in range(LAYERS):
        w = nrm(next(keys), (H, 3 * H))
        # Fold the attention 1/sqrt(DH) scale into the Q projection columns.
        w = w.at[:, 0:H].multiply(scale)
        wqkv.append(w)
        wo.append(nrm(next(keys), (H, H)))
        w1.append(nrm(next(keys), (H, FFN)))
        w2.append(nrm(next(keys), (FFN, H)))

    params.update({
        'wqkv': jnp.stack(wqkv).astype(jnp.bfloat16),          # (L, H, 3H)
        'bqkv': jnp.zeros((LAYERS, 1, 3 * H), jnp.float32),    # Q-part pre-scaled (zeros)
        'wo': jnp.stack(wo).astype(jnp.bfloat16),              # (L, H, H)
        'bo': jnp.zeros((LAYERS, 1, H), jnp.float32),
        'ln1_g': jnp.ones((LAYERS, 1, H), jnp.float32),
        'ln1_b': jnp.zeros((LAYERS, 1, H), jnp.float32),
        'w1': jnp.stack(w1).astype(jnp.bfloat16),              # (L, H, FFN)
        'bf1': jnp.zeros((LAYERS, 1, FFN), jnp.float32),
        'w2': jnp.stack(w2).astype(jnp.bfloat16),              # (L, FFN, H)
        'bf2': jnp.zeros((LAYERS, 1, H), jnp.float32),
        'ln2_g': jnp.ones((LAYERS, 1, H), jnp.float32),
        'ln2_b': jnp.zeros((LAYERS, 1, H), jnp.float32),
    })
    return params


# --------------------------------- forward -----------------------------------
def text_classifier_forward(params, input_ids, attention_mask):
    # Embedding gather is data-dependent indexing -> left to XLA (glue only).
    we = params['word_emb'][input_ids].reshape(B * S, H)     # (B*S, H)
    pe = params['pos_emb'][:S]                               # (S, H)

    # Tiny (B, S) additive bias: 0 where attend, -1e9 where pad.
    bias = (attention_mask.astype(jnp.float32) - 1.0) * 1e9  # (B, S)

    vmem = pl.BlockSpec(memory_space=pltpu.MemorySpace.VMEM)
    out = pl.pallas_call(
        fused_forward_kernel,
        out_shape=jax.ShapeDtypeStruct((B, LOGIT_PAD), jnp.float32),
        in_specs=[vmem] * 19,
        out_specs=vmem,
    )(
        we, pe, bias,
        params['emb_ln_g'], params['emb_ln_b'],
        params['wqkv'], params['bqkv'],
        params['wo'], params['bo'],
        params['ln1_g'], params['ln1_b'],
        params['w1'], params['bf1'],
        params['w2'], params['bf2'],
        params['ln2_g'], params['ln2_b'],
        params['cls_w'], params['cls_b'],
    )
    return out[:, :NUM_CLASSES]                              # (B, NUM_CLASSES)


if __name__ == "__main__":
    root = jax.random.PRNGKey(0)
    k_param, k_ids = jax.random.split(root)

    params = init_params(k_param)
    input_ids = jax.random.randint(k_ids, (B, S), 0, VOCAB, dtype=jnp.int32)
    attention_mask = jnp.array(
        [[1, 1, 1, 1, 1, 1, 1, 1],
         [1, 1, 1, 1, 1, 0, 0, 0]], dtype=jnp.int32)

    fwd = jax.jit(text_classifier_forward)
    logits = fwd(params, input_ids, attention_mask)
    jax.block_until_ready(logits)

    assert logits.shape == (B, NUM_CLASSES)
    assert logits.dtype == jnp.float32
    assert bool(jnp.all(jnp.isfinite(logits)))
    print("KERNEL_OK")
</pallas_src>

<mosaic_0001>
module attributes {stable_mosaic.version = 11 : i64} {
  func.func @fused_forward_kernel(%arg0: memref<16x64xf32, #tpu.memory_space<vmem>>, %arg1: memref<8x64xf32, #tpu.memory_space<vmem>>, %arg2: memref<2x8xf32, #tpu.memory_space<vmem>>, %arg3: memref<1x64xf32, #tpu.memory_space<vmem>>, %arg4: memref<1x64xf32, #tpu.memory_space<vmem>>, %arg5: memref<2x64x192xbf16, #tpu.memory_space<vmem>>, %arg6: memref<2x1x192xf32, #tpu.memory_space<vmem>>, %arg7: memref<2x64x64xbf16, #tpu.memory_space<vmem>>, %arg8: memref<2x1x64xf32, #tpu.memory_space<vmem>>, %arg9: memref<2x1x64xf32, #tpu.memory_space<vmem>>, %arg10: memref<2x1x64xf32, #tpu.memory_space<vmem>>, %arg11: memref<2x64x128xbf16, #tpu.memory_space<vmem>>, %arg12: memref<2x1x128xf32, #tpu.memory_space<vmem>>, %arg13: memref<2x128x64xbf16, #tpu.memory_space<vmem>>, %arg14: memref<2x1x64xf32, #tpu.memory_space<vmem>>, %arg15: memref<2x1x64xf32, #tpu.memory_space<vmem>>, %arg16: memref<2x1x64xf32, #tpu.memory_space<vmem>>, %arg17: memref<64x128xbf16, #tpu.memory_space<vmem>>, %arg18: memref<1x128xf32, #tpu.memory_space<vmem>>, %arg19: memref<2x128xf32, #tpu.memory_space<vmem>>) attributes {dimension_semantics = [], scalar_prefetch = 0 : i64, scratch_operands = 0 : i64, tpu.core_type = #tpu.core_type<tc>} {
    %c0 = arith.constant 0 : index
    %c0_0 = arith.constant 0 : index
    %0 = vector.load %arg1[%c0, %c0_0] : memref<8x64xf32, #tpu.memory_space<vmem>>, vector<8x64xf32>
    %1 = tpu.concatenate %0, %0 in 0 : vector<8x64xf32>, vector<8x64xf32> -> vector<16x64xf32>
    %c0_1 = arith.constant 0 : index
    %c0_2 = arith.constant 0 : index
    %2 = vector.load %arg0[%c0_1, %c0_2] : memref<16x64xf32, #tpu.memory_space<vmem>>, vector<16x64xf32>
    %3 = arith.addf %2, %1 : vector<16x64xf32>
    %c0_3 = arith.constant 0 : index
    %c0_4 = arith.constant 0 : index
    %4 = vector.load %arg3[%c0_3, %c0_4] : memref<1x64xf32, #tpu.memory_space<vmem>>, vector<1x64xf32>
    %c0_5 = arith.constant 0 : index
    %c0_6 = arith.constant 0 : index
    %5 = vector.load %arg4[%c0_5, %c0_6] : memref<1x64xf32, #tpu.memory_space<vmem>>, vector<1x64xf32>
    %cst = arith.constant dense<0.000000e+00> : vector<16xf32>
    %6 = vector.multi_reduction <add>, %3, %cst [1] : vector<16x64xf32> to vector<16xf32>
    %7 = vector.shape_cast %6 : vector<16xf32> to vector<16x1xf32>
    %cst_7 = arith.constant 6.400000e+01 : f32
    %8 = vector.broadcast %cst_7 : f32 to vector<16x1xf32>
    %9 = arith.divf %7, %8 : vector<16x1xf32>
    %10 = vector.broadcast %9 : vector<16x1xf32> to vector<16x64xf32>
    %11 = arith.subf %3, %10 : vector<16x64xf32>
    %12 = arith.mulf %11, %11 : vector<16x64xf32>
    %cst_8 = arith.constant dense<0.000000e+00> : vector<16xf32>
    %13 = vector.multi_reduction <add>, %12, %cst_8 [1] : vector<16x64xf32> to vector<16xf32>
    %14 = vector.shape_cast %13 : vector<16xf32> to vector<16x1xf32>
    %cst_9 = arith.constant 6.400000e+01 : f32
    %15 = vector.broadcast %cst_9 : f32 to vector<16x1xf32>
    %16 = arith.divf %14, %15 : vector<16x1xf32>
    %17 = vector.broadcast %9 : vector<16x1xf32> to vector<16x64xf32>
    %18 = arith.subf %3, %17 : vector<16x64xf32>
    %cst_10 = arith.constant 9.99999996E-13 : f32
    %19 = vector.broadcast %cst_10 : f32 to vector<16x1xf32>
    %20 = arith.addf %16, %19 : vector<16x1xf32>
    %21 = math.rsqrt %20 : vector<16x1xf32>
    %22 = vector.broadcast %21 : vector<16x1xf32> to vector<16x64xf32>
    %23 = arith.mulf %18, %22 : vector<16x64xf32>
    %24 = vector.broadcast %4 : vector<1x64xf32> to vector<16x64xf32>
    %25 = arith.mulf %23, %24 : vector<16x64xf32>
    %26 = vector.broadcast %5 : vector<1x64xf32> to vector<16x64xf32>
    %27 = arith.addf %25, %26 : vector<16x64xf32>
    %c0_11 = arith.constant 0 : index
    %c0_12 = arith.constant 0 : index
    %28 = vector.load %arg2[%c0_11, %c0_12] : memref<2x8xf32, #tpu.memory_space<vmem>>, vector<2x8xf32>
    %29 = vector.extract_strided_slice %28 {offsets = [0, 0], sizes = [1, 8], strides = [1, 1]} : vector<2x8xf32> to vector<1x8xf32>
    %30 = vector.shape_cast %29 : vector<1x8xf32> to vector<1x8xf32>
    %31 = vector.broadcast %30 : vector<1x8xf32> to vector<8x8xf32>
    %32 = vector.extract_strided_slice %28 {offsets = [0, 0], sizes = [1, 8], strides = [1, 1]} : vector<2x8xf32> to vector<1x8xf32>
    %33 = vector.shape_cast %32 : vector<1x8xf32> to vector<1x8xf32>
    %34 = vector.broadcast %33 : vector<1x8xf32> to vector<8x8xf32>
    %35 = vector.extract_strided_slice %28 {offsets = [0, 0], sizes = [1, 8], strides = [1, 1]} : vector<2x8xf32> to vector<1x8xf32>
    %36 = vector.shape_cast %35 : vector<1x8xf32> to vector<1x8xf32>
    %37 = vector.broadcast %36 : vector<1x8xf32> to vector<8x8xf32>
    %38 = vector.extract_strided_slice %28 {offsets = [0, 0], sizes = [1, 8], strides = [1, 1]} : vector<2x8xf32> to vector<1x8xf32>
    %39 = vector.shape_cast %38 : vector<1x8xf32> to vector<1x8xf32>
    %40 = vector.broadcast %39 : vector<1x8xf32> to vector<8x8xf32>
    %41 = vector.extract_strided_slice %28 {offsets = [1, 0], sizes = [1, 8], strides = [1, 1]} : vector<2x8xf32> to vector<1x8xf32>
    %42 = vector.shape_cast %41 : vector<1x8xf32> to vector<1x8xf32>
    %43 = vector.broadcast %42 : vector<1x8xf32> to vector<8x8xf32>
    %44 = vector.extract_strided_slice %28 {offsets = [1, 0], sizes = [1, 8], strides = [1, 1]} : vector<2x8xf32> to vector<1x8xf32>
    %45 = vector.shape_cast %44 : vector<1x8xf32> to vector<1x8xf32>
    %46 = vector.broadcast %45 : vector<1x8xf32> to vector<8x8xf32>
    %47 = vector.extract_strided_slice %28 {offsets = [1, 0], sizes = [1, 8], strides = [1, 1]} : vector<2x8xf32> to vector<1x8xf32>
    %48 = vector.shape_cast %47 : vector<1x8xf32> to vector<1x8xf32>
    %49 = vector.broadcast %48 : vector<1x8xf32> to vector<8x8xf32>
    %50 = vector.extract_strided_slice %28 {offsets = [1, 0], sizes = [1, 8], strides = [1, 1]} : vector<2x8xf32> to vector<1x8xf32>
    %51 = vector.shape_cast %50 : vector<1x8xf32> to vector<1x8xf32>
    %52 = vector.broadcast %51 : vector<1x8xf32> to vector<8x8xf32>
    %53 = tpu.concatenate %31, %34, %37, %40, %43, %46, %49, %52 in 0 : vector<8x8xf32>, vector<8x8xf32>, vector<8x8xf32>, vector<8x8xf32>, vector<8x8xf32>, vector<8x8xf32>, vector<8x8xf32>, vector<8x8xf32> -> vector<64x8xf32>
    %54 = arith.truncf %27 : vector<16x64xf32> to vector<16x64xbf16>
    %c0_13 = arith.constant 0 : index
    %c0_14 = arith.constant 0 : index
    %c0_15 = arith.constant 0 : index
    %55 = vector.load %arg5[%c0_13, %c0_14, %c0_15] : memref<2x64x192xbf16, #tpu.memory_space<vmem>>, vector<1x64x192xbf16>
    %56 = vector.shape_cast %55 : vector<1x64x192xbf16> to vector<64x192xbf16>
    %cst_16 = arith.constant dense<0.000000e+00> : vector<16x192xf32>
    %57 = tpu.matmul %54, %56, %cst_16 {dimension_numbers = #tpu.dot_dimension_numbers<[1], [0], [0], [1], [0, 0, 1, 1], [], []>} : vector<16x64xbf16>, vector<64x192xbf16>, vector<16x192xf32> -> vector<16x192xf32>
    %c0_17 = arith.constant 0 : index
    %c0_18 = arith.constant 0 : index
    %c0_19 = arith.constant 0 : index
    %58 = vector.load %arg6[%c0_17, %c0_18, %c0_19] : memref<2x1x192xf32, #tpu.memory_space<vmem>>, vector<1x1x192xf32>
    %59 = vector.shape_cast %58 : vector<1x1x192xf32> to vector<1x192xf32>
    %60 = vector.broadcast %59 : vector<1x192xf32> to vector<16x192xf32>
    %61 = arith.addf %57, %60 : vector<16x192xf32>
    %62 = vector.extract_strided_slice %61 {offsets = [0, 0], sizes = [16, 64], strides = [1, 1]} : vector<16x192xf32> to vector<16x64xf32>
    %63 = arith.truncf %62 : vector<16x64xf32> to vector<16x64xbf16>
    %64 = vector.extract_strided_slice %61 {offsets = [0, 64], sizes = [16, 64], strides = [1, 1]} : vector<16x192xf32> to vector<16x64xf32>
    %65 = arith.truncf %64 : vector<16x64xf32> to vector<16x64xbf16>
    %66 = vector.extract_strided_slice %61 {offsets = [0, 128], sizes = [16, 64], strides = [1, 1]} : vector<16x192xf32> to vector<16x64xf32>
    %67 = arith.truncf %66 : vector<16x64xf32> to vector<16x64xbf16>
    %68 = vector.extract_strided_slice %63 {offsets = [0, 0], sizes = [8, 16], strides = [1, 1]} : vector<16x64xbf16> to vector<8x16xbf16>
    %69 = vector.extract_strided_slice %65 {offsets = [0, 0], sizes = [8, 16], strides = [1, 1]} : vector<16x64xbf16> to vector<8x16xbf16>
    %cst_20 = arith.constant dense<0.000000e+00> : vector<8x8xf32>
    %70 = tpu.matmul %68, %69, %cst_20 {dimension_numbers = #tpu.dot_dimension_numbers<[1], [1], [0], [0], [0, 0, 1, 0], [], []>} : vector<8x16xbf16>, vector<8x16xbf16>, vector<8x8xf32> -> vector<8x8xf32>
    %71 = vector.extract_strided_slice %63 {offsets = [0, 16], sizes = [8, 16], strides = [1, 1]} : vector<16x64xbf16> to vector<8x16xbf16>
    %72 = vector.extract_strided_slice %65 {offsets = [0, 16], sizes = [8, 16], strides = [1, 1]} : vector<16x64xbf16> to vector<8x16xbf16>
    %cst_21 = arith.constant dense<0.000000e+00> : vector<8x8xf32>
    %73 = tpu.matmul %71, %72, %cst_21 {dimension_numbers = #tpu.dot_dimension_numbers<[1], [1], [0], [0], [0, 0, 1, 0], [], []>} : vector<8x16xbf16>, vector<8x16xbf16>, vector<8x8xf32> -> vector<8x8xf32>
    %74 = vector.extract_strided_slice %63 {offsets = [0, 32], sizes = [8, 16], strides = [1, 1]} : vector<16x64xbf16> to vector<8x16xbf16>
    %75 = vector.extract_strided_slice %65 {offsets = [0, 32], sizes = [8, 16], strides = [1, 1]} : vector<16x64xbf16> to vector<8x16xbf16>
    %cst_22 = arith.constant dense<0.000000e+00> : vector<8x8xf32>
    %76 = tpu.matmul %74, %75, %cst_22 {dimension_numbers = #tpu.dot_dimension_numbers<[1], [1], [0], [0], [0, 0, 1, 0], [], []>} : vector<8x16xbf16>, vector<8x16xbf16>, vector<8x8xf32> -> vector<8x8xf32>
    %77 = vector.extract_strided_slice %63 {offsets = [0, 48], sizes = [8, 16], strides = [1, 1]} : vector<16x64xbf16> to vector<8x16xbf16>
    %78 = vector.extract_strided_slice %65 {offsets = [0, 48], sizes = [8, 16], strides = [1, 1]} : vector<16x64xbf16> to vector<8x16xbf16>
    %cst_23 = arith.constant dense<0.000000e+00> : vector<8x8xf32>
    %79 = tpu.matmul %77, %78, %cst_23 {dimension_numbers = #tpu.dot_dimension_numbers<[1], [1], [0], [0], [0, 0, 1, 0], [], []>} : vector<8x16xbf16>, vector<8x16xbf16>, vector<8x8xf32> -> vector<8x8xf32>
    %80 = vector.extract_strided_slice %63 {offsets = [8, 0], sizes = [8, 16], strides = [1, 1]} : vector<16x64xbf16> to vector<8x16xbf16>
    %81 = vector.extract_strided_slice %65 {offsets = [8, 0], sizes = [8, 16], strides = [1, 1]} : vector<16x64xbf16> to vector<8x16xbf16>
    %cst_24 = arith.constant dense<0.000000e+00> : vector<8x8xf32>
    %82 = tpu.matmul %80, %81, %cst_24 {dimension_numbers = #tpu.dot_dimension_numbers<[1], [1], [0], [0], [0, 0, 1, 0], [], []>} : vector<8x16xbf16>, vector<8x16xbf16>, vector<8x8xf32> -> vector<8x8xf32>
    %83 = vector.extract_strided_slice %63 {offsets = [8, 16], sizes = [8, 16], strides = [1, 1]} : vector<16x64xbf16> to vector<8x16xbf16>
    %84 = vector.extract_strided_slice %65 {offsets = [8, 16], sizes = [8, 16], strides = [1, 1]} : vector<16x64xbf16> to vector<8x16xbf16>
    %cst_25 = arith.constant dense<0.000000e+00> : vector<8x8xf32>
    %85 = tpu.matmul %83, %84, %cst_25 {dimension_numbers = #tpu.dot_dimension_numbers<[1], [1], [0], [0], [0, 0, 1, 0], [], []>} : vector<8x16xbf16>, vector<8x16xbf16>, vector<8x8xf32> -> vector<8x8xf32>
    %86 = vector.extract_strided_slice %63 {offsets = [8, 32], sizes = [8, 16], strides = [1, 1]} : vector<16x64xbf16> to vector<8x16xbf16>
    %87 = vector.extract_strided_slice %65 {offsets = [8, 32], sizes = [8, 16], strides = [1, 1]} : vector<16x64xbf16> to vector<8x16xbf16>
    %cst_26 = arith.constant dense<0.000000e+00> : vector<8x8xf32>
    %88 = tpu.matmul %86, %87, %cst_26 {dimension_numbers = #tpu.dot_dimension_numbers<[1], [1], [0], [0], [0, 0, 1, 0], [], []>} : vector<8x16xbf16>, vector<8x16xbf16>, vector<8x8xf32> -> vector<8x8xf32>
    %89 = vector.extract_strided_slice %63 {offsets = [8, 48], sizes = [8, 16], strides = [1, 1]} : vector<16x64xbf16> to vector<8x16xbf16>
    %90 = vector.extract_strided_slice %65 {offsets = [8, 48], sizes = [8, 16], strides = [1, 1]} : vector<16x64xbf16> to vector<8x16xbf16>
    %cst_27 = arith.constant dense<0.000000e+00> : vector<8x8xf32>
    %91 = tpu.matmul %89, %90, %cst_27 {dimension_numbers = #tpu.dot_dimension_numbers<[1], [1], [0], [0], [0, 0, 1, 0], [], []>} : vector<8x16xbf16>, vector<8x16xbf16>, vector<8x8xf32> -> vector<8x8xf32>
    %92 = tpu.concatenate %70, %73, %76, %79, %82, %85, %88, %91 in 0 : vector<8x8xf32>, vector<8x8xf32>, vector<8x8xf32>, vector<8x8xf32>, vector<8x8xf32>, vector<8x8xf32>, vector<8x8xf32>, vector<8x8xf32> -> vector<64x8xf32>
    %93 = arith.addf %92, %53 : vector<64x8xf32>
    %cst_28 = arith.constant dense<0xFF800000> : vector<64xf32>
    %94 = vector.multi_reduction <maximumf>, %93, %cst_28 [1] : vector<64x8xf32> to vector<64xf32>
    %95 = vector.shape_cast %94 : vector<64xf32> to vector<64x1xf32>
    %96 = vector.broadcast %95 : vector<64x1xf32> to vector<64x8xf32>
    %97 = arith.subf %93, %96 : vector<64x8xf32>
    %98 = math.exp %97 : vector<64x8xf32>
    %cst_29 = arith.constant dense<0.000000e+00> : vector<64xf32>
    %99 = vector.multi_reduction <add>, %98, %cst_29 [1] : vector<64x8xf32> to vector<64xf32>
    %100 = vector.shape_cast %99 : vector<64xf32> to vector<64x1xf32>
    %101 = tpu.reciprocal %100 {approx = true} : vector<64x1xf32> -> vector<64x1xf32>
    %102 = vector.broadcast %101 : vector<64x1xf32> to vector<64x8xf32>
    %103 = arith.mulf %98, %102 : vector<64x8xf32>
    %104 = vector.extract_strided_slice %103 {offsets = [0, 0], sizes = [8, 8], strides = [1, 1]} : vector<64x8xf32> to vector<8x8xf32>
    %105 = arith.truncf %104 : vector<8x8xf32> to vector<8x8xbf16>
    %106 = vector.extract_strided_slice %67 {offsets = [0, 0], sizes = [8, 16], strides = [1, 1]} : vector<16x64xbf16> to vector<8x16xbf16>
    %cst_30 = arith.constant dense<0.000000e+00> : vector<8x16xf32>
    %107 = tpu.matmul %105, %106, %cst_30 {dimension_numbers = #tpu.dot_dimension_numbers<[1], [0], [0], [1], [0, 0, 1, 1], [], []>} : vector<8x8xbf16>, vector<8x16xbf16>, vector<8x16xf32> -> vector<8x16xf32>
    %108 = vector.extract_strided_slice %103 {offsets = [8, 0], sizes = [8, 8], strides = [1, 1]} : vector<64x8xf32> to vector<8x8xf32>
    %109 = arith.truncf %108 : vector<8x8xf32> to vector<8x8xbf16>
    %110 = vector.extract_strided_slice %67 {offsets = [0, 16], sizes = [8, 16], strides = [1, 1]} : vector<16x64xbf16> to vector<8x16xbf16>
    %cst_31 = arith.constant dense<0.000000e+00> : vector<8x16xf32>
    %111 = tpu.matmul %109, %110, %cst_31 {dimension_numbers = #tpu.dot_dimension_numbers<[1], [0], [0], [1], [0, 0, 1, 1], [], []>} : vector<8x8xbf16>, vector<8x16xbf16>, vector<8x16xf32> -> vector<8x16xf32>
    %112 = vector.extract_strided_slice %103 {offsets = [16, 0], sizes = [8, 8], strides = [1, 1]} : vector<64x8xf32> to vector<8x8xf32>
    %113 = arith.truncf %112 : vector<8x8xf32> to vector<8x8xbf16>
    %114 = vector.extract_strided_slice %67 {offsets = [0, 32], sizes = [8, 16], strides = [1, 1]} : vector<16x64xbf16> to vector<8x16xbf16>
    %cst_32 = arith.constant dense<0.000000e+00> : vector<8x16xf32>
    %115 = tpu.matmul %113, %114, %cst_32 {dimension_numbers = #tpu.dot_dimension_numbers<[1], [0], [0], [1], [0, 0, 1, 1], [], []>} : vector<8x8xbf16>, vector<8x16xbf16>, vector<8x16xf32> -> vector<8x16xf32>
    %116 = vector.extract_strided_slice %103 {offsets = [24, 0], sizes = [8, 8], strides = [1, 1]} : vector<64x8xf32> to vector<8x8xf32>
    %117 = arith.truncf %116 : vector<8x8xf32> to vector<8x8xbf16>
    %118 = vector.extract_strided_slice %67 {offsets = [0, 48], sizes = [8, 16], strides = [1, 1]} : vector<16x64xbf16> to vector<8x16xbf16>
    %cst_33 = arith.constant dense<0.000000e+00> : vector<8x16xf32>
    %119 = tpu.matmul %117, %118, %cst_33 {dimension_numbers = #tpu.dot_dimension_numbers<[1], [0], [0], [1], [0, 0, 1, 1], [], []>} : vector<8x8xbf16>, vector<8x16xbf16>, vector<8x16xf32> -> vector<8x16xf32>
    %120 = tpu.concatenate %107, %111, %115, %119 in 1 : vector<8x16xf32>, vector<8x16xf32>, vector<8x16xf32>, vector<8x16xf32> -> vector<8x64xf32>
    %121 = vector.extract_strided_slice %103 {offsets = [32, 0], sizes = [8, 8], strides = [1, 1]} : vector<64x8xf32> to vector<8x8xf32>
    %122 = arith.truncf %121 : vector<8x8xf32> to vector<8x8xbf16>
    %123 = vector.extract_strided_slice %67 {offsets = [8, 0], sizes = [8, 16], strides = [1, 1]} : vector<16x64xbf16> to vector<8x16xbf16>
    %cst_34 = arith.constant dense<0.000000e+00> : vector<8x16xf32>
    %124 = tpu.matmul %122, %123, %cst_34 {dimension_numbers = #tpu.dot_dimension_numbers<[1], [0], [0], [1], [0, 0, 1, 1], [], []>} : vector<8x8xbf16>, vector<8x16xbf16>, vector<8x16xf32> -> vector<8x16xf32>
    %125 = vector.extract_strided_slice %103 {offsets = [40, 0], sizes = [8, 8], strides = [1, 1]} : vector<64x8xf32> to vector<8x8xf32>
    %126 = arith.truncf %125 : vector<8x8xf32> to vector<8x8xbf16>
    %127 = vector.extract_strided_slice %67 {offsets = [8, 16], sizes = [8, 16], strides = [1, 1]} : vector<16x64xbf16> to vector<8x16xbf16>
    %cst_35 = arith.constant dense<0.000000e+00> : vector<8x16xf32>
    %128 = tpu.matmul %126, %127, %cst_35 {dimension_numbers = #tpu.dot_dimension_numbers<[1], [0], [0], [1], [0, 0, 1, 1], [], []>} : vector<8x8xbf16>, vector<8x16xbf16>, vector<8x16xf32> -> vector<8x16xf32>
    %129 = vector.extract_strided_slice %103 {offsets = [48, 0], sizes = [8, 8], strides = [1, 1]} : vector<64x8xf32> to vector<8x8xf32>
    %130 = arith.truncf %129 : vector<8x8xf32> to vector<8x8xbf16>
    %131 = vector.extract_strided_slice %67 {offsets = [8, 32], sizes = [8, 16], strides = [1, 1]} : vector<16x64xbf16> to vector<8x16xbf16>
    %cst_36 = arith.constant dense<0.000000e+00> : vector<8x16xf32>
    %132 = tpu.matmul %130, %131, %cst_36 {dimension_numbers = #tpu.dot_dimension_numbers<[1], [0], [0], [1], [0, 0, 1, 1], [], []>} : vector<8x8xbf16>, vector<8x16xbf16>, vector<8x16xf32> -> vector<8x16xf32>
    %133 = vector.extract_strided_slice %103 {offsets = [56, 0], sizes = [8, 8], strides = [1, 1]} : vector<64x8xf32> to vector<8x8xf32>
    %134 = arith.truncf %133 : vector<8x8xf32> to vector<8x8xbf16>
    %135 = vector.extract_strided_slice %67 {offsets = [8, 48], sizes = [8, 16], strides = [1, 1]} : vector<16x64xbf16> to vector<8x16xbf16>
    %cst_37 = arith.constant dense<0.000000e+00> : vector<8x16xf32>
    %136 = tpu.matmul %134, %135, %cst_37 {dimension_numbers = #tpu.dot_dimension_numbers<[1], [0], [0], [1], [0, 0, 1, 1], [], []>} : vector<8x8xbf16>, vector<8x16xbf16>, vector<8x16xf32> -> vector<8x16xf32>
    %137 = tpu.concatenate %124, %128, %132, %136 in 1 : vector<8x16xf32>, vector<8x16xf32>, vector<8x16xf32>, vector<8x16xf32> -> vector<8x64xf32>
    %138 = tpu.concatenate %120, %137 in 0 : vector<8x64xf32>, vector<8x64xf32> -> vector<16x64xf32>
    %139 = arith.truncf %138 : vector<16x64xf32> to vector<16x64xbf16>
    %c0_38 = arith.constant 0 : index
    %c0_39 = arith.constant 0 : index
    %c0_40 = arith.constant 0 : index
    %140 = vector.load %arg7[%c0_38, %c0_39, %c0_40] : memref<2x64x64xbf16, #tpu.memory_space<vmem>>, vector<1x64x64xbf16>
    %141 = vector.shape_cast %140 : vector<1x64x64xbf16> to vector<64x64xbf16>
    %cst_41 = arith.constant dense<0.000000e+00> : vector<16x64xf32>
    %142 = tpu.matmul %139, %141, %cst_41 {dimension_numbers = #tpu.dot_dimension_numbers<[1], [0], [0], [1], [0, 0, 1, 1], [], []>} : vector<16x64xbf16>, vector<64x64xbf16>, vector<16x64xf32> -> vector<16x64xf32>
    %c0_42 = arith.constant 0 : index
    %c0_43 = arith.constant 0 : index
    %c0_44 = arith.constant 0 : index
    %143 = vector.load %arg8[%c0_42, %c0_43, %c0_44] : memref<2x1x64xf32, #tpu.memory_space<vmem>>, vector<1x1x64xf32>
    %144 = vector.shape_cast %143 : vector<1x1x64xf32> to vector<1x64xf32>
    %145 = vector.broadcast %144 : vector<1x64xf32> to vector<16x64xf32>
    %146 = arith.addf %142, %145 : vector<16x64xf32>
    %147 = arith.addf %27, %146 : vector<16x64xf32>
    %c0_45 = arith.constant 0 : index
    %c0_46 = arith.constant 0 : index
    %c0_47 = arith.constant 0 : index
    %148 = vector.load %arg9[%c0_45, %c0_46, %c0_47] : memref<2x1x64xf32, #tpu.memory_space<vmem>>, vector<1x1x64xf32>
    %149 = vector.shape_cast %148 : vector<1x1x64xf32> to vector<1x64xf32>
    %c0_48 = arith.constant 0 : index
    %c0_49 = arith.constant 0 : index
    %c0_50 = arith.constant 0 : index
    %150 = vector.load %arg10[%c0_48, %c0_49, %c0_50] : memref<2x1x64xf32, #tpu.memory_space<vmem>>, vector<1x1x64xf32>
    %151 = vector.shape_cast %150 : vector<1x1x64xf32> to vector<1x64xf32>
    %cst_51 = arith.constant dense<0.000000e+00> : vector<16xf32>
    %152 = vector.multi_reduction <add>, %147, %cst_51 [1] : vector<16x64xf32> to vector<16xf32>
    %153 = vector.shape_cast %152 : vector<16xf32> to vector<16x1xf32>
    %cst_52 = arith.constant 6.400000e+01 : f32
    %154 = vector.broadcast %cst_52 : f32 to vector<16x1xf32>
    %155 = arith.divf %153, %154 : vector<16x1xf32>
    %156 = vector.broadcast %155 : vector<16x1xf32> to vector<16x64xf32>
    %157 = arith.subf %147, %156 : vector<16x64xf32>
    %158 = arith.mulf %157, %157 : vector<16x64xf32>
    %cst_53 = arith.constant dense<0.000000e+00> : vector<16xf32>
    %159 = vector.multi_reduction <add>, %158, %cst_53 [1] : vector<16x64xf32> to vector<16xf32>
    %160 = vector.shape_cast %159 : vector<16xf32> to vector<16x1xf32>
    %cst_54 = arith.constant 6.400000e+01 : f32
    %161 = vector.broadcast %cst_54 : f32 to vector<16x1xf32>
    %162 = arith.divf %160, %161 : vector<16x1xf32>
    %163 = vector.broadcast %155 : vector<16x1xf32> to vector<16x64xf32>
    %164 = arith.subf %147, %163 : vector<16x64xf32>
    %cst_55 = arith.constant 9.99999996E-13 : f32
    %165 = vector.broadcast %cst_55 : f32 to vector<16x1xf32>
    %166 = arith.addf %162, %165 : vector<16x1xf32>
    %167 = math.rsqrt %166 : vector<16x1xf32>
    %168 = vector.broadcast %167 : vector<16x1xf32> to vector<16x64xf32>
    %169 = arith.mulf %164, %168 : vector<16x64xf32>
    %170 = vector.broadcast %149 : vector<1x64xf32> to vector<16x64xf32>
    %171 = arith.mulf %169, %170 : vector<16x64xf32>
    %172 = vector.broadcast %151 : vector<1x64xf32> to vector<16x64xf32>
    %173 = arith.addf %171, %172 : vector<16x64xf32>
    %174 = arith.truncf %173 : vector<16x64xf32> to vector<16x64xbf16>
    %c0_56 = arith.constant 0 : index
    %c0_57 = arith.constant 0 : index
    %c0_58 = arith.constant 0 : index
    %175 = vector.load %arg11[%c0_56, %c0_57, %c0_58] : memref<2x64x128xbf16, #tpu.memory_space<vmem>>, vector<1x64x128xbf16>
    %176 = vector.shape_cast %175 : vector<1x64x128xbf16> to vector<64x128xbf16>
    %cst_59 = arith.constant dense<0.000000e+00> : vector<16x128xf32>
    %177 = tpu.matmul %174, %176, %cst_59 {dimension_numbers = #tpu.dot_dimension_numbers<[1], [0], [0], [1], [0, 0, 1, 1], [], []>} : vector<16x64xbf16>, vector<64x128xbf16>, vector<16x128xf32> -> vector<16x128xf32>
    %c0_60 = arith.constant 0 : index
    %c0_61 = arith.constant 0 : index
    %c0_62 = arith.constant 0 : index
    %178 = vector.load %arg12[%c0_60, %c0_61, %c0_62] : memref<2x1x128xf32, #tpu.memory_space<vmem>>, vector<1x1x128xf32>
    %179 = vector.shape_cast %178 : vector<1x1x128xf32> to vector<1x128xf32>
    %180 = vector.broadcast %179 : vector<1x128xf32> to vector<16x128xf32>
    %181 = arith.addf %177, %180 : vector<16x128xf32>
    %cst_63 = arith.constant 0.707106769 : f32
    %182 = vector.broadcast %cst_63 : f32 to vector<16x128xf32>
    %183 = arith.mulf %181, %182 : vector<16x128xf32>
    %184 = math.absf %183 : vector<16x128xf32>
    %cst_64 = arith.constant 0.327591091 : f32
    %185 = vector.broadcast %cst_64 : f32 to vector<16x128xf32>
    %186 = arith.mulf %185, %184 : vector<16x128xf32>
    %cst_65 = arith.constant 1.000000e+00 : f32
    %187 = vector.broadcast %cst_65 : f32 to vector<16x128xf32>
    %188 = arith.addf %187, %186 : vector<16x128xf32>
    %cst_66 = arith.constant 1.000000e+00 : f32
    %189 = vector.broadcast %cst_66 : f32 to vector<16x128xf32>
    %190 = arith.divf %189, %188 : vector<16x128xf32>
    %cst_67 = arith.constant 1.06140542 : f32
    %191 = vector.broadcast %cst_67 : f32 to vector<16x128xf32>
    %192 = arith.mulf %190, %191 : vector<16x128xf32>
    %cst_68 = arith.constant -1.45315206 : f32
    %193 = vector.broadcast %cst_68 : f32 to vector<16x128xf32>
    %194 = arith.addf %193, %192 : vector<16x128xf32>
    %195 = arith.mulf %190, %194 : vector<16x128xf32>
    %cst_69 = arith.constant 1.42141378 : f32
    %196 = vector.broadcast %cst_69 : f32 to vector<16x128xf32>
    %197 = arith.addf %196, %195 : vector<16x128xf32>
    %198 = arith.mulf %190, %197 : vector<16x128xf32>
    %cst_70 = arith.constant -0.284496725 : f32
    %199 = vector.broadcast %cst_70 : f32 to vector<16x128xf32>
    %200 = arith.addf %199, %198 : vector<16x128xf32>
    %201 = arith.mulf %190, %200 : vector<16x128xf32>
    %cst_71 = arith.constant 0.254829586 : f32
    %202 = vector.broadcast %cst_71 : f32 to vector<16x128xf32>
    %203 = arith.addf %202, %201 : vector<16x128xf32>
    %204 = arith.mulf %190, %203 : vector<16x128xf32>
    %cst_72 = arith.constant 0.000000e+00 : f32
    %205 = vector.broadcast %cst_72 : f32 to vector<16x128xf32>
    %206 = arith.subf %205, %184 : vector<16x128xf32>
    %207 = arith.mulf %206, %184 : vector<16x128xf32>
    %208 = math.exp %207 : vector<16x128xf32>
    %209 = arith.mulf %204, %208 : vector<16x128xf32>
    %cst_73 = arith.constant 1.000000e+00 : f32
    %210 = vector.broadcast %cst_73 : f32 to vector<16x128xf32>
    %211 = arith.subf %210, %209 : vector<16x128xf32>
    %cst_74 = arith.constant 0.000000e+00 : f32
    %212 = vector.broadcast %cst_74 : f32 to vector<16x128xf32>
    %213 = arith.cmpf oge, %183, %212 : vector<16x128xf32>
    %cst_75 = arith.constant 0.000000e+00 : f32
    %214 = vector.broadcast %cst_75 : f32 to vector<16x128xf32>
    %215 = arith.subf %214, %211 : vector<16x128xf32>
    %216 = arith.select %213, %211, %215 : vector<16x128xi1>, vector<16x128xf32>
    %cst_76 = arith.constant 5.000000e-01 : f32
    %217 = vector.broadcast %cst_76 : f32 to vector<16x128xf32>
    %218 = arith.mulf %217, %181 : vector<16x128xf32>
    %cst_77 = arith.constant 1.000000e+00 : f32
    %219 = vector.broadcast %cst_77 : f32 to vector<16x128xf32>
    %220 = arith.addf %219, %216 : vector<16x128xf32>
    %221 = arith.mulf %218, %220 : vector<16x128xf32>
    %222 = arith.truncf %221 : vector<16x128xf32> to vector<16x128xbf16>
    %c0_78 = arith.constant 0 : index
    %c0_79 = arith.constant 0 : index
    %c0_80 = arith.constant 0 : index
    %223 = vector.load %arg13[%c0_78, %c0_79, %c0_80] : memref<2x128x64xbf16, #tpu.memory_space<vmem>>, vector<1x128x64xbf16>
    %224 = vector.shape_cast %223 : vector<1x128x64xbf16> to vector<128x64xbf16>
    %cst_81 = arith.constant dense<0.000000e+00> : vector<16x64xf32>
    %225 = tpu.matmul %222, %224, %cst_81 {dimension_numbers = #tpu.dot_dimension_numbers<[1], [0], [0], [1], [0, 0, 1, 1], [], []>} : vector<16x128xbf16>, vector<128x64xbf16>, vector<16x64xf32> -> vector<16x64xf32>
    %c0_82 = arith.constant 0 : index
    %c0_83 = arith.constant 0 : index
    %c0_84 = arith.constant 0 : index
    %226 = vector.load %arg14[%c0_82, %c0_83, %c0_84] : memref<2x1x64xf32, #tpu.memory_space<vmem>>, vector<1x1x64xf32>
    %227 = vector.shape_cast %226 : vector<1x1x64xf32> to vector<1x64xf32>
    %228 = vector.broadcast %227 : vector<1x64xf32> to vector<16x64xf32>
    %229 = arith.addf %225, %228 : vector<16x64xf32>
    %230 = arith.addf %173, %229 : vector<16x64xf32>
    %c0_85 = arith.constant 0 : index
    %c0_86 = arith.constant 0 : index
    %c0_87 = arith.constant 0 : index
    %231 = vector.load %arg15[%c0_85, %c0_86, %c0_87] : memref<2x1x64xf32, #tpu.memory_space<vmem>>, vector<1x1x64xf32>
    %232 = vector.shape_cast %231 : vector<1x1x64xf32> to vector<1x64xf32>
    %c0_88 = arith.constant 0 : index
    %c0_89 = arith.constant 0 : index
    %c0_90 = arith.constant 0 : index
    %233 = vector.load %arg16[%c0_88, %c0_89, %c0_90] : memref<2x1x64xf32, #tpu.memory_space<vmem>>, vector<1x1x64xf32>
    %234 = vector.shape_cast %233 : vector<1x1x64xf32> to vector<1x64xf32>
    %cst_91 = arith.constant dense<0.000000e+00> : vector<16xf32>
    %235 = vector.multi_reduction <add>, %230, %cst_91 [1] : vector<16x64xf32> to vector<16xf32>
    %236 = vector.shape_cast %235 : vector<16xf32> to vector<16x1xf32>
    %cst_92 = arith.constant 6.400000e+01 : f32
    %237 = vector.broadcast %cst_92 : f32 to vector<16x1xf32>
    %238 = arith.divf %236, %237 : vector<16x1xf32>
    %239 = vector.broadcast %238 : vector<16x1xf32> to vector<16x64xf32>
    %240 = arith.subf %230, %239 : vector<16x64xf32>
    %241 = arith.mulf %240, %240 : vector<16x64xf32>
    %cst_93 = arith.constant dense<0.000000e+00> : vector<16xf32>
    %242 = vector.multi_reduction <add>, %241, %cst_93 [1] : vector<16x64xf32> to vector<16xf32>
    %243 = vector.shape_cast %242 : vector<16xf32> to vector<16x1xf32>
    %cst_94 = arith.constant 6.400000e+01 : f32
    %244 = vector.broadcast %cst_94 : f32 to vector<16x1xf32>
    %245 = arith.divf %243, %244 : vector<16x1xf32>
    %246 = vector.broadcast %238 : vector<16x1xf32> to vector<16x64xf32>
    %247 = arith.subf %230, %246 : vector<16x64xf32>
    %cst_95 = arith.constant 9.99999996E-13 : f32
    %248 = vector.broadcast %cst_95 : f32 to vector<16x1xf32>
    %249 = arith.addf %245, %248 : vector<16x1xf32>
    %250 = math.rsqrt %249 : vector<16x1xf32>
    %251 = vector.broadcast %250 : vector<16x1xf32> to vector<16x64xf32>
    %252 = arith.mulf %247, %251 : vector<16x64xf32>
    %253 = vector.broadcast %232 : vector<1x64xf32> to vector<16x64xf32>
    %254 = arith.mulf %252, %253 : vector<16x64xf32>
    %255 = vector.broadcast %234 : vector<1x64xf32> to vector<16x64xf32>
    %256 = arith.addf %254, %255 : vector<16x64xf32>
    %257 = arith.truncf %256 : vector<16x64xf32> to vector<16x64xbf16>
    %c1 = arith.constant 1 : index
    %c0_96 = arith.constant 0 : index
    %c0_97 = arith.constant 0 : index
    %258 = vector.load %arg5[%c1, %c0_96, %c0_97] : memref<2x64x192xbf16, #tpu.memory_space<vmem>>, vector<1x64x192xbf16>
    %259 = vector.shape_cast %258 : vector<1x64x192xbf16> to vector<64x192xbf16>
    %cst_98 = arith.constant dense<0.000000e+00> : vector<16x192xf32>
    %260 = tpu.matmul %257, %259, %cst_98 {dimension_numbers = #tpu.dot_dimension_numbers<[1], [0], [0], [1], [0, 0, 1, 1], [], []>} : vector<16x64xbf16>, vector<64x192xbf16>, vector<16x192xf32> -> vector<16x192xf32>
    %c1_99 = arith.constant 1 : index
    %c0_100 = arith.constant 0 : index
    %c0_101 = arith.constant 0 : index
    %261 = vector.load %arg6[%c1_99, %c0_100, %c0_101] : memref<2x1x192xf32, #tpu.memory_space<vmem>>, vector<1x1x192xf32>
    %262 = vector.shape_cast %261 : vector<1x1x192xf32> to vector<1x192xf32>
    %263 = vector.broadcast %262 : vector<1x192xf32> to vector<16x192xf32>
    %264 = arith.addf %260, %263 : vector<16x192xf32>
    %265 = vector.extract_strided_slice %264 {offsets = [0, 0], sizes = [16, 64], strides = [1, 1]} : vector<16x192xf32> to vector<16x64xf32>
    %266 = arith.truncf %265 : vector<16x64xf32> to vector<16x64xbf16>
    %267 = vector.extract_strided_slice %264 {offsets = [0, 64], sizes = [16, 64], strides = [1, 1]} : vector<16x192xf32> to vector<16x64xf32>
    %268 = arith.truncf %267 : vector<16x64xf32> to vector<16x64xbf16>
    %269 = vector.extract_strided_slice %264 {offsets = [0, 128], sizes = [16, 64], strides = [1, 1]} : vector<16x192xf32> to vector<16x64xf32>
    %270 = arith.truncf %269 : vector<16x64xf32> to vector<16x64xbf16>
    %271 = vector.extract_strided_slice %266 {offsets = [0, 0], sizes = [8, 16], strides = [1, 1]} : vector<16x64xbf16> to vector<8x16xbf16>
    %272 = vector.extract_strided_slice %268 {offsets = [0, 0], sizes = [8, 16], strides = [1, 1]} : vector<16x64xbf16> to vector<8x16xbf16>
    %cst_102 = arith.constant dense<0.000000e+00> : vector<8x8xf32>
    %273 = tpu.matmul %271, %272, %cst_102 {dimension_numbers = #tpu.dot_dimension_numbers<[1], [1], [0], [0], [0, 0, 1, 0], [], []>} : vector<8x16xbf16>, vector<8x16xbf16>, vector<8x8xf32> -> vector<8x8xf32>
    %274 = vector.extract_strided_slice %266 {offsets = [0, 16], sizes = [8, 16], strides = [1, 1]} : vector<16x64xbf16> to vector<8x16xbf16>
    %275 = vector.extract_strided_slice %268 {offsets = [0, 16], sizes = [8, 16], strides = [1, 1]} : vector<16x64xbf16> to vector<8x16xbf16>
    %cst_103 = arith.constant dense<0.000000e+00> : vector<8x8xf32>
    %276 = tpu.matmul %274, %275, %cst_103 {dimension_numbers = #tpu.dot_dimension_numbers<[1], [1], [0], [0], [0, 0, 1, 0], [], []>} : vector<8x16xbf16>, vector<8x16xbf16>, vector<8x8xf32> -> vector<8x8xf32>
    %277 = vector.extract_strided_slice %266 {offsets = [0, 32], sizes = [8, 16], strides = [1, 1]} : vector<16x64xbf16> to vector<8x16xbf16>
    %278 = vector.extract_strided_slice %268 {offsets = [0, 32], sizes = [8, 16], strides = [1, 1]} : vector<16x64xbf16> to vector<8x16xbf16>
    %cst_104 = arith.constant dense<0.000000e+00> : vector<8x8xf32>
    %279 = tpu.matmul %277, %278, %cst_104 {dimension_numbers = #tpu.dot_dimension_numbers<[1], [1], [0], [0], [0, 0, 1, 0], [], []>} : vector<8x16xbf16>, vector<8x16xbf16>, vector<8x8xf32> -> vector<8x8xf32>
    %280 = vector.extract_strided_slice %266 {offsets = [0, 48], sizes = [8, 16], strides = [1, 1]} : vector<16x64xbf16> to vector<8x16xbf16>
    %281 = vector.extract_strided_slice %268 {offsets = [0, 48], sizes = [8, 16], strides = [1, 1]} : vector<16x64xbf16> to vector<8x16xbf16>
    %cst_105 = arith.constant dense<0.000000e+00> : vector<8x8xf32>
    %282 = tpu.matmul %280, %281, %cst_105 {dimension_numbers = #tpu.dot_dimension_numbers<[1], [1], [0], [0], [0, 0, 1, 0], [], []>} : vector<8x16xbf16>, vector<8x16xbf16>, vector<8x8xf32> -> vector<8x8xf32>
    %283 = vector.extract_strided_slice %266 {offsets = [8, 0], sizes = [8, 16], strides = [1, 1]} : vector<16x64xbf16> to vector<8x16xbf16>
    %284 = vector.extract_strided_slice %268 {offsets = [8, 0], sizes = [8, 16], strides = [1, 1]} : vector<16x64xbf16> to vector<8x16xbf16>
    %cst_106 = arith.constant dense<0.000000e+00> : vector<8x8xf32>
    %285 = tpu.matmul %283, %284, %cst_106 {dimension_numbers = #tpu.dot_dimension_numbers<[1], [1], [0], [0], [0, 0, 1, 0], [], []>} : vector<8x16xbf16>, vector<8x16xbf16>, vector<8x8xf32> -> vector<8x8xf32>
    %286 = vector.extract_strided_slice %266 {offsets = [8, 16], sizes = [8, 16], strides = [1, 1]} : vector<16x64xbf16> to vector<8x16xbf16>
    %287 = vector.extract_strided_slice %268 {offsets = [8, 16], sizes = [8, 16], strides = [1, 1]} : vector<16x64xbf16> to vector<8x16xbf16>
    %cst_107 = arith.constant dense<0.000000e+00> : vector<8x8xf32>
    %288 = tpu.matmul %286, %287, %cst_107 {dimension_numbers = #tpu.dot_dimension_numbers<[1], [1], [0], [0], [0, 0, 1, 0], [], []>} : vector<8x16xbf16>, vector<8x16xbf16>, vector<8x8xf32> -> vector<8x8xf32>
    %289 = vector.extract_strided_slice %266 {offsets = [8, 32], sizes = [8, 16], strides = [1, 1]} : vector<16x64xbf16> to vector<8x16xbf16>
    %290 = vector.extract_strided_slice %268 {offsets = [8, 32], sizes = [8, 16], strides = [1, 1]} : vector<16x64xbf16> to vector<8x16xbf16>
    %cst_108 = arith.constant dense<0.000000e+00> : vector<8x8xf32>
    %291 = tpu.matmul %289, %290, %cst_108 {dimension_numbers = #tpu.dot_dimension_numbers<[1], [1], [0], [0], [0, 0, 1, 0], [], []>} : vector<8x16xbf16>, vector<8x16xbf16>, vector<8x8xf32> -> vector<8x8xf32>
    %292 = vector.extract_strided_slice %266 {offsets = [8, 48], sizes = [8, 16], strides = [1, 1]} : vector<16x64xbf16> to vector<8x16xbf16>
    %293 = vector.extract_strided_slice %268 {offsets = [8, 48], sizes = [8, 16], strides = [1, 1]} : vector<16x64xbf16> to vector<8x16xbf16>
    %cst_109 = arith.constant dense<0.000000e+00> : vector<8x8xf32>
    %294 = tpu.matmul %292, %293, %cst_109 {dimension_numbers = #tpu.dot_dimension_numbers<[1], [1], [0], [0], [0, 0, 1, 0], [], []>} : vector<8x16xbf16>, vector<8x16xbf16>, vector<8x8xf32> -> vector<8x8xf32>
    %295 = tpu.concatenate %273, %276, %279, %282, %285, %288, %291, %294 in 0 : vector<8x8xf32>, vector<8x8xf32>, vector<8x8xf32>, vector<8x8xf32>, vector<8x8xf32>, vector<8x8xf32>, vector<8x8xf32>, vector<8x8xf32> -> vector<64x8xf32>
    %296 = arith.addf %295, %53 : vector<64x8xf32>
    %cst_110 = arith.constant dense<0xFF800000> : vector<64xf32>
    %297 = vector.multi_reduction <maximumf>, %296, %cst_110 [1] : vector<64x8xf32> to vector<64xf32>
    %298 = vector.shape_cast %297 : vector<64xf32> to vector<64x1xf32>
    %299 = vector.broadcast %298 : vector<64x1xf32> to vector<64x8xf32>
    %300 = arith.subf %296, %299 : vector<64x8xf32>
    %301 = math.exp %300 : vector<64x8xf32>
    %cst_111 = arith.constant dense<0.000000e+00> : vector<64xf32>
    %302 = vector.multi_reduction <add>, %301, %cst_111 [1] : vector<64x8xf32> to vector<64xf32>
    %303 = vector.shape_cast %302 : vector<64xf32> to vector<64x1xf32>
    %304 = tpu.reciprocal %303 {approx = true} : vector<64x1xf32> -> vector<64x1xf32>
    %305 = vector.broadcast %304 : vector<64x1xf32> to vector<64x8xf32>
    %306 = arith.mulf %301, %305 : vector<64x8xf32>
    %307 = vector.extract_strided_slice %306 {offsets = [0, 0], sizes = [8, 8], strides = [1, 1]} : vector<64x8xf32> to vector<8x8xf32>
    %308 = arith.truncf %307 : vector<8x8xf32> to vector<8x8xbf16>
    %309 = vector.extract_strided_slice %270 {offsets = [0, 0], sizes = [8, 16], strides = [1, 1]} : vector<16x64xbf16> to vector<8x16xbf16>
    %cst_112 = arith.constant dense<0.000000e+00> : vector<8x16xf32>
    %310 = tpu.matmul %308, %309, %cst_112 {dimension_numbers = #tpu.dot_dimension_numbers<[1], [0], [0], [1], [0, 0, 1, 1], [], []>} : vector<8x8xbf16>, vector<8x16xbf16>, vector<8x16xf32> -> vector<8x16xf32>
    %311 = vector.extract_strided_slice %306 {offsets = [8, 0], sizes = [8, 8], strides = [1, 1]} : vector<64x8xf32> to vector<8x8xf32>
    %312 = arith.truncf %311 : vector<8x8xf32> to vector<8x8xbf16>
    %313 = vector.extract_strided_slice %270 {offsets = [0, 16], sizes = [8, 16], strides = [1, 1]} : vector<16x64xbf16> to vector<8x16xbf16>
    %cst_113 = arith.constant dense<0.000000e+00> : vector<8x16xf32>
    %314 = tpu.matmul %312, %313, %cst_113 {dimension_numbers = #tpu.dot_dimension_numbers<[1], [0], [0], [1], [0, 0, 1, 1], [], []>} : vector<8x8xbf16>, vector<8x16xbf16>, vector<8x16xf32> -> vector<8x16xf32>
    %315 = vector.extract_strided_slice %306 {offsets = [16, 0], sizes = [8, 8], strides = [1, 1]} : vector<64x8xf32> to vector<8x8xf32>
    %316 = arith.truncf %315 : vector<8x8xf32> to vector<8x8xbf16>
    %317 = vector.extract_strided_slice %270 {offsets = [0, 32], sizes = [8, 16], strides = [1, 1]} : vector<16x64xbf16> to vector<8x16xbf16>
    %cst_114 = arith.constant dense<0.000000e+00> : vector<8x16xf32>
    %318 = tpu.matmul %316, %317, %cst_114 {dimension_numbers = #tpu.dot_dimension_numbers<[1], [0], [0], [1], [0, 0, 1, 1], [], []>} : vector<8x8xbf16>, vector<8x16xbf16>, vector<8x16xf32> -> vector<8x16xf32>
    %319 = vector.extract_strided_slice %306 {offsets = [24, 0], sizes = [8, 8], strides = [1, 1]} : vector<64x8xf32> to vector<8x8xf32>
    %320 = arith.truncf %319 : vector<8x8xf32> to vector<8x8xbf16>
    %321 = vector.extract_strided_slice %270 {offsets = [0, 48], sizes = [8, 16], strides = [1, 1]} : vector<16x64xbf16> to vector<8x16xbf16>
    %cst_115 = arith.constant dense<0.000000e+00> : vector<8x16xf32>
    %322 = tpu.matmul %320, %321, %cst_115 {dimension_numbers = #tpu.dot_dimension_numbers<[1], [0], [0], [1], [0, 0, 1, 1], [], []>} : vector<8x8xbf16>, vector<8x16xbf16>, vector<8x16xf32> -> vector<8x16xf32>
    %323 = tpu.concatenate %310, %314, %318, %322 in 1 : vector<8x16xf32>, vector<8x16xf32>, vector<8x16xf32>, vector<8x16xf32> -> vector<8x64xf32>
    %324 = vector.extract_strided_slice %306 {offsets = [32, 0], sizes = [8, 8], strides = [1, 1]} : vector<64x8xf32> to vector<8x8xf32>
    %325 = arith.truncf %324 : vector<8x8xf32> to vector<8x8xbf16>
    %326 = vector.extract_strided_slice %270 {offsets = [8, 0], sizes = [8, 16], strides = [1, 1]} : vector<16x64xbf16> to vector<8x16xbf16>
    %cst_116 = arith.constant dense<0.000000e+00> : vector<8x16xf32>
    %327 = tpu.matmul %325, %326, %cst_116 {dimension_numbers = #tpu.dot_dimension_numbers<[1], [0], [0], [1], [0, 0, 1, 1], [], []>} : vector<8x8xbf16>, vector<8x16xbf16>, vector<8x16xf32> -> vector<8x16xf32>
    %328 = vector.extract_strided_slice %306 {offsets = [40, 0], sizes = [8, 8], strides = [1, 1]} : vector<64x8xf32> to vector<8x8xf32>
    %329 = arith.truncf %328 : vector<8x8xf32> to vector<8x8xbf16>
    %330 = vector.extract_strided_slice %270 {offsets = [8, 16], sizes = [8, 16], strides = [1, 1]} : vector<16x64xbf16> to vector<8x16xbf16>
    %cst_117 = arith.constant dense<0.000000e+00> : vector<8x16xf32>
    %331 = tpu.matmul %329, %330, %cst_117 {dimension_numbers = #tpu.dot_dimension_numbers<[1], [0], [0], [1], [0, 0, 1, 1], [], []>} : vector<8x8xbf16>, vector<8x16xbf16>, vector<8x16xf32> -> vector<8x16xf32>
    %332 = vector.extract_strided_slice %306 {offsets = [48, 0], sizes = [8, 8], strides = [1, 1]} : vector<64x8xf32> to vector<8x8xf32>
    %333 = arith.truncf %332 : vector<8x8xf32> to vector<8x8xbf16>
    %334 = vector.extract_strided_slice %270 {offsets = [8, 32], sizes = [8, 16], strides = [1, 1]} : vector<16x64xbf16> to vector<8x16xbf16>
    %cst_118 = arith.constant dense<0.000000e+00> : vector<8x16xf32>
    %335 = tpu.matmul %333, %334, %cst_118 {dimension_numbers = #tpu.dot_dimension_numbers<[1], [0], [0], [1], [0, 0, 1, 1], [], []>} : vector<8x8xbf16>, vector<8x16xbf16>, vector<8x16xf32> -> vector<8x16xf32>
    %336 = vector.extract_strided_slice %306 {offsets = [56, 0], sizes = [8, 8], strides = [1, 1]} : vector<64x8xf32> to vector<8x8xf32>
    %337 = arith.truncf %336 : vector<8x8xf32> to vector<8x8xbf16>
    %338 = vector.extract_strided_slice %270 {offsets = [8, 48], sizes = [8, 16], strides = [1, 1]} : vector<16x64xbf16> to vector<8x16xbf16>
    %cst_119 = arith.constant dense<0.000000e+00> : vector<8x16xf32>
    %339 = tpu.matmul %337, %338, %cst_119 {dimension_numbers = #tpu.dot_dimension_numbers<[1], [0], [0], [1], [0, 0, 1, 1], [], []>} : vector<8x8xbf16>, vector<8x16xbf16>, vector<8x16xf32> -> vector<8x16xf32>
    %340 = tpu.concatenate %327, %331, %335, %339 in 1 : vector<8x16xf32>, vector<8x16xf32>, vector<8x16xf32>, vector<8x16xf32> -> vector<8x64xf32>
    %341 = tpu.concatenate %323, %340 in 0 : vector<8x64xf32>, vector<8x64xf32> -> vector<16x64xf32>
    %342 = arith.truncf %341 : vector<16x64xf32> to vector<16x64xbf16>
    %c1_120 = arith.constant 1 : index
    %c0_121 = arith.constant 0 : index
    %c0_122 = arith.constant 0 : index
    %343 = vector.load %arg7[%c1_120, %c0_121, %c0_122] : memref<2x64x64xbf16, #tpu.memory_space<vmem>>, vector<1x64x64xbf16>
    %344 = vector.shape_cast %343 : vector<1x64x64xbf16> to vector<64x64xbf16>
    %cst_123 = arith.constant dense<0.000000e+00> : vector<16x64xf32>
    %345 = tpu.matmul %342, %344, %cst_123 {dimension_numbers = #tpu.dot_dimension_numbers<[1], [0], [0], [1], [0, 0, 1, 1], [], []>} : vector<16x64xbf16>, vector<64x64xbf16>, vector<16x64xf32> -> vector<16x64xf32>
    %c1_124 = arith.constant 1 : index
    %c0_125 = arith.constant 0 : index
    %c0_126 = arith.constant 0 : index
    %346 = vector.load %arg8[%c1_124, %c0_125, %c0_126] : memref<2x1x64xf32, #tpu.memory_space<vmem>>, vector<1x1x64xf32>
    %347 = vector.shape_cast %346 : vector<1x1x64xf32> to vector<1x64xf32>
    %348 = vector.broadcast %347 : vector<1x64xf32> to vector<16x64xf32>
    %349 = arith.addf %345, %348 : vector<16x64xf32>
    %350 = arith.addf %256, %349 : vector<16x64xf32>
    %c1_127 = arith.constant 1 : index
    %c0_128 = arith.constant 0 : index
    %c0_129 = arith.constant 0 : index
    %351 = vector.load %arg9[%c1_127, %c0_128, %c0_129] : memref<2x1x64xf32, #tpu.memory_space<vmem>>, vector<1x1x64xf32>
    %352 = vector.shape_cast %351 : vector<1x1x64xf32> to vector<1x64xf32>
    %c1_130 = arith.constant 1 : index
    %c0_131 = arith.constant 0 : index
    %c0_132 = arith.constant 0 : index
    %353 = vector.load %arg10[%c1_130, %c0_131, %c0_132] : memref<2x1x64xf32, #tpu.memory_space<vmem>>, vector<1x1x64xf32>
    %354 = vector.shape_cast %353 : vector<1x1x64xf32> to vector<1x64xf32>
    %cst_133 = arith.constant dense<0.000000e+00> : vector<16xf32>
    %355 = vector.multi_reduction <add>, %350, %cst_133 [1] : vector<16x64xf32> to vector<16xf32>
    %356 = vector.shape_cast %355 : vector<16xf32> to vector<16x1xf32>
    %cst_134 = arith.constant 6.400000e+01 : f32
    %357 = vector.broadcast %cst_134 : f32 to vector<16x1xf32>
    %358 = arith.divf %356, %357 : vector<16x1xf32>
    %359 = vector.broadcast %358 : vector<16x1xf32> to vector<16x64xf32>
    %360 = arith.subf %350, %359 : vector<16x64xf32>
    %361 = arith.mulf %360, %360 : vector<16x64xf32>
    %cst_135 = arith.constant dense<0.000000e+00> : vector<16xf32>
    %362 = vector.multi_reduction <add>, %361, %cst_135 [1] : vector<16x64xf32> to vector<16xf32>
    %363 = vector.shape_cast %362 : vector<16xf32> to vector<16x1xf32>
    %cst_136 = arith.constant 6.400000e+01 : f32
    %364 = vector.broadcast %cst_136 : f32 to vector<16x1xf32>
    %365 = arith.divf %363, %364 : vector<16x1xf32>
    %366 = vector.broadcast %358 : vector<16x1xf32> to vector<16x64xf32>
    %367 = arith.subf %350, %366 : vector<16x64xf32>
    %cst_137 = arith.constant 9.99999996E-13 : f32
    %368 = vector.broadcast %cst_137 : f32 to vector<16x1xf32>
    %369 = arith.addf %365, %368 : vector<16x1xf32>
    %370 = math.rsqrt %369 : vector<16x1xf32>
    %371 = vector.broadcast %370 : vector<16x1xf32> to vector<16x64xf32>
    %372 = arith.mulf %367, %371 : vector<16x64xf32>
    %373 = vector.broadcast %352 : vector<1x64xf32> to vector<16x64xf32>
    %374 = arith.mulf %372, %373 : vector<16x64xf32>
    %375 = vector.broadcast %354 : vector<1x64xf32> to vector<16x64xf32>
    %376 = arith.addf %374, %375 : vector<16x64xf32>
    %377 = arith.truncf %376 : vector<16x64xf32> to vector<16x64xbf16>
    %c1_138 = arith.constant 1 : index
    %c0_139 = arith.constant 0 : index
    %c0_140 = arith.constant 0 : index
    %378 = vector.load %arg11[%c1_138, %c0_139, %c0_140] : memref<2x64x128xbf16, #tpu.memory_space<vmem>>, vector<1x64x128xbf16>
    %379 = vector.shape_cast %378 : vector<1x64x128xbf16> to vector<64x128xbf16>
    %cst_141 = arith.constant dense<0.000000e+00> : vector<16x128xf32>
    %380 = tpu.matmul %377, %379, %cst_141 {dimension_numbers = #tpu.dot_dimension_numbers<[1], [0], [0], [1], [0, 0, 1, 1], [], []>} : vector<16x64xbf16>, vector<64x128xbf16>, vector<16x128xf32> -> vector<16x128xf32>
    %c1_142 = arith.constant 1 : index
    %c0_143 = arith.constant 0 : index
    %c0_144 = arith.constant 0 : index
    %381 = vector.load %arg12[%c1_142, %c0_143, %c0_144] : memref<2x1x128xf32, #tpu.memory_space<vmem>>, vector<1x1x128xf32>
    %382 = vector.shape_cast %381 : vector<1x1x128xf32> to vector<1x128xf32>
    %383 = vector.broadcast %382 : vector<1x128xf32> to vector<16x128xf32>
    %384 = arith.addf %380, %383 : vector<16x128xf32>
    %cst_145 = arith.constant 0.707106769 : f32
    %385 = vector.broadcast %cst_145 : f32 to vector<16x128xf32>
    %386 = arith.mulf %384, %385 : vector<16x128xf32>
    %387 = math.absf %386 : vector<16x128xf32>
    %cst_146 = arith.constant 0.327591091 : f32
    %388 = vector.broadcast %cst_146 : f32 to vector<16x128xf32>
    %389 = arith.mulf %388, %387 : vector<16x128xf32>
    %cst_147 = arith.constant 1.000000e+00 : f32
    %390 = vector.broadcast %cst_147 : f32 to vector<16x128xf32>
    %391 = arith.addf %390, %389 : vector<16x128xf32>
    %cst_148 = arith.constant 1.000000e+00 : f32
    %392 = vector.broadcast %cst_148 : f32 to vector<16x128xf32>
    %393 = arith.divf %392, %391 : vector<16x128xf32>
    %cst_149 = arith.constant 1.06140542 : f32
    %394 = vector.broadcast %cst_149 : f32 to vector<16x128xf32>
    %395 = arith.mulf %393, %394 : vector<16x128xf32>
    %cst_150 = arith.constant -1.45315206 : f32
    %396 = vector.broadcast %cst_150 : f32 to vector<16x128xf32>
    %397 = arith.addf %396, %395 : vector<16x128xf32>
    %398 = arith.mulf %393, %397 : vector<16x128xf32>
    %cst_151 = arith.constant 1.42141378 : f32
    %399 = vector.broadcast %cst_151 : f32 to vector<16x128xf32>
    %400 = arith.addf %399, %398 : vector<16x128xf32>
    %401 = arith.mulf %393, %400 : vector<16x128xf32>
    %cst_152 = arith.constant -0.284496725 : f32
    %402 = vector.broadcast %cst_152 : f32 to vector<16x128xf32>
    %403 = arith.addf %402, %401 : vector<16x128xf32>
    %404 = arith.mulf %393, %403 : vector<16x128xf32>
    %cst_153 = arith.constant 0.254829586 : f32
    %405 = vector.broadcast %cst_153 : f32 to vector<16x128xf32>
    %406 = arith.addf %405, %404 : vector<16x128xf32>
    %407 = arith.mulf %393, %406 : vector<16x128xf32>
    %cst_154 = arith.constant 0.000000e+00 : f32
    %408 = vector.broadcast %cst_154 : f32 to vector<16x128xf32>
    %409 = arith.subf %408, %387 : vector<16x128xf32>
    %410 = arith.mulf %409, %387 : vector<16x128xf32>
    %411 = math.exp %410 : vector<16x128xf32>
    %412 = arith.mulf %407, %411 : vector<16x128xf32>
    %cst_155 = arith.constant 1.000000e+00 : f32
    %413 = vector.broadcast %cst_155 : f32 to vector<16x128xf32>
    %414 = arith.subf %413, %412 : vector<16x128xf32>
    %cst_156 = arith.constant 0.000000e+00 : f32
    %415 = vector.broadcast %cst_156 : f32 to vector<16x128xf32>
    %416 = arith.cmpf oge, %386, %415 : vector<16x128xf32>
    %cst_157 = arith.constant 0.000000e+00 : f32
    %417 = vector.broadcast %cst_157 : f32 to vector<16x128xf32>
    %418 = arith.subf %417, %414 : vector<16x128xf32>
    %419 = arith.select %416, %414, %418 : vector<16x128xi1>, vector<16x128xf32>
    %cst_158 = arith.constant 5.000000e-01 : f32
    %420 = vector.broadcast %cst_158 : f32 to vector<16x128xf32>
    %421 = arith.mulf %420, %384 : vector<16x128xf32>
    %cst_159 = arith.constant 1.000000e+00 : f32
    %422 = vector.broadcast %cst_159 : f32 to vector<16x128xf32>
    %423 = arith.addf %422, %419 : vector<16x128xf32>
    %424 = arith.mulf %421, %423 : vector<16x128xf32>
    %425 = arith.truncf %424 : vector<16x128xf32> to vector<16x128xbf16>
    %c1_160 = arith.constant 1 : index
    %c0_161 = arith.constant 0 : index
    %c0_162 = arith.constant 0 : index
    %426 = vector.load %arg13[%c1_160, %c0_161, %c0_162] : memref<2x128x64xbf16, #tpu.memory_space<vmem>>, vector<1x128x64xbf16>
    %427 = vector.shape_cast %426 : vector<1x128x64xbf16> to vector<128x64xbf16>
    %cst_163 = arith.constant dense<0.000000e+00> : vector<16x64xf32>
    %428 = tpu.matmul %425, %427, %cst_163 {dimension_numbers = #tpu.dot_dimension_numbers<[1], [0], [0], [1], [0, 0, 1, 1], [], []>} : vector<16x128xbf16>, vector<128x64xbf16>, vector<16x64xf32> -> vector<16x64xf32>
    %c1_164 = arith.constant 1 : index
    %c0_165 = arith.constant 0 : index
    %c0_166 = arith.constant 0 : index
    %429 = vector.load %arg14[%c1_164, %c0_165, %c0_166] : memref<2x1x64xf32, #tpu.memory_space<vmem>>, vector<1x1x64xf32>
    %430 = vector.shape_cast %429 : vector<1x1x64xf32> to vector<1x64xf32>
    %431 = vector.broadcast %430 : vector<1x64xf32> to vector<16x64xf32>
    %432 = arith.addf %428, %431 : vector<16x64xf32>
    %433 = arith.addf %376, %432 : vector<16x64xf32>
    %c1_167 = arith.constant 1 : index
    %c0_168 = arith.constant 0 : index
    %c0_169 = arith.constant 0 : index
    %434 = vector.load %arg15[%c1_167, %c0_168, %c0_169] : memref<2x1x64xf32, #tpu.memory_space<vmem>>, vector<1x1x64xf32>
    %435 = vector.shape_cast %434 : vector<1x1x64xf32> to vector<1x64xf32>
    %c1_170 = arith.constant 1 : index
    %c0_171 = arith.constant 0 : index
    %c0_172 = arith.constant 0 : index
    %436 = vector.load %arg16[%c1_170, %c0_171, %c0_172] : memref<2x1x64xf32, #tpu.memory_space<vmem>>, vector<1x1x64xf32>
    %437 = vector.shape_cast %436 : vector<1x1x64xf32> to vector<1x64xf32>
    %cst_173 = arith.constant dense<0.000000e+00> : vector<16xf32>
    %438 = vector.multi_reduction <add>, %433, %cst_173 [1] : vector<16x64xf32> to vector<16xf32>
    %439 = vector.shape_cast %438 : vector<16xf32> to vector<16x1xf32>
    %cst_174 = arith.constant 6.400000e+01 : f32
    %440 = vector.broadcast %cst_174 : f32 to vector<16x1xf32>
    %441 = arith.divf %439, %440 : vector<16x1xf32>
    %442 = vector.broadcast %441 : vector<16x1xf32> to vector<16x64xf32>
    %443 = arith.subf %433, %442 : vector<16x64xf32>
    %444 = arith.mulf %443, %443 : vector<16x64xf32>
    %cst_175 = arith.constant dense<0.000000e+00> : vector<16xf32>
    %445 = vector.multi_reduction <add>, %444, %cst_175 [1] : vector<16x64xf32> to vector<16xf32>
    %446 = vector.shape_cast %445 : vector<16xf32> to vector<16x1xf32>
    %cst_176 = arith.constant 6.400000e+01 : f32
    %447 = vector.broadcast %cst_176 : f32 to vector<16x1xf32>
    %448 = arith.divf %446, %447 : vector<16x1xf32>
    %449 = vector.broadcast %441 : vector<16x1xf32> to vector<16x64xf32>
    %450 = arith.subf %433, %449 : vector<16x64xf32>
    %cst_177 = arith.constant 9.99999996E-13 : f32
    %451 = vector.broadcast %cst_177 : f32 to vector<16x1xf32>
    %452 = arith.addf %448, %451 : vector<16x1xf32>
    %453 = math.rsqrt %452 : vector<16x1xf32>
    %454 = vector.broadcast %453 : vector<16x1xf32> to vector<16x64xf32>
    %455 = arith.mulf %450, %454 : vector<16x64xf32>
    %456 = vector.broadcast %435 : vector<1x64xf32> to vector<16x64xf32>
    %457 = arith.mulf %455, %456 : vector<16x64xf32>
    %458 = vector.broadcast %437 : vector<1x64xf32> to vector<16x64xf32>
    %459 = arith.addf %457, %458 : vector<16x64xf32>
    %460 = vector.extract_strided_slice %459 {offsets = [0, 0], sizes = [1, 64], strides = [1, 1]} : vector<16x64xf32> to vector<1x64xf32>
    %461 = vector.extract_strided_slice %459 {offsets = [8, 0], sizes = [1, 64], strides = [1, 1]} : vector<16x64xf32> to vector<1x64xf32>
    %462 = tpu.concatenate %460, %461 in 0 : vector<1x64xf32>, vector<1x64xf32> -> vector<2x64xf32>
    %463 = arith.truncf %462 : vector<2x64xf32> to vector<2x64xbf16>
    %c0_178 = arith.constant 0 : index
    %c0_179 = arith.constant 0 : index
    %464 = vector.load %arg17[%c0_178, %c0_179] : memref<64x128xbf16, #tpu.memory_space<vmem>>, vector<64x128xbf16>
    %cst_180 = arith.constant dense<0.000000e+00> : vector<2x128xf32>
    %465 = tpu.matmul %463, %464, %cst_180 {dimension_numbers = #tpu.dot_dimension_numbers<[1], [0], [0], [1], [0, 0, 1, 1], [], []>} : vector<2x64xbf16>, vector<64x128xbf16>, vector<2x128xf32> -> vector<2x128xf32>
    %c0_181 = arith.constant 0 : index
    %c0_182 = arith.constant 0 : index
    %466 = vector.load %arg18[%c0_181, %c0_182] : memref<1x128xf32, #tpu.memory_space<vmem>>, vector<1x128xf32>
    %467 = vector.broadcast %466 : vector<1x128xf32> to vector<2x128xf32>
    %468 = arith.addf %465, %467 : vector<2x128xf32>
    %c0_183 = arith.constant 0 : index
    %c0_184 = arith.constant 0 : index
    %469 = vector.load %arg19[%c0_183, %c0_184] : memref<2x128xf32, #tpu.memory_space<vmem>>, vector<2x128xf32>
    tpu.vector_store %arg19[%c0_183, %c0_184], %468 {strides = array<i32>} : memref<2x128xf32, #tpu.memory_space<vmem>>, vector<2x128xf32>,
    return
  }
}

</mosaic_0001>

<llo_original>
// kernel: text_classifier_forward.1
$region0: #{text_classifier_forward.1}
  #allocation0 [shape = 'u32[]', space=smem, size = 0x4, offset = 0x4, fixed_abs, tag = 'smem constant byte address 0x4 - core index']
  #allocation1 [shape = 'u32[144,128]{1,0:T(1,128)}', space=vmem, size = 0x12000, scoped, tag = 'internal scratch']
  %s0 = inlined_call_operand.vmem [shape: f32[16,64], index: 0, kind: input, shape index: {}]
  %s1 = inlined_call_operand.vmem [shape: f32[8,64], index: 1, kind: input, shape index: {}]
  %s2 = inlined_call_operand.vmem [shape: f32[2,8], index: 2, kind: input, shape index: {}]
  %s3 = inlined_call_operand.vmem [shape: f32[1,64], index: 3, kind: input, shape index: {}]
  %s4 = inlined_call_operand.vmem [shape: f32[1,64], index: 4, kind: input, shape index: {}]
  %s5 = inlined_call_operand.vmem [shape: bf16[2,64,192], index: 5, kind: input, shape index: {}]
  %s6 = inlined_call_operand.vmem [shape: f32[2,1,192], index: 6, kind: input, shape index: {}]
  %s7 = inlined_call_operand.vmem [shape: bf16[2,64,64], index: 7, kind: input, shape index: {}]
  %s8 = inlined_call_operand.vmem [shape: f32[2,1,64], index: 8, kind: input, shape index: {}]
  %s9 = inlined_call_operand.vmem [shape: f32[2,1,64], index: 9, kind: input, shape index: {}]
  %s10 = inlined_call_operand.vmem [shape: f32[2,1,64], index: 10, kind: input, shape index: {}]
  %s11 = inlined_call_operand.vmem [shape: bf16[2,64,128], index: 11, kind: input, shape index: {}]
  %s12 = inlined_call_operand.vmem [shape: f32[2,1,128], index: 12, kind: input, shape index: {}]
  %s13 = inlined_call_operand.vmem [shape: bf16[2,128,64], index: 13, kind: input, shape index: {}]
  %s14 = inlined_call_operand.vmem [shape: f32[2,1,64], index: 14, kind: input, shape index: {}]
  %s15 = inlined_call_operand.vmem [shape: f32[2,1,64], index: 15, kind: input, shape index: {}]
  %s16 = inlined_call_operand.vmem [shape: f32[2,1,64], index: 16, kind: input, shape index: {}]
  %s17 = inlined_call_operand.vmem [shape: bf16[64,128], index: 17, kind: input, shape index: {}]
  %s18 = inlined_call_operand.vmem [shape: f32[1,128], index: 18, kind: input, shape index: {}]
  %s19 = inlined_call_operand.hbm [shape: f32[2,128], index: 19, kind: output, shape index: {}]
  %s20 = sld [smem:[#allocation0]]
  $region86: #{text_classifier_forward.1} parent=0
    _
  %s22 = ssub.s32 1, %s20
  %s23 = scalar_select 0, %s22, %s20
  $region1: #{text_classifier_forward.1} parent=0
    #allocation2 [shape = 'u8[1024]{0}', space=vmem, size = 0x400, scoped, tag = 'output window, operand 0, single buffered']
    #allocation3 [shape = 's32[1]{0}', space=sflag, size = 0x4, scoped, tag = 'scoped memory for text_classifier_forward.1']
    %24 = vsyncpa [#allocation3], 0
    // Predicated region
    $region2: #{text_classifier_forward.1} parent=1 // pred_check
      _
    $region3: #{text_classifier_forward.1} parent=1 // pred_check_branch
      %26 = sbr.rel (0) target = $region5
    $region4: #{text_classifier_forward.1} parent=1 // pred_region
      _
    $region5: #{text_classifier_forward.1} parent=1 // pred_fallthru
      _
    // Predicated region
    $region6: #{text_classifier_forward.1} parent=1 // pred_check
      _
    $region7: #{text_classifier_forward.1} parent=1 // pred_check_branch
      %28 = sbr.rel (0) target = $region9
    $region8: #{text_classifier_forward.1} parent=1 // pred_region
      _
    $region9: #{text_classifier_forward.1} parent=1 // pred_fallthru
      _
    // Predicated region
    $region10: #{text_classifier_forward.1} parent=1 // pred_check
      _
    $region11: #{text_classifier_forward.1} parent=1 // pred_check_branch
      %30 = sbr.rel (0) target = $region13
    $region12: #{text_classifier_forward.1} parent=1 // pred_region
      _
    $region13: #{text_classifier_forward.1} parent=1 // pred_fallthru
      _
    // Predicated region
    $region14: #{text_classifier_forward.1} parent=1 // pred_check
      _
    $region15: #{text_classifier_forward.1} parent=1 // pred_check_branch
      %32 = sbr.rel (0) target = $region17
    $region16: #{text_classifier_forward.1} parent=1 // pred_region
      _
    $region17: #{text_classifier_forward.1} parent=1 // pred_fallthru
      _
    // Predicated region
    $region18: #{text_classifier_forward.1} parent=1 // pred_check
      _
    $region19: #{text_classifier_forward.1} parent=1 // pred_check_branch
      %34 = sbr.rel (0) target = $region21
    $region20: #{text_classifier_forward.1} parent=1 // pred_region
      _
    $region21: #{text_classifier_forward.1} parent=1 // pred_fallthru
      _
    // Predicated region
    $region22: #{text_classifier_forward.1} parent=1 // pred_check
      _
    $region23: #{text_classifier_forward.1} parent=1 // pred_check_branch
      %36 = sbr.rel (0) target = $region25
    $region24: #{text_classifier_forward.1} parent=1 // pred_region
      _
    $region25: #{text_classifier_forward.1} parent=1 // pred_fallthru
      _
    // Predicated region
    $region26: #{text_classifier_forward.1} parent=1 // pred_check
      _
    $region27: #{text_classifier_forward.1} parent=1 // pred_check_branch
      %38 = sbr.rel (0) target = $region29
    $region28: #{text_classifier_forward.1} parent=1 // pred_region
      _
    $region29: #{text_classifier_forward.1} parent=1 // pred_fallthru
      _
    // Predicated region
    $region30: #{text_classifier_forward.1} parent=1 // pred_check
      _
    $region31: #{text_classifier_forward.1} parent=1 // pred_check_branch
      %40 = sbr.rel (0) target = $region33
    $region32: #{text_classifier_forward.1} parent=1 // pred_region
      _
    $region33: #{text_classifier_forward.1} parent=1 // pred_fallthru
      _
    // Predicated region
    $region34: #{text_classifier_forward.1} parent=1 // pred_check
      _
    $region35: #{text_classifier_forward.1} parent=1 // pred_check_branch
      %42 = sbr.rel (0) target = $region37
    $region36: #{text_classifier_forward.1} parent=1 // pred_region
      _
    $region37: #{text_classifier_forward.1} parent=1 // pred_fallthru
      _
    // Predicated region
    $region38: #{text_classifier_forward.1} parent=1 // pred_check
      _
    $region39: #{text_classifier_forward.1} parent=1 // pred_check_branch
      %44 = sbr.rel (0) target = $region41
    $region40: #{text_classifier_forward.1} parent=1 // pred_region
      _
    $region41: #{text_classifier_forward.1} parent=1 // pred_fallthru
      _
    // Predicated region
    $region42: #{text_classifier_forward.1} parent=1 // pred_check
      _
    $region43: #{text_classifier_forward.1} parent=1 // pred_check_branch
      %46 = sbr.rel (0) target = $region45
    $region44: #{text_classifier_forward.1} parent=1 // pred_region
      _
    $region45: #{text_classifier_forward.1} parent=1 // pred_fallthru
      _
    // Predicated region
    $region46: #{text_classifier_forward.1} parent=1 // pred_check
      _
    $region47: #{text_classifier_forward.1} parent=1 // pred_check_branch
      %48 = sbr.rel (0) target = $region49
    $region48: #{text_classifier_forward.1} parent=1 // pred_region
      _
    $region49: #{text_classifier_forward.1} parent=1 // pred_fallthru
      _
    // Predicated region
    $region50: #{text_classifier_forward.1} parent=1 // pred_check
      _
    $region51: #{text_classifier_forward.1} parent=1 // pred_check_branch
      %50 = sbr.rel (0) target = $region53
    $region52: #{text_classifier_forward.1} parent=1 // pred_region
      _
    $region53: #{text_classifier_forward.1} parent=1 // pred_fallthru
      _
    // Predicated region
    $region54: #{text_classifier_forward.1} parent=1 // pred_check
      _
    $region55: #{text_classifier_forward.1} parent=1 // pred_check_branch
      %52 = sbr.rel (0) target = $region57
    $region56: #{text_classifier_forward.1} parent=1 // pred_region
      _
    $region57: #{text_classifier_forward.1} parent=1 // pred_fallthru
      _
    // Predicated region
    $region58: #{text_classifier_forward.1} parent=1 // pred_check
      _
    $region59: #{text_classifier_forward.1} parent=1 // pred_check_branch
      %54 = sbr.rel (0) target = $region61
    $region60: #{text_classifier_forward.1} parent=1 // pred_region
      _
    $region61: #{text_classifier_forward.1} parent=1 // pred_fallthru
      _
    // Predicated region
    $region62: #{text_classifier_forward.1} parent=1 // pred_check
      _
    $region63: #{text_classifier_forward.1} parent=1 // pred_check_branch
      %56 = sbr.rel (0) target = $region65
    $region64: #{text_classifier_forward.1} parent=1 // pred_region
      _
    $region65: #{text_classifier_forward.1} parent=1 // pred_fallthru
      _
    // Predicated region
    $region66: #{text_classifier_forward.1} parent=1 // pred_check
      _
    $region67: #{text_classifier_forward.1} parent=1 // pred_check_branch
      %58 = sbr.rel (0) target = $region69
    $region68: #{text_classifier_forward.1} parent=1 // pred_region
      _
    $region69: #{text_classifier_forward.1} parent=1 // pred_fallthru
      _
    // Predicated region
    $region70: #{text_classifier_forward.1} parent=1 // pred_check
      _
    $region71: #{text_classifier_forward.1} parent=1 // pred_check_branch
      %60 = sbr.rel (0) target = $region73
    $region72: #{text_classifier_forward.1} parent=1 // pred_region
      _
    $region73: #{text_classifier_forward.1} parent=1 // pred_fallthru
      _
    // Predicated region
    $region74: #{text_classifier_forward.1} parent=1 // pred_check
      _
    $region75: #{text_classifier_forward.1} parent=1 // pred_check_branch
      %62 = sbr.rel (0) target = $region77
    $region76: #{text_classifier_forward.1} parent=1 // pred_region
      _
    $region77: #{text_classifier_forward.1} parent=1 // pred_fallthru
      _
    %v64 = vld [vmem:[%s1] sm:$0xff]
    %v65 = vld [vmem:[%s0] sm:$0xff]
    %v66 = vld [vmem:[%s0 + $0x8] sm:$0xff]
    %v67 = vadd.f32 %v65, %v64
    %v68 = vadd.f32 %v66, %v64
    %v69 = vld [vmem:[%s3] sm:$0x1]
    %v70 = vld [vmem:[%s4] sm:$0x1]
    %vm71 = vcmask 523264
    %v72 = vsel %vm71, %v67, 0.0
    %73 = vadd.xlane.f32.xlu0 %v72
    %v74 = vpop.xlane.xlu0 %73
    %v75 = vsel %vm71, %v68, 0.0
    %76 = vadd.xlane.f32.xlu0 %v75
    %v77 = vpop.xlane.xlu0 %76
    %v78 = vrcp.pop 64.0
    %v79 = vmul.f32 %v74, %v78
    %v80 = vmul.f32 %v77, %v78
    %v81 = vsub.f32 %v67, %v79
    %v82 = vsub.f32 %v68, %v80
    %v83 = vmul.f32 %v81, %v81
    %v84 = vmul.f32 %v82, %v82
    %v85 = vsel %vm71, %v83, 0.0
    %86 = vadd.xlane.f32.xlu0 %v85
    %v87 = vpop.xlane.xlu0 %86
    %v88 = vsel %vm71, %v84, 0.0
    %89 = vadd.xlane.f32.xlu0 %v88
    %v90 = vpop.xlane.xlu0 %89
    %v91 = vmul.f32 %v87, %v78
    %v92 = vmul.f32 %v90, %v78
    %v93 = vadd.f32 %v91, 1e-12
    %v94 = vadd.f32 %v92, 1e-12
    %v95 = vrsqrt.pop %v93
    %v96 = vrsqrt.pop %v94
    %v97 = vmul.f32 %v81, %v95
    %v98 = vmul.f32 %v82, %v96
    %v100 = vlaneseq
    %v101 = vshrl.u32 %v100, 7
    %v102 = vsub.s32 0, %v101
    %v103 = vrot.slane %v69, %v102
    %v105 = vmul.f32 %v97, %v103
    %v106 = vmul.f32 %v98, %v103
    %v108 = vlaneseq
    %v109 = vshrl.u32 %v108, 7
    %v110 = vsub.s32 0, %v109
    %v111 = vrot.slane %v70, %v110
    %v113 = vadd.f32 %v105, %v111
    %v114 = vadd.f32 %v106, %v111
    %v115 = vld [vmem:[%s2] sm:$0x3]
    %v116 = vlaneseq
    %v117 = vshrl.u32 %v116, 7
    %v118 = vsub.s32 0, %v117
    %v119 = vrot.slane %v115, %v118
    %v120 = vlaneseq
    %v121 = vshrl.u32 %v120, 7
    %v122 = vsub.s32 1, %v121
    %v123 = vrot.slane %v115, %v122
    %v124 = vpack.c.bf16 %v114, %v113
    %v125 = vld [vmem:[%s5] sm:$0xff]
    %v126 = vld [vmem:[%s5 + $0x8] sm:$0xff]
    %v127 = vld [vmem:[%s5 + $0x10] sm:$0xff]
    %v128 = vld [vmem:[%s5 + $0x18] sm:$0xff]
    %v129 = vld [vmem:[%s5 + $0x20] sm:$0xff]
    %v130 = vld [vmem:[%s5 + $0x28] sm:$0xff]
    %v131 = vld [vmem:[%s5 + $0x30] sm:$0xff]
    %v132 = vld [vmem:[%s5 + $0x38] sm:$0xff]
    %v133 = vld [vmem:[%s6] sm:$0x3]
    %v135 = vlaneseq
    %v136 = vshrl.u32 %v135, 7
    %v137 = vsub.s32 0, %v136
    %v138 = vrot.slane %v133, %v137
    %v139 = vlaneseq
    %v140 = vshrl.u32 %v139, 7
    %v141 = vsub.s32 1, %v140
    %v142 = vrot.slane %v133, %v141
    %v153 = vunpack.c.l.b16 %v125
    %v154 = vunpack.c.h.b16 %v125
    %v155 = vunpack.c.l.b16 %v126
    %v156 = vunpack.c.h.b16 %v126
    %v157 = vunpack.c.l.b16 %v127
    %v158 = vunpack.c.h.b16 %v127
    %v159 = vunpack.c.l.b16 %v128
    %v160 = vunpack.c.h.b16 %v128
    %v161 = vunpack.c.l.b16 %v129
    %v162 = vunpack.c.h.b16 %v129
    %v163 = vunpack.c.l.b16 %v130
    %v164 = vunpack.c.h.b16 %v130
    %v165 = vunpack.c.l.b16 %v131
    %v166 = vunpack.c.h.b16 %v131
    %v167 = vunpack.c.l.b16 %v132
    %v168 = vunpack.c.h.b16 %v132
    %v169 = vpack.c.b16 %v155, %v153
    %v170 = vpack.c.b16 %v156, %v154
    %v171 = vpack.c.b16 %v159, %v157
    %v172 = vpack.c.b16 %v160, %v158
    %v173 = vpack.c.b16 %v163, %v161
    %v174 = vpack.c.b16 %v164, %v162
    %v175 = vpack.c.b16 %v167, %v165
    %v176 = vpack.c.b16 %v168, %v166
    %v186 = vsel %vm71, %v124, 0
    %188 = vmatprep.subr.bf16.mxu0 %v170
    %189 = vmatpush1.bf16.msra.mxu0 %v169
    %190 = vmatprep.subr.bf16.mxu0 %v172
    %191 = vmatpush1.bf16.msra.mxu0 %v171
    %192 = vmatprep.subr.bf16.mxu0 %v174
    %193 = vmatpush1.bf16.msra.mxu0 %v173
    %194 = vmatprep.subr.bf16.mxu0 %v176
    %195 = vmatpush1.bf16.msra.mxu0 %v175
    %196 = vmatprep.subr.bf16.mxu0 0
    %197 = vmatpush1.bf16.msra.mxu0 0
    %198 = vmatprep.subr.bf16.mxu0 0
    %199 = vmatpush1.bf16.msra.mxu0 0
    %200 = vmatprep.subr.bf16.mxu0 0
    %201 = vmatpush1.bf16.msra.mxu0 0
    %202 = vmatprep.subr.bf16.mxu0 0
    %203 = vmatpush1.bf16.msra.mxu0 0
    %204 = vmatprep.subr.bf16.mxu0 0
    %205 = vmatpush1.bf16.msra.mxu0 0
    %206 = vmatprep.subr.bf16.mxu0 0
    %207 = vmatpush1.bf16.msra.mxu0 0
    %208 = vmatprep.subr.bf16.mxu0 0
    %209 = vmatpush1.bf16.msra.mxu0 0
    %210 = vmatprep.subr.bf16.mxu0 0
    %211 = vmatpush1.bf16.msra.mxu0 0
    %212 = vmatprep.subr.bf16.mxu0 0
    %213 = vmatpush1.bf16.msra.mxu0 0
    %214 = vmatprep.subr.bf16.mxu0 0
    %215 = vmatpush1.bf16.msra.mxu0 0
    %216 = vmatprep.subr.bf16.mxu0 0
    %217 = vmatpush1.bf16.msra.mxu0 0
    %218 = vmatprep.subr.bf16.mxu0 0
    %219 = vmatpush1.bf16.msra.mxu0 0
    %220 = vmatprep.mubr.bf16.mxu0 0
    %221 = vmatmul.mubr.bf16.gmra.mrb[0].mxu0 %v186
    %v222 = vpop.f32.mrb[0].mxu0
    %v223 = vadd.f32 %v138, %v222
    %v224 = vpop.f32.mrb[0].mxu0
    %v225 = vadd.f32 %v142, %v224
    %v226 = vpop.f32.mrb[0].mxu0
    %v227 = vadd.f32 %v138, %v226
    %v228 = vpop.f32.mrb[0].mxu0
    %v229 = vadd.f32 %v142, %v228
    %230 = vdwg.mxu0
    %v231 = vpack.c.bf16 %v227, %v223
    %v232 = vpack.c.bf16 %v229, %v225
    %234 = vrot.lane.b32.xlu0 %v231, 64
    %v235 = vpop.permute.xlu0 %234
    %vm236 = vcmask 130048
    %v238 = vsel %vm236, %v231, 0
    %v241 = vsel %vm236, %v235, 0
    %243 = vmatprep.subr.bf16.mxu0 0
    %244 = vmatpush1.bf16.xpose.msra.mxu0 %v241
    %245 = vmatprep.subr.bf16.mxu0 0
    %246 = vmatpush1.bf16.xpose.msra.mxu0 0
    %247 = vmatprep.subr.bf16.mxu0 0
    %248 = vmatpush1.bf16.xpose.msra.mxu0 0
    %249 = vmatprep.subr.bf16.mxu0 0
    %250 = vmatpush1.bf16.xpose.msra.mxu0 0
    %251 = vmatprep.subr.bf16.mxu0 0
    %252 = vmatpush1.bf16.xpose.msra.mxu0 0
    %253 = vmatprep.subr.bf16.mxu0 0
    %254 = vmatpush1.bf16.xpose.msra.mxu0 0
    %255 = vmatprep.subr.bf16.mxu0 0
    %256 = vmatpush1.bf16.xpose.msra.mxu0 0
    %257 = vmatprep.subr.bf16.mxu0 0
    %258 = vmatpush1.bf16.xpose.msra.mxu0 0
    %259 = vmatprep.subr.bf16.mxu0 0
    %260 = vmatpush1.bf16.xpose.msra.mxu0 0
    %261 = vmatprep.subr.bf16.mxu0 0
    %262 = vmatpush1.bf16.xpose.msra.mxu0 0
    %263 = vmatprep.subr.bf16.mxu0 0
    %264 = vmatpush1.bf16.xpose.msra.mxu0 0
    %265 = vmatprep.subr.bf16.mxu0 0
    %266 = vmatpush1.bf16.xpose.msra.mxu0 0
    %267 = vmatprep.subr.bf16.mxu0 0
    %268 = vmatpush1.bf16.xpose.msra.mxu0 0
    %269 = vmatprep.subr.bf16.mxu0 0
    %270 = vmatpush1.bf16.xpose.msra.mxu0 0
    %271 = vmatprep.subr.bf16.mxu0 0
    %272 = vmatpush1.bf16.xpose.msra.mxu0 0
    %273 = vmatprep.subr.bf16.mxu0 0
    %274 = vmatpush1.bf16.xpose.msra.mxu0 0
    %275 = vmatprep.mubr.bf16.mxu0 0
    %276 = vmatmul.mubr.bf16.gmra.mrb[0].mxu0 %v238
    %v277 = vpop.f32.mrb[0].mxu0
    %v278 = vadd.f32 0.0, %v277
    %v279 = vpop.f32.mrb[0].mxu0
    %v280 = vpop.f32.mrb[0].mxu0
    %v281 = vpop.f32.mrb[0].mxu0
    %282 = vdwg.mxu0
    %283 = vrot.lane.b32.xlu0 %v231, 112
    %v284 = vpop.permute.xlu0 %283
    %285 = vrot.lane.b32.xlu0 %v231, 48
    %v286 = vpop.permute.xlu0 %285
    %v288 = vsel %vm236, %v284, 0
    %v291 = vsel %vm236, %v286, 0
    %293 = vmatprep.subr.bf16.mxu0 0
    %294 = vmatpush1.bf16.xpose.msra.mxu0 %v291
    %295 = vmatprep.subr.bf16.mxu0 0
    %296 = vmatpush1.bf16.xpose.msra.mxu0 0
    %297 = vmatprep.subr.bf16.mxu0 0
    %298 = vmatpush1.bf16.xpose.msra.mxu0 0
    %299 = vmatprep.subr.bf16.mxu0 0
    %300 = vmatpush1.bf16.xpose.msra.mxu0 0
    %301 = vmatprep.subr.bf16.mxu0 0
    %302 = vmatpush1.bf16.xpose.msra.mxu0 0
    %303 = vmatprep.subr.bf16.mxu0 0
    %304 = vmatpush1.bf16.xpose.msra.mxu0 0
    %305 = vmatprep.subr.bf16.mxu0 0
    %306 = vmatpush1.bf16.xpose.msra.mxu0 0
    %307 = vmatprep.subr.bf16.mxu0 0
    %308 = vmatpush1.bf16.xpose.msra.mxu0 0
    %309 = vmatprep.subr.bf16.mxu0 0
    %310 = vmatpush1.bf16.xpose.msra.mxu0 0
    %311 = vmatprep.subr.bf16.mxu0 0
    %312 = vmatpush1.bf16.xpose.msra.mxu0 0
    %313 = vmatprep.subr.bf16.mxu0 0
    %314 = vmatpush1.bf16.xpose.msra.mxu0 0
    %315 = vmatprep.subr.bf16.mxu0 0
    %316 = vmatpush1.bf16.xpose.msra.mxu0 0
    %317 = vmatprep.subr.bf16.mxu0 0
    %318 = vmatpush1.bf16.xpose.msra.mxu0 0
    %319 = vmatprep.subr.bf16.mxu0 0
    %320 = vmatpush1.bf16.xpose.msra.mxu0 0
    %321 = vmatprep.subr.bf16.mxu0 0
    %322 = vmatpush1.bf16.xpose.msra.mxu0 0
    %323 = vmatprep.subr.bf16.mxu0 0
    %324 = vmatpush1.bf16.xpose.msra.mxu0 0
    %325 = vmatprep.mubr.bf16.mxu0 0
    %326 = vmatmul.mubr.bf16.gmra.mrb[0].mxu0 %v288
    %v327 = vpop.f32.mrb[0].mxu0
    %v328 = vadd.f32 0.0, %v327
    %v329 = vpop.f32.mrb[0].mxu0
    %v330 = vpop.f32.mrb[0].mxu0
    %v331 = vpop.f32.mrb[0].mxu0
    %332 = vdwg.mxu0
    %333 = vrot.lane.b32.xlu0 %v231, 96
    %v334 = vpop.permute.xlu0 %333
    %335 = vrot.lane.b32.xlu0 %v231, 32
    %v336 = vpop.permute.xlu0 %335
    %v338 = vsel %vm236, %v334, 0
    %v341 = vsel %vm236, %v336, 0
    %343 = vmatprep.subr.bf16.mxu0 0
    %344 = vmatpush1.bf16.xpose.msra.mxu0 %v341
    %345 = vmatprep.subr.bf16.mxu0 0
    %346 = vmatpush1.bf16.xpose.msra.mxu0 0
    %347 = vmatprep.subr.bf16.mxu0 0
    %348 = vmatpush1.bf16.xpose.msra.mxu0 0
    %349 = vmatprep.subr.bf16.mxu0 0
    %350 = vmatpush1.bf16.xpose.msra.mxu0 0
    %351 = vmatprep.subr.bf16.mxu0 0
    %352 = vmatpush1.bf16.xpose.msra.mxu0 0
    %353 = vmatprep.subr.bf16.mxu0 0
    %354 = vmatpush1.bf16.xpose.msra.mxu0 0
    %355 = vmatprep.subr.bf16.mxu0 0
    %356 = vmatpush1.bf16.xpose.msra.mxu0 0
    %357 = vmatprep.subr.bf16.mxu0 0
    %358 = vmatpush1.bf16.xpose.msra.mxu0 0
    %359 = vmatprep.subr.bf16.mxu0 0
    %360 = vmatpush1.bf16.xpose.msra.mxu0 0
    %361 = vmatprep.subr.bf16.mxu0 0
    %362 = vmatpush1.bf16.xpose.msra.mxu0 0
    %363 = vmatprep.subr.bf16.mxu0 0
    %364 = vmatpush1.bf16.xpose.msra.mxu0 0
    %365 = vmatprep.subr.bf16.mxu0 0
    %366 = vmatpush1.bf16.xpose.msra.mxu0 0
    %367 = vmatprep.subr.bf16.mxu0 0
    %368 = vmatpush1.bf16.xpose.msra.mxu0 0
    %369 = vmatprep.subr.bf16.mxu0 0
    %370 = vmatpush1.bf16.xpose.msra.mxu0 0
    %371 = vmatprep.subr.bf16.mxu0 0
    %372 = vmatpush1.bf16.xpose.msra.mxu0 0
    %373 = vmatprep.subr.bf16.mxu0 0
    %374 = vmatpush1.bf16.xpose.msra.mxu0 0
    %375 = vmatprep.mubr.bf16.mxu0 0
    %376 = vmatmul.mubr.bf16.gmra.mrb[0].mxu0 %v338
    %v377 = vpop.f32.mrb[0].mxu0
    %v378 = vadd.f32 0.0, %v377
    %v379 = vpop.f32.mrb[0].mxu0
    %v380 = vpop.f32.mrb[0].mxu0
    %v381 = vpop.f32.mrb[0].mxu0
    %382 = vdwg.mxu0
    %383 = vrot.lane.b32.xlu0 %v231, 80
    %v384 = vpop.permute.xlu0 %383
    %385 = vrot.lane.b32.xlu0 %v231, 16
    %v386 = vpop.permute.xlu0 %385
    %v388 = vsel %vm236, %v384, 0
    %v391 = vsel %vm236, %v386, 0
    %393 = vmatprep.subr.bf16.mxu0 0
    %394 = vmatpush1.bf16.xpose.msra.mxu0 %v391
    %395 = vmatprep.subr.bf16.mxu0 0
    %396 = vmatpush1.bf16.xpose.msra.mxu0 0
    %397 = vmatprep.subr.bf16.mxu0 0
    %398 = vmatpush1.bf16.xpose.msra.mxu0 0
    %399 = vmatprep.subr.bf16.mxu0 0
    %400 = vmatpush1.bf16.xpose.msra.mxu0 0
    %401 = vmatprep.subr.bf16.mxu0 0
    %402 = vmatpush1.bf16.xpose.msra.mxu0 0
    %403 = vmatprep.subr.bf16.mxu0 0
    %404 = vmatpush1.bf16.xpose.msra.mxu0 0
    %405 = vmatprep.subr.bf16.mxu0 0
    %406 = vmatpush1.bf16.xpose.msra.mxu0 0
    %407 = vmatprep.subr.bf16.mxu0 0
    %408 = vmatpush1.bf16.xpose.msra.mxu0 0
    %409 = vmatprep.subr.bf16.mxu0 0
    %410 = vmatpush1.bf16.xpose.msra.mxu0 0
    %411 = vmatprep.subr.bf16.mxu0 0
    %412 = vmatpush1.bf16.xpose.msra.mxu0 0
    %413 = vmatprep.subr.bf16.mxu0 0
    %414 = vmatpush1.bf16.xpose.msra.mxu0 0
    %415 = vmatprep.subr.bf16.mxu0 0
    %416 = vmatpush1.bf16.xpose.msra.mxu0 0
    %417 = vmatprep.subr.bf16.mxu0 0
    %418 = vmatpush1.bf16.xpose.msra.mxu0 0
    %419 = vmatprep.subr.bf16.mxu0 0
    %420 = vmatpush1.bf16.xpose.msra.mxu0 0
    %421 = vmatprep.subr.bf16.mxu0 0
    %422 = vmatpush1.bf16.xpose.msra.mxu0 0
    %423 = vmatprep.subr.bf16.mxu0 0
    %424 = vmatpush1.bf16.xpose.msra.mxu0 0
    %425 = vmatprep.mubr.bf16.mxu0 0
    %426 = vmatmul.mubr.bf16.gmra.mrb[0].mxu0 %v388
    %v427 = vpop.f32.mrb[0].mxu0
    %v428 = vadd.f32 0.0, %v427
    %v429 = vpop.f32.mrb[0].mxu0
    %v430 = vpop.f32.mrb[0].mxu0
    %v431 = vpop.f32.mrb[0].mxu0
    %432 = vdwg.mxu0
    %v433 = vrot.slane %v231, 4
    %434 = vrot.lane.b32.xlu0 %v433, 64
    %v435 = vpop.permute.xlu0 %434
    %v437 = vsel %vm236, %v433, 0
    %v440 = vsel %vm236, %v435, 0
    %442 = vmatprep.subr.bf16.mxu0 0
    %443 = vmatpush1.bf16.xpose.msra.mxu0 %v440
    %444 = vmatprep.subr.bf16.mxu0 0
    %445 = vmatpush1.bf16.xpose.msra.mxu0 0
    %446 = vmatprep.subr.bf16.mxu0 0
    %447 = vmatpush1.bf16.xpose.msra.mxu0 0
    %448 = vmatprep.subr.bf16.mxu0 0
    %449 = vmatpush1.bf16.xpose.msra.mxu0 0
    %450 = vmatprep.subr.bf16.mxu0 0
    %451 = vmatpush1.bf16.xpose.msra.mxu0 0
    %452 = vmatprep.subr.bf16.mxu0 0
    %453 = vmatpush1.bf16.xpose.msra.mxu0 0
    %454 = vmatprep.subr.bf16.mxu0 0
    %455 = vmatpush1.bf16.xpose.msra.mxu0 0
    %456 = vmatprep.subr.bf16.mxu0 0
    %457 = vmatpush1.bf16.xpose.msra.mxu0 0
    %458 = vmatprep.subr.bf16.mxu0 0
    %459 = vmatpush1.bf16.xpose.msra.mxu0 0
    %460 = vmatprep.subr.bf16.mxu0 0
    %461 = vmatpush1.bf16.xpose.msra.mxu0 0
    %462 = vmatprep.subr.bf16.mxu0 0
    %463 = vmatpush1.bf16.xpose.msra.mxu0 0
    %464 = vmatprep.subr.bf16.mxu0 0
    %465 = vmatpush1.bf16.xpose.msra.mxu0 0
    %466 = vmatprep.subr.bf16.mxu0 0
    %467 = vmatpush1.bf16.xpose.msra.mxu0 0
    %468 = vmatprep.subr.bf16.mxu0 0
    %469 = vmatpush1.bf16.xpose.msra.mxu0 0
    %470 = vmatprep.subr.bf16.mxu0 0
    %471 = vmatpush1.bf16.xpose.msra.mxu0 0
    %472 = vmatprep.subr.bf16.mxu0 0
    %473 = vmatpush1.bf16.xpose.msra.mxu0 0
    %474 = vmatprep.mubr.bf16.mxu0 0
    %475 = vmatmul.mubr.bf16.gmra.mrb[0].mxu0 %v437
    %v476 = vpop.f32.mrb[0].mxu0
    %v477 = vadd.f32 0.0, %v476
    %v478 = vpop.f32.mrb[0].mxu0
    %v479 = vpop.f32.mrb[0].mxu0
    %v480 = vpop.f32.mrb[0].mxu0
    %481 = vdwg.mxu0
    %482 = vrot.lane.b32.xlu0 %v433, 112
    %v483 = vpop.permute.xlu0 %482
    %484 = vrot.lane.b32.xlu0 %v433, 48
    %v485 = vpop.permute.xlu0 %484
    %v487 = vsel %vm236, %v483, 0
    %v490 = vsel %vm236, %v485, 0
    %492 = vmatprep.subr.bf16.mxu0 0
    %493 = vmatpush1.bf16.xpose.msra.mxu0 %v490
    %494 = vmatprep.subr.bf16.mxu0 0
    %495 = vmatpush1.bf16.xpose.msra.mxu0 0
    %496 = vmatprep.subr.bf16.mxu0 0
    %497 = vmatpush1.bf16.xpose.msra.mxu0 0
    %498 = vmatprep.subr.bf16.mxu0 0
    %499 = vmatpush1.bf16.xpose.msra.mxu0 0
    %500 = vmatprep.subr.bf16.mxu0 0
    %501 = vmatpush1.bf16.xpose.msra.mxu0 0
    %502 = vmatprep.subr.bf16.mxu0 0
    %503 = vmatpush1.bf16.xpose.msra.mxu0 0
    %504 = vmatprep.subr.bf16.mxu0 0
    %505 = vmatpush1.bf16.xpose.msra.mxu0 0
    %506 = vmatprep.subr.bf16.mxu0 0
    %507 = vmatpush1.bf16.xpose.msra.mxu0 0
    %508 = vmatprep.subr.bf16.mxu0 0
    %509 = vmatpush1.bf16.xpose.msra.mxu0 0
    %510 = vmatprep.subr.bf16.mxu0 0
    %511 = vmatpush1.bf16.xpose.msra.mxu0 0
    %512 = vmatprep.subr.bf16.mxu0 0
    %513 = vmatpush1.bf16.xpose.msra.mxu0 0
    %514 = vmatprep.subr.bf16.mxu0 0
    %515 = vmatpush1.bf16.xpose.msra.mxu0 0
    %516 = vmatprep.subr.bf16.mxu0 0
    %517 = vmatpush1.bf16.xpose.msra.mxu0 0
    %518 = vmatprep.subr.bf16.mxu0 0
    %519 = vmatpush1.bf16.xpose.msra.mxu0 0
    %520 = vmatprep.subr.bf16.mxu0 0
    %521 = vmatpush1.bf16.xpose.msra.mxu0 0
    %522 = vmatprep.subr.bf16.mxu0 0
    %523 = vmatpush1.bf16.xpose.msra.mxu0 0
    %524 = vmatprep.mubr.bf16.mxu0 0
    %525 = vmatmul.mubr.bf16.gmra.mrb[0].mxu0 %v487
    %v526 = vpop.f32.mrb[0].mxu0
    %v527 = vadd.f32 0.0, %v526
    %v528 = vpop.f32.mrb[0].mxu0
    %v529 = vpop.f32.mrb[0].mxu0
    %v530 = vpop.f32.mrb[0].mxu0
    %531 = vdwg.mxu0
    %532 = vrot.lane.b32.xlu0 %v433, 96
    %v533 = vpop.permute.xlu0 %532
    %534 = vrot.lane.b32.xlu0 %v433, 32
    %v535 = vpop.permute.xlu0 %534
    %v537 = vsel %vm236, %v533, 0
    %v540 = vsel %vm236, %v535, 0
    %542 = vmatprep.subr.bf16.mxu0 0
    %543 = vmatpush1.bf16.xpose.msra.mxu0 %v540
    %544 = vmatprep.subr.bf16.mxu0 0
    %545 = vmatpush1.bf16.xpose.msra.mxu0 0
    %546 = vmatprep.subr.bf16.mxu0 0
    %547 = vmatpush1.bf16.xpose.msra.mxu0 0
    %548 = vmatprep.subr.bf16.mxu0 0
    %549 = vmatpush1.bf16.xpose.msra.mxu0 0
    %550 = vmatprep.subr.bf16.mxu0 0
    %551 = vmatpush1.bf16.xpose.msra.mxu0 0
    %552 = vmatprep.subr.bf16.mxu0 0
    %553 = vmatpush1.bf16.xpose.msra.mxu0 0
    %554 = vmatprep.subr.bf16.mxu0 0
    %555 = vmatpush1.bf16.xpose.msra.mxu0 0
    %556 = vmatprep.subr.bf16.mxu0 0
    %557 = vmatpush1.bf16.xpose.msra.mxu0 0
    %558 = vmatprep.subr.bf16.mxu0 0
    %559 = vmatpush1.bf16.xpose.msra.mxu0 0
    %560 = vmatprep.subr.bf16.mxu0 0
    %561 = vmatpush1.bf16.xpose.msra.mxu0 0
    %562 = vmatprep.subr.bf16.mxu0 0
    %563 = vmatpush1.bf16.xpose.msra.mxu0 0
    %564 = vmatprep.subr.bf16.mxu0 0
    %565 = vmatpush1.bf16.xpose.msra.mxu0 0
    %566 = vmatprep.subr.bf16.mxu0 0
    %567 = vmatpush1.bf16.xpose.msra.mxu0 0
    %568 = vmatprep.subr.bf16.mxu0 0
    %569 = vmatpush1.bf16.xpose.msra.mxu0 0
    %570 = vmatprep.subr.bf16.mxu0 0
    %571 = vmatpush1.bf16.xpose.msra.mxu0 0
    %572 = vmatprep.subr.bf16.mxu0 0
    %573 = vmatpush1.bf16.xpose.msra.mxu0 0
    %574 = vmatprep.mubr.bf16.mxu0 0
    %575 = vmatmul.mubr.bf16.gmra.mrb[0].mxu0 %v537
    %v576 = vpop.f32.mrb[0].mxu0
    %v577 = vadd.f32 0.0, %v576
    %v578 = vpop.f32.mrb[0].mxu0
    %v579 = vpop.f32.mrb[0].mxu0
    %v580 = vpop.f32.mrb[0].mxu0
    %581 = vdwg.mxu0
    %582 = vrot.lane.b32.xlu0 %v433, 80
    %v583 = vpop.permute.xlu0 %582
    %584 = vrot.lane.b32.xlu0 %v433, 16
    %v585 = vpop.permute.xlu0 %584
    %v587 = vsel %vm236, %v583, 0
    %v590 = vsel %vm236, %v585, 0
    %592 = vmatprep.subr.bf16.mxu0 0
    %593 = vmatpush1.bf16.xpose.msra.mxu0 %v590
    %594 = vmatprep.subr.bf16.mxu0 0
    %595 = vmatpush1.bf16.xpose.msra.mxu0 0
    %596 = vmatprep.subr.bf16.mxu0 0
    %597 = vmatpush1.bf16.xpose.msra.mxu0 0
    %598 = vmatprep.subr.bf16.mxu0 0
    %599 = vmatpush1.bf16.xpose.msra.mxu0 0
    %600 = vmatprep.subr.bf16.mxu0 0
    %601 = vmatpush1.bf16.xpose.msra.mxu0 0
    %602 = vmatprep.subr.bf16.mxu0 0
    %603 = vmatpush1.bf16.xpose.msra.mxu0 0
    %604 = vmatprep.subr.bf16.mxu0 0
    %605 = vmatpush1.bf16.xpose.msra.mxu0 0
    %606 = vmatprep.subr.bf16.mxu0 0
    %607 = vmatpush1.bf16.xpose.msra.mxu0 0
    %608 = vmatprep.subr.bf16.mxu0 0
    %609 = vmatpush1.bf16.xpose.msra.mxu0 0
    %610 = vmatprep.subr.bf16.mxu0 0
    %611 = vmatpush1.bf16.xpose.msra.mxu0 0
    %612 = vmatprep.subr.bf16.mxu0 0
    %613 = vmatpush1.bf16.xpose.msra.mxu0 0
    %614 = vmatprep.subr.bf16.mxu0 0
    %615 = vmatpush1.bf16.xpose.msra.mxu0 0
    %616 = vmatprep.subr.bf16.mxu0 0
    %617 = vmatpush1.bf16.xpose.msra.mxu0 0
    %618 = vmatprep.subr.bf16.mxu0 0
    %619 = vmatpush1.bf16.xpose.msra.mxu0 0
    %620 = vmatprep.subr.bf16.mxu0 0
    %621 = vmatpush1.bf16.xpose.msra.mxu0 0
    %622 = vmatprep.subr.bf16.mxu0 0
    %623 = vmatpush1.bf16.xpose.msra.mxu0 0
    %624 = vmatprep.mubr.bf16.mxu0 0
    %625 = vmatmul.mubr.bf16.gmra.mrb[0].mxu0 %v587
    %v626 = vpop.f32.mrb[0].mxu0
    %v627 = vadd.f32 0.0, %v626
    %v628 = vpop.f32.mrb[0].mxu0
    %v629 = vpop.f32.mrb[0].mxu0
    %v630 = vpop.f32.mrb[0].mxu0
    %631 = vdwg.mxu0
    %v632 = vadd.f32 %v278, %v119
    %v633 = vadd.f32 %v328, %v119
    %v634 = vadd.f32 %v378, %v119
    %v635 = vadd.f32 %v428, %v119
    %v636 = vadd.f32 %v477, %v123
    %v637 = vadd.f32 %v527, %v123
    %v638 = vadd.f32 %v577, %v123
    %v639 = vadd.f32 %v627, %v123
    %vm640 = vcmask 64512
    %v641 = vsel %vm640, %v632, -inf
    %642 = vmax.xlane.f32.xlu0 %v641
    %v643 = vpop.xlane.xlu0 %642
    %v644 = vsel %vm640, %v633, -inf
    %645 = vmax.xlane.f32.xlu0 %v644
    %v646 = vpop.xlane.xlu0 %645
    %v647 = vsel %vm640, %v634, -inf
    %648 = vmax.xlane.f32.xlu0 %v647
    %v649 = vpop.xlane.xlu0 %648
    %v650 = vsel %vm640, %v635, -inf
    %651 = vmax.xlane.f32.xlu0 %v650
    %v652 = vpop.xlane.xlu0 %651
    %v653 = vsel %vm640, %v636, -inf
    %654 = vmax.xlane.f32.xlu0 %v653
    %v655 = vpop.xlane.xlu0 %654
    %v656 = vsel %vm640, %v637, -inf
    %657 = vmax.xlane.f32.xlu0 %v656
    %v658 = vpop.xlane.xlu0 %657
    %v659 = vsel %vm640, %v638, -inf
    %660 = vmax.xlane.f32.xlu0 %v659
    %v661 = vpop.xlane.xlu0 %660
    %v662 = vsel %vm640, %v639, -inf
    %663 = vmax.xlane.f32.xlu0 %v662
    %v664 = vpop.xlane.xlu0 %663
    %v665 = vsub.f32 %v632, %v643
    %v666 = vsub.f32 %v633, %v646
    %v667 = vsub.f32 %v634, %v649
    %v668 = vsub.f32 %v635, %v652
    %v669 = vsub.f32 %v636, %v655
    %v670 = vsub.f32 %v637, %v658
    %v671 = vsub.f32 %v638, %v661
    %v672 = vsub.f32 %v639, %v664
    %v673 = vmul.f32 %v665, 1.442695
    %v674 = vpow.pop %v673
    %v675 = vmul.f32 %v666, 1.442695
    %v676 = vpow.pop %v675
    %v677 = vmul.f32 %v667, 1.442695
    %v678 = vpow.pop %v677
    %v679 = vmul.f32 %v668, 1.442695
    %v680 = vpow.pop %v679
    %v681 = vmul.f32 %v669, 1.442695
    %v682 = vpow.pop %v681
    %v683 = vmul.f32 %v670, 1.442695
    %v684 = vpow.pop %v683
    %v685 = vmul.f32 %v671, 1.442695
    %v686 = vpow.pop %v685
    %v687 = vmul.f32 %v672, 1.442695
    %v688 = vpow.pop %v687
    %v689 = vsel %vm640, %v674, 0.0
    %690 = vadd.xlane.f32.xlu0 %v689
    %v691 = vpop.xlane.xlu0 %690
    %v692 = vsel %vm640, %v676, 0.0
    %693 = vadd.xlane.f32.xlu0 %v692
    %v694 = vpop.xlane.xlu0 %693
    %v695 = vsel %vm640, %v678, 0.0
    %696 = vadd.xlane.f32.xlu0 %v695
    %v697 = vpop.xlane.xlu0 %696
    %v698 = vsel %vm640, %v680, 0.0
    %699 = vadd.xlane.f32.xlu0 %v698
    %v700 = vpop.xlane.xlu0 %699
    %v701 = vsel %vm640, %v682, 0.0
    %702 = vadd.xlane.f32.xlu0 %v701
    %v703 = vpop.xlane.xlu0 %702
    %v704 = vsel %vm640, %v684, 0.0
    %705 = vadd.xlane.f32.xlu0 %v704
    %v706 = vpop.xlane.xlu0 %705
    %v707 = vsel %vm640, %v686, 0.0
    %708 = vadd.xlane.f32.xlu0 %v707
    %v709 = vpop.xlane.xlu0 %708
    %v710 = vsel %vm640, %v688, 0.0
    %711 = vadd.xlane.f32.xlu0 %v710
    %v712 = vpop.xlane.xlu0 %711
    %v713 = vrcp.pop %v691
    %v714 = vrcp.pop %v694
    %v715 = vrcp.pop %v697
    %v716 = vrcp.pop %v700
    %v717 = vrcp.pop %v703
    %v718 = vrcp.pop %v706
    %v719 = vrcp.pop %v709
    %v720 = vrcp.pop %v712
    %v721 = vmul.f32 %v674, %v713
    %v722 = vmul.f32 %v676, %v714
    %v723 = vmul.f32 %v678, %v715
    %v724 = vmul.f32 %v680, %v716
    %v725 = vmul.f32 %v682, %v717
    %v726 = vmul.f32 %v684, %v718
    %v727 = vmul.f32 %v686, %v719
    %v728 = vmul.f32 %v688, %v720
    %v729 = vpack.c.bf16 %v721, %v721
    %v731 = vsel %vm640, %v729, 0
    %vm733 = vcmask 1043456
    %v735 = vsel %vm733, %v232, 0
    %737 = vmatprep.subr.bf16.mxu0 0
    %738 = vmatpush1.bf16.msra.mxu0 %v735
    %739 = vmatprep.subr.bf16.mxu0 0
    %740 = vmatpush1.bf16.msra.mxu0 0
    %741 = vmatprep.subr.bf16.mxu0 0
    %742 = vmatpush1.bf16.msra.mxu0 0
    %743 = vmatprep.subr.bf16.mxu0 0
    %744 = vmatpush1.bf16.msra.mxu0 0
    %745 = vmatprep.subr.bf16.mxu0 0
    %746 = vmatpush1.bf16.msra.mxu0 0
    %747 = vmatprep.subr.bf16.mxu0 0
    %748 = vmatpush1.bf16.msra.mxu0 0
    %749 = vmatprep.subr.bf16.mxu0 0
    %750 = vmatpush1.bf16.msra.mxu0 0
    %751 = vmatprep.subr.bf16.mxu0 0
    %752 = vmatpush1.bf16.msra.mxu0 0
    %753 = vmatprep.subr.bf16.mxu0 0
    %754 = vmatpush1.bf16.msra.mxu0 0
    %755 = vmatprep.subr.bf16.mxu0 0
    %756 = vmatpush1.bf16.msra.mxu0 0
    %757 = vmatprep.subr.bf16.mxu0 0
    %758 = vmatpush1.bf16.msra.mxu0 0
    %759 = vmatprep.subr.bf16.mxu0 0
    %760 = vmatpush1.bf16.msra.mxu0 0
    %761 = vmatprep.subr.bf16.mxu0 0
    %762 = vmatpush1.bf16.msra.mxu0 0
    %763 = vmatprep.subr.bf16.mxu0 0
    %764 = vmatpush1.bf16.msra.mxu0 0
    %765 = vmatprep.subr.bf16.mxu0 0
    %766 = vmatpush1.bf16.msra.mxu0 0
    %767 = vmatprep.subr.bf16.mxu0 0
    %768 = vmatpush1.bf16.msra.mxu0 0
    %769 = vmatprep.mubr.bf16.mxu0 0
    %770 = vmatmul.mubr.bf16.gmra.mrb[0].mxu0 %v731
    %v771 = vpop.f32.mrb[0].mxu0
    %v772 = vadd.f32 0.0, %v771
    %v773 = vpop.f32.mrb[0].mxu0
    %v774 = vpop.f32.mrb[0].mxu0
    %v775 = vpop.f32.mrb[0].mxu0
    %776 = vdwg.mxu0
    %v777 = vpack.c.bf16 %v722, %v722
    %779 = vrot.lane.b32.xlu0 %v232, 112
    %v780 = vpop.permute.xlu0 %779
    %v782 = vsel %vm640, %v777, 0
    %v785 = vsel %vm733, %v780, 0
    %787 = vmatprep.subr.bf16.mxu0 0
    %788 = vmatpush1.bf16.msra.mxu0 %v785
    %789 = vmatprep.subr.bf16.mxu0 0
    %790 = vmatpush1.bf16.msra.mxu0 0
    %791 = vmatprep.subr.bf16.mxu0 0
    %792 = vmatpush1.bf16.msra.mxu0 0
    %793 = vmatprep.subr.bf16.mxu0 0
    %794 = vmatpush1.bf16.msra.mxu0 0
    %795 = vmatprep.subr.bf16.mxu0 0
    %796 = vmatpush1.bf16.msra.mxu0 0
    %797 = vmatprep.subr.bf16.mxu0 0
    %798 = vmatpush1.bf16.msra.mxu0 0
    %799 = vmatprep.subr.bf16.mxu0 0
    %800 = vmatpush1.bf16.msra.mxu0 0
    %801 = vmatprep.subr.bf16.mxu0 0
    %802 = vmatpush1.bf16.msra.mxu0 0
    %803 = vmatprep.subr.bf16.mxu0 0
    %804 = vmatpush1.bf16.msra.mxu0 0
    %805 = vmatprep.subr.bf16.mxu0 0
    %806 = vmatpush1.bf16.msra.mxu0 0
    %807 = vmatprep.subr.bf16.mxu0 0
    %808 = vmatpush1.bf16.msra.mxu0 0
    %809 = vmatprep.subr.bf16.mxu0 0
    %810 = vmatpush1.bf16.msra.mxu0 0
    %811 = vmatprep.subr.bf16.mxu0 0
    %812 = vmatpush1.bf16.msra.mxu0 0
    %813 = vmatprep.subr.bf16.mxu0 0
    %814 = vmatpush1.bf16.msra.mxu0 0
    %815 = vmatprep.subr.bf16.mxu0 0
    %816 = vmatpush1.bf16.msra.mxu0 0
    %817 = vmatprep.subr.bf16.mxu0 0
    %818 = vmatpush1.bf16.msra.mxu0 0
    %819 = vmatprep.mubr.bf16.mxu0 0
    %820 = vmatmul.mubr.bf16.gmra.mrb[0].mxu0 %v782
    %v821 = vpop.f32.mrb[0].mxu0
    %v822 = vadd.f32 0.0, %v821
    %v823 = vpop.f32.mrb[0].mxu0
    %v824 = vpop.f32.mrb[0].mxu0
    %v825 = vpop.f32.mrb[0].mxu0
    %826 = vdwg.mxu0
    %v827 = vpack.c.bf16 %v723, %v723
    %828 = vrot.lane.b32.xlu0 %v232, 96
    %v829 = vpop.permute.xlu0 %828
    %v831 = vsel %vm640, %v827, 0
    %v834 = vsel %vm733, %v829, 0
    %836 = vmatprep.subr.bf16.mxu0 0
    %837 = vmatpush1.bf16.msra.mxu0 %v834
    %838 = vmatprep.subr.bf16.mxu0 0
    %839 = vmatpush1.bf16.msra.mxu0 0
    %840 = vmatprep.subr.bf16.mxu0 0
    %841 = vmatpush1.bf16.msra.mxu0 0
    %842 = vmatprep.subr.bf16.mxu0 0
    %843 = vmatpush1.bf16.msra.mxu0 0
    %844 = vmatprep.subr.bf16.mxu0 0
    %845 = vmatpush1.bf16.msra.mxu0 0
    %846 = vmatprep.subr.bf16.mxu0 0
    %847 = vmatpush1.bf16.msra.mxu0 0
    %848 = vmatprep.subr.bf16.mxu0 0
    %849 = vmatpush1.bf16.msra.mxu0 0
    %850 = vmatprep.subr.bf16.mxu0 0
    %851 = vmatpush1.bf16.msra.mxu0 0
    %852 = vmatprep.subr.bf16.mxu0 0
    %853 = vmatpush1.bf16.msra.mxu0 0
    %854 = vmatprep.subr.bf16.mxu0 0
    %855 = vmatpush1.bf16.msra.mxu0 0
    %856 = vmatprep.subr.bf16.mxu0 0
    %857 = vmatpush1.bf16.msra.mxu0 0
    %858 = vmatprep.subr.bf16.mxu0 0
    %859 = vmatpush1.bf16.msra.mxu0 0
    %860 = vmatprep.subr.bf16.mxu0 0
    %861 = vmatpush1.bf16.msra.mxu0 0
    %862 = vmatprep.subr.bf16.mxu0 0
    %863 = vmatpush1.bf16.msra.mxu0 0
    %864 = vmatprep.subr.bf16.mxu0 0
    %865 = vmatpush1.bf16.msra.mxu0 0
    %866 = vmatprep.subr.bf16.mxu0 0
    %867 = vmatpush1.bf16.msra.mxu0 0
    %868 = vmatprep.mubr.bf16.mxu0 0
    %869 = vmatmul.mubr.bf16.gmra.mrb[0].mxu0 %v831
    %v870 = vpop.f32.mrb[0].mxu0
    %v871 = vadd.f32 0.0, %v870
    %v872 = vpop.f32.mrb[0].mxu0
    %v873 = vpop.f32.mrb[0].mxu0
    %v874 = vpop.f32.mrb[0].mxu0
    %875 = vdwg.mxu0
    %v876 = vpack.c.bf16 %v724, %v724
    %877 = vrot.lane.b32.xlu0 %v232, 80
    %v878 = vpop.permute.xlu0 %877
    %v880 = vsel %vm640, %v876, 0
    %v883 = vsel %vm733, %v878, 0
    %885 = vmatprep.subr.bf16.mxu0 0
    %886 = vmatpush1.bf16.msra.mxu0 %v883
    %887 = vmatprep.subr.bf16.mxu0 0
    %888 = vmatpush1.bf16.msra.mxu0 0
    %889 = vmatprep.subr.bf16.mxu0 0
    %890 = vmatpush1.bf16.msra.mxu0 0
    %891 = vmatprep.subr.bf16.mxu0 0
    %892 = vmatpush1.bf16.msra.mxu0 0
    %893 = vmatprep.subr.bf16.mxu0 0
    %894 = vmatpush1.bf16.msra.mxu0 0
    %895 = vmatprep.subr.bf16.mxu0 0
    %896 = vmatpush1.bf16.msra.mxu0 0
    %897 = vmatprep.subr.bf16.mxu0 0
    %898 = vmatpush1.bf16.msra.mxu0 0
    %899 = vmatprep.subr.bf16.mxu0 0
    %900 = vmatpush1.bf16.msra.mxu0 0
    %901 = vmatprep.subr.bf16.mxu0 0
    %902 = vmatpush1.bf16.msra.mxu0 0
    %903 = vmatprep.subr.bf16.mxu0 0
    %904 = vmatpush1.bf16.msra.mxu0 0
    %905 = vmatprep.subr.bf16.mxu0 0
    %906 = vmatpush1.bf16.msra.mxu0 0
    %907 = vmatprep.subr.bf16.mxu0 0
    %908 = vmatpush1.bf16.msra.mxu0 0
    %909 = vmatprep.subr.bf16.mxu0 0
    %910 = vmatpush1.bf16.msra.mxu0 0
    %911 = vmatprep.subr.bf16.mxu0 0
    %912 = vmatpush1.bf16.msra.mxu0 0
    %913 = vmatprep.subr.bf16.mxu0 0
    %914 = vmatpush1.bf16.msra.mxu0 0
    %915 = vmatprep.subr.bf16.mxu0 0
    %916 = vmatpush1.bf16.msra.mxu0 0
    %917 = vmatprep.mubr.bf16.mxu0 0
    %918 = vmatmul.mubr.bf16.gmra.mrb[0].mxu0 %v880
    %v919 = vpop.f32.mrb[0].mxu0
    %v920 = vadd.f32 0.0, %v919
    %v921 = vpop.f32.mrb[0].mxu0
    %v922 = vpop.f32.mrb[0].mxu0
    %v923 = vpop.f32.mrb[0].mxu0
    %924 = vdwg.mxu0
    %926 = vrot.lane.b32.xlu0 %v822, 16
    %v927 = vpop.permute.xlu0 %926
    %930 = vrot.lane.b32.xlu0 %v871, 32
    %v931 = vpop.permute.xlu0 %930
    %934 = vrot.lane.b32.xlu0 %v920, 48
    %v935 = vpop.permute.xlu0 %934
    %v937 = vsel %vm236, %v772, %v927
    %vm938 = vcmask 261120
    %v939 = vsel %vm938, %v937, %v931
    %vm940 = vcmask 392192
    %v941 = vsel %vm940, %v939, %v935
    %v942 = vpack.c.bf16 %v725, %v725
    %v943 = vrot.slane %v232, 4
    %v945 = vsel %vm640, %v942, 0
    %v948 = vsel %vm733, %v943, 0
    %950 = vmatprep.subr.bf16.mxu0 0
    %951 = vmatpush1.bf16.msra.mxu0 %v948
    %952 = vmatprep.subr.bf16.mxu0 0
    %953 = vmatpush1.bf16.msra.mxu0 0
    %954 = vmatprep.subr.bf16.mxu0 0
    %955 = vmatpush1.bf16.msra.mxu0 0
    %956 = vmatprep.subr.bf16.mxu0 0
    %957 = vmatpush1.bf16.msra.mxu0 0
    %958 = vmatprep.subr.bf16.mxu0 0
    %959 = vmatpush1.bf16.msra.mxu0 0
    %960 = vmatprep.subr.bf16.mxu0 0
    %961 = vmatpush1.bf16.msra.mxu0 0
    %962 = vmatprep.subr.bf16.mxu0 0
    %963 = vmatpush1.bf16.msra.mxu0 0
    %964 = vmatprep.subr.bf16.mxu0 0
    %965 = vmatpush1.bf16.msra.mxu0 0
    %966 = vmatprep.subr.bf16.mxu0 0
    %967 = vmatpush1.bf16.msra.mxu0 0
    %968 = vmatprep.subr.bf16.mxu0 0
    %969 = vmatpush1.bf16.msra.mxu0 0
    %970 = vmatprep.subr.bf16.mxu0 0
    %971 = vmatpush1.bf16.msra.mxu0 0
    %972 = vmatprep.subr.bf16.mxu0 0
    %973 = vmatpush1.bf16.msra.mxu0 0
    %974 = vmatprep.subr.bf16.mxu0 0
    %975 = vmatpush1.bf16.msra.mxu0 0
    %976 = vmatprep.subr.bf16.mxu0 0
    %977 = vmatpush1.bf16.msra.mxu0 0
    %978 = vmatprep.subr.bf16.mxu0 0
    %979 = vmatpush1.bf16.msra.mxu0 0
    %980 = vmatprep.subr.bf16.mxu0 0
    %981 = vmatpush1.bf16.msra.mxu0 0
    %982 = vmatprep.mubr.bf16.mxu0 0
    %983 = vmatmul.mubr.bf16.gmra.mrb[0].mxu0 %v945
    %v984 = vpop.f32.mrb[0].mxu0
    %v985 = vadd.f32 0.0, %v984
    %v986 = vpop.f32.mrb[0].mxu0
    %v987 = vpop.f32.mrb[0].mxu0
    %v988 = vpop.f32.mrb[0].mxu0
    %989 = vdwg.mxu0
    %v990 = vpack.c.bf16 %v726, %v726
    %991 = vrot.lane.b32.xlu0 %v943, 112
    %v992 = vpop.permute.xlu0 %991
    %v994 = vsel %vm640, %v990, 0
    %v997 = vsel %vm733, %v992, 0
    %999 = vmatprep.subr.bf16.mxu0 0
    %1000 = vmatpush1.bf16.msra.mxu0 %v997
    %1001 = vmatprep.subr.bf16.mxu0 0
    %1002 = vmatpush1.bf16.msra.mxu0 0
    %1003 = vmatprep.subr.bf16.mxu0 0
    %1004 = vmatpush1.bf16.msra.mxu0 0
    %1005 = vmatprep.subr.bf16.mxu0 0
    %1006 = vmatpush1.bf16.msra.mxu0 0
    %1007 = vmatprep.subr.bf16.mxu0 0
    %1008 = vmatpush1.bf16.msra.mxu0 0
    %1009 = vmatprep.subr.bf16.mxu0 0
    %1010 = vmatpush1.bf16.msra.mxu0 0
    %1011 = vmatprep.subr.bf16.mxu0 0
    %1012 = vmatpush1.bf16.msra.mxu0 0
    %1013 = vmatprep.subr.bf16.mxu0 0
    %1014 = vmatpush1.bf16.msra.mxu0 0
    %1015 = vmatprep.subr.bf16.mxu0 0
    %1016 = vmatpush1.bf16.msra.mxu0 0
    %1017 = vmatprep.subr.bf16.mxu0 0
    %1018 = vmatpush1.bf16.msra.mxu0 0
    %1019 = vmatprep.subr.bf16.mxu0 0
    %1020 = vmatpush1.bf16.msra.mxu0 0
    %1021 = vmatprep.subr.bf16.mxu0 0
    %1022 = vmatpush1.bf16.msra.mxu0 0
    %1023 = vmatprep.subr.bf16.mxu0 0
    %1024 = vmatpush1.bf16.msra.mxu0 0
    %1025 = vmatprep.subr.bf16.mxu0 0
    %1026 = vmatpush1.bf16.msra.mxu0 0
    %1027 = vmatprep.subr.bf16.mxu0 0
    %1028 = vmatpush1.bf16.msra.mxu0 0
    %1029 = vmatprep.subr.bf16.mxu0 0
    %1030 = vmatpush1.bf16.msra.mxu0 0
    %1031 = vmatprep.mubr.bf16.mxu0 0
    %1032 = vmatmul.mubr.bf16.gmra.mrb[0].mxu0 %v994
    %v1033 = vpop.f32.mrb[0].mxu0
    %v1034 = vadd.f32 0.0, %v1033
    %v1035 = vpop.f32.mrb[0].mxu0
    %v1036 = vpop.f32.mrb[0].mxu0
    %v1037 = vpop.f32.mrb[0].mxu0
    %1038 = vdwg.mxu0
    %v1039 = vpack.c.bf16 %v727, %v727
    %1040 = vrot.lane.b32.xlu0 %v943, 96
    %v1041 = vpop.permute.xlu0 %1040
    %v1043 = vsel %vm640, %v1039, 0
    %v1046 = vsel %vm733, %v1041, 0
    %1048 = vmatprep.subr.bf16.mxu0 0
    %1049 = vmatpush1.bf16.msra.mxu0 %v1046
    %1050 = vmatprep.subr.bf16.mxu0 0
    %1051 = vmatpush1.bf16.msra.mxu0 0
    %1052 = vmatprep.subr.bf16.mxu0 0
    %1053 = vmatpush1.bf16.msra.mxu0 0
    %1054 = vmatprep.subr.bf16.mxu0 0
    %1055 = vmatpush1.bf16.msra.mxu0 0
    %1056 = vmatprep.subr.bf16.mxu0 0
    %1057 = vmatpush1.bf16.msra.mxu0 0
    %1058 = vmatprep.subr.bf16.mxu0 0
    %1059 = vmatpush1.bf16.msra.mxu0 0
    %1060 = vmatprep.subr.bf16.mxu0 0
    %1061 = vmatpush1.bf16.msra.mxu0 0
    %1062 = vmatprep.subr.bf16.mxu0 0
    %1063 = vmatpush1.bf16.msra.mxu0 0
    %1064 = vmatprep.subr.bf16.mxu0 0
    %1065 = vmatpush1.bf16.msra.mxu0 0
    %1066 = vmatprep.subr.bf16.mxu0 0
    %1067 = vmatpush1.bf16.msra.mxu0 0
    %1068 = vmatprep.subr.bf16.mxu0 0
    %1069 = vmatpush1.bf16.msra.mxu0 0
    %1070 = vmatprep.subr.bf16.mxu0 0
    %1071 = vmatpush1.bf16.msra.mxu0 0
    %1072 = vmatprep.subr.bf16.mxu0 0
    %1073 = vmatpush1.bf16.msra.mxu0 0
    %1074 = vmatprep.subr.bf16.mxu0 0
    %1075 = vmatpush1.bf16.msra.mxu0 0
    %1076 = vmatprep.subr.bf16.mxu0 0
    %1077 = vmatpush1.bf16.msra.mxu0 0
    %1078 = vmatprep.subr.bf16.mxu0 0
    %1079 = vmatpush1.bf16.msra.mxu0 0
    %1080 = vmatprep.mubr.bf16.mxu0 0
    %1081 = vmatmul.mubr.bf16.gmra.mrb[0].mxu0 %v1043
    %v1082 = vpop.f32.mrb[0].mxu0
    %v1083 = vadd.f32 0.0, %v1082
    %v1084 = vpop.f32.mrb[0].mxu0
    %v1085 = vpop.f32.mrb[0].mxu0
    %v1086 = vpop.f32.mrb[0].mxu0
    %1087 = vdwg.mxu0
    %v1088 = vpack.c.bf16 %v728, %v728
    %1089 = vrot.lane.b32.xlu0 %v943, 80
    %v1090 = vpop.permute.xlu0 %1089
    %v1092 = vsel %vm640, %v1088, 0
    %v1095 = vsel %vm733, %v1090, 0
    %1097 = vmatprep.subr.bf16.mxu0 0
    %1098 = vmatpush1.bf16.msra.mxu0 %v1095
    %1099 = vmatprep.subr.bf16.mxu0 0
    %1100 = vmatpush1.bf16.msra.mxu0 0
    %1101 = vmatprep.subr.bf16.mxu0 0
    %1102 = vmatpush1.bf16.msra.mxu0 0
    %1103 = vmatprep.subr.bf16.mxu0 0
    %1104 = vmatpush1.bf16.msra.mxu0 0
    %1105 = vmatprep.subr.bf16.mxu0 0
    %1106 = vmatpush1.bf16.msra.mxu0 0
    %1107 = vmatprep.subr.bf16.mxu0 0
    %1108 = vmatpush1.bf16.msra.mxu0 0
    %1109 = vmatprep.subr.bf16.mxu0 0
    %1110 = vmatpush1.bf16.msra.mxu0 0
    %1111 = vmatprep.subr.bf16.mxu0 0
    %1112 = vmatpush1.bf16.msra.mxu0 0
    %1113 = vmatprep.subr.bf16.mxu0 0
    %1114 = vmatpush1.bf16.msra.mxu0 0
    %1115 = vmatprep.subr.bf16.mxu0 0
    %1116 = vmatpush1.bf16.msra.mxu0 0
    %1117 = vmatprep.subr.bf16.mxu0 0
    %1118 = vmatpush1.bf16.msra.mxu0 0
    %1119 = vmatprep.subr.bf16.mxu0 0
    %1120 = vmatpush1.bf16.msra.mxu0 0
    %1121 = vmatprep.subr.bf16.mxu0 0
    %1122 = vmatpush1.bf16.msra.mxu0 0
    %1123 = vmatprep.subr.bf16.mxu0 0
    %1124 = vmatpush1.bf16.msra.mxu0 0
    %1125 = vmatprep.subr.bf16.mxu0 0
    %1126 = vmatpush1.bf16.msra.mxu0 0
    %1127 = vmatprep.subr.bf16.mxu0 0
    %1128 = vmatpush1.bf16.msra.mxu0 0
    %1129 = vmatprep.mubr.bf16.mxu0 0
    %1130 = vmatmul.mubr.bf16.gmra.mrb[0].mxu0 %v1092
    %v1131 = vpop.f32.mrb[0].mxu0
    %v1132 = vadd.f32 0.0, %v1131
    %v1133 = vpop.f32.mrb[0].mxu0
    %v1134 = vpop.f32.mrb[0].mxu0
    %v1135 = vpop.f32.mrb[0].mxu0
    %1136 = vdwg.mxu0
    %1138 = vrot.lane.b32.xlu0 %v1034, 16
    %v1139 = vpop.permute.xlu0 %1138
    %1142 = vrot.lane.b32.xlu0 %v1083, 32
    %v1143 = vpop.permute.xlu0 %1142
    %1146 = vrot.lane.b32.xlu0 %v1132, 48
    %v1147 = vpop.permute.xlu0 %1146
    %v1149 = vsel %vm236, %v985, %v1139
    %v1150 = vsel %vm938, %v1149, %v1143
    %v1151 = vsel %vm940, %v1150, %v1147
    %v1152 = vpack.c.bf16 %v1151, %v941
    %v1153 = vld [vmem:[%s7] sm:$0xf]
    %v1154 = vld [vmem:[%s7 + $0x4] sm:$0xf]
    %v1155 = vld [vmem:[%s7 + $0x8] sm:$0xf]
    %v1156 = vld [vmem:[%s7 + $0xc] sm:$0xf]
    %v1157 = vld [vmem:[%s7 + $0x10] sm:$0xf]
    %v1158 = vld [vmem:[%s7 + $0x14] sm:$0xf]
    %v1159 = vld [vmem:[%s7 + $0x18] sm:$0xf]
    %v1160 = vld [vmem:[%s7 + $0x1c] sm:$0xf]
    %v1161 = vld [vmem:[%s8] sm:$0x1]
    %v1163 = vlaneseq
    %v1164 = vshrl.u32 %v1163, 7
    %v1165 = vsub.s32 0, %v1164
    %v1166 = vrot.slane %v1161, %v1165
    %v1176 = vunpack.c.l.b16 %v1153
    %v1177 = vunpack.c.l.b16 %v1154
    %v1178 = vunpack.c.l.b16 %v1155
    %v1179 = vunpack.c.l.b16 %v1156
    %v1180 = vunpack.c.l.b16 %v1157
    %v1181 = vunpack.c.l.b16 %v1158
    %v1182 = vunpack.c.l.b16 %v1159
    %v1183 = vunpack.c.l.b16 %v1160
    %v1184 = vpack.c.b16 %v1177, %v1176
    %v1185 = vpack.c.b16 %v1179, %v1178
    %v1186 = vpack.c.b16 %v1181, %v1180
    %v1187 = vpack.c.b16 %v1183, %v1182
    %v1193 = vsel %vm71, %v1152, 0
    %1195 = vmatprep.subr.bf16.mxu0 0
    %1196 = vmatpush1.bf16.msra.mxu0 %v1184
    %1197 = vmatprep.subr.bf16.mxu0 0
    %1198 = vmatpush1.bf16.msra.mxu0 %v1185
    %1199 = vmatprep.subr.bf16.mxu0 0
    %1200 = vmatpush1.bf16.msra.mxu0 %v1186
    %1201 = vmatprep.subr.bf16.mxu0 0
    %1202 = vmatpush1.bf16.msra.mxu0 %v1187
    %1203 = vmatprep.subr.bf16.mxu0 0
    %1204 = vmatpush1.bf16.msra.mxu0 0
    %1205 = vmatprep.subr.bf16.mxu0 0
    %1206 = vmatpush1.bf16.msra.mxu0 0
    %1207 = vmatprep.subr.bf16.mxu0 0
    %1208 = vmatpush1.bf16.msra.mxu0 0
    %1209 = vmatprep.subr.bf16.mxu0 0
    %1210 = vmatpush1.bf16.msra.mxu0 0
    %1211 = vmatprep.subr.bf16.mxu0 0
    %1212 = vmatpush1.bf16.msra.mxu0 0
    %1213 = vmatprep.subr.bf16.mxu0 0
    %1214 = vmatpush1.bf16.msra.mxu0 0
    %1215 = vmatprep.subr.bf16.mxu0 0
    %1216 = vmatpush1.bf16.msra.mxu0 0
    %1217 = vmatprep.subr.bf16.mxu0 0
    %1218 = vmatpush1.bf16.msra.mxu0 0
    %1219 = vmatprep.subr.bf16.mxu0 0
    %1220 = vmatpush1.bf16.msra.mxu0 0
    %1221 = vmatprep.subr.bf16.mxu0 0
    %1222 = vmatpush1.bf16.msra.mxu0 0
    %1223 = vmatprep.subr.bf16.mxu0 0
    %1224 = vmatpush1.bf16.msra.mxu0 0
    %1225 = vmatprep.subr.bf16.mxu0 0
    %1226 = vmatpush1.bf16.msra.mxu0 0
    %1227 = vmatprep.mubr.bf16.mxu0 0
    %1228 = vmatmul.mubr.bf16.gmra.mrb[0].mxu0 %v1193
    %v1229 = vpop.f32.mrb[0].mxu0
    %v1230 = vadd.f32 %v1166, %v1229
    %v1231 = vpop.f32.mrb[0].mxu0
    %v1232 = vpop.f32.mrb[0].mxu0
    %v1233 = vadd.f32 %v1166, %v1232
    %v1234 = vpop.f32.mrb[0].mxu0
    %1235 = vdwg.mxu0
    %v1236 = vadd.f32 %v113, %v1230
    %v1237 = vadd.f32 %v114, %v1233
    %v1238 = vld [vmem:[%s9] sm:$0x1]
    %v1239 = vld [vmem:[%s10] sm:$0x1]
    %v1240 = vsel %vm71, %v1236, 0.0
    %1241 = vadd.xlane.f32.xlu0 %v1240
    %v1242 = vpop.xlane.xlu0 %1241
    %v1243 = vsel %vm71, %v1237, 0.0
    %1244 = vadd.xlane.f32.xlu0 %v1243
    %v1245 = vpop.xlane.xlu0 %1244
    %v1246 = vmul.f32 %v1242, %v78
    %v1247 = vmul.f32 %v1245, %v78
    %v1248 = vsub.f32 %v1236, %v1246
    %v1249 = vsub.f32 %v1237, %v1247
    %v1250 = vmul.f32 %v1248, %v1248
    %v1251 = vmul.f32 %v1249, %v1249
    %v1252 = vsel %vm71, %v1250, 0.0
    %1253 = vadd.xlane.f32.xlu0 %v1252
    %v1254 = vpop.xlane.xlu0 %1253
    %v1255 = vsel %vm71, %v1251, 0.0
    %1256 = vadd.xlane.f32.xlu0 %v1255
    %v1257 = vpop.xlane.xlu0 %1256
    %v1258 = vmul.f32 %v1254, %v78
    %v1259 = vmul.f32 %v1257, %v78
    %v1260 = vadd.f32 %v1258, 1e-12
    %v1261 = vadd.f32 %v1259, 1e-12
    %v1262 = vrsqrt.pop %v1260
    %v1263 = vrsqrt.pop %v1261
    %v1264 = vmul.f32 %v1248, %v1262
    %v1265 = vmul.f32 %v1249, %v1263
    %v1267 = vlaneseq
    %v1268 = vshrl.u32 %v1267, 7
    %v1269 = vsub.s32 0, %v1268
    %v1270 = vrot.slane %v1238, %v1269
    %v1272 = vmul.f32 %v1264, %v1270
    %v1273 = vmul.f32 %v1265, %v1270
    %v1275 = vlaneseq
    %v1276 = vshrl.u32 %v1275, 7
    %v1277 = vsub.s32 0, %v1276
    %v1278 = vrot.slane %v1239, %v1277
    %v1280 = vadd.f32 %v1272, %v1278
    %v1281 = vadd.f32 %v1273, %v1278
    %v1282 = vpack.c.bf16 %v1281, %v1280
    %v1283 = vld [vmem:[%s11] sm:$0xf]
    %v1284 = vld [vmem:[%s11 + $0x4] sm:$0xf]
    %v1285 = vld [vmem:[%s11 + $0x8] sm:$0xf]
    %v1286 = vld [vmem:[%s11 + $0xc] sm:$0xf]
    %v1287 = vld [vmem:[%s11 + $0x10] sm:$0xf]
    %v1288 = vld [vmem:[%s11 + $0x14] sm:$0xf]
    %v1289 = vld [vmem:[%s11 + $0x18] sm:$0xf]
    %v1290 = vld [vmem:[%s11 + $0x1c] sm:$0xf]
    %v1291 = vld [vmem:[%s12] sm:$0x1]
    %v1293 = vlaneseq
    %v1294 = vshrl.u32 %v1293, 7
    %v1295 = vsub.s32 0, %v1294
    %v1296 = vrot.slane %v1291, %v1295
    %v1306 = vunpack.c.l.b16 %v1283
    %v1307 = vunpack.c.l.b16 %v1284
    %v1308 = vunpack.c.l.b16 %v1285
    %v1309 = vunpack.c.l.b16 %v1286
    %v1310 = vunpack.c.l.b16 %v1287
    %v1311 = vunpack.c.l.b16 %v1288
    %v1312 = vunpack.c.l.b16 %v1289
    %v1313 = vunpack.c.l.b16 %v1290
    %v1314 = vpack.c.b16 %v1307, %v1306
    %v1315 = vpack.c.b16 %v1309, %v1308
    %v1316 = vpack.c.b16 %v1311, %v1310
    %v1317 = vpack.c.b16 %v1313, %v1312
    %v1323 = vsel %vm71, %v1282, 0
    %1325 = vmatprep.subr.bf16.mxu0 0
    %1326 = vmatpush1.bf16.msra.mxu0 %v1314
    %1327 = vmatprep.subr.bf16.mxu0 0
    %1328 = vmatpush1.bf16.msra.mxu0 %v1315
    %1329 = vmatprep.subr.bf16.mxu0 0
    %1330 = vmatpush1.bf16.msra.mxu0 %v1316
    %1331 = vmatprep.subr.bf16.mxu0 0
    %1332 = vmatpush1.bf16.msra.mxu0 %v1317
    %1333 = vmatprep.subr.bf16.mxu0 0
    %1334 = vmatpush1.bf16.msra.mxu0 0
    %1335 = vmatprep.subr.bf16.mxu0 0
    %1336 = vmatpush1.bf16.msra.mxu0 0
    %1337 = vmatprep.subr.bf16.mxu0 0
    %1338 = vmatpush1.bf16.msra.mxu0 0
    %1339 = vmatprep.subr.bf16.mxu0 0
    %1340 = vmatpush1.bf16.msra.mxu0 0
    %1341 = vmatprep.subr.bf16.mxu0 0
    %1342 = vmatpush1.bf16.msra.mxu0 0
    %1343 = vmatprep.subr.bf16.mxu0 0
    %1344 = vmatpush1.bf16.msra.mxu0 0
    %1345 = vmatprep.subr.bf16.mxu0 0
    %1346 = vmatpush1.bf16.msra.mxu0 0
    %1347 = vmatprep.subr.bf16.mxu0 0
    %1348 = vmatpush1.bf16.msra.mxu0 0
    %1349 = vmatprep.subr.bf16.mxu0 0
    %1350 = vmatpush1.bf16.msra.mxu0 0
    %1351 = vmatprep.subr.bf16.mxu0 0
    %1352 = vmatpush1.bf16.msra.mxu0 0
    %1353 = vmatprep.subr.bf16.mxu0 0
    %1354 = vmatpush1.bf16.msra.mxu0 0
    %1355 = vmatprep.subr.bf16.mxu0 0
    %1356 = vmatpush1.bf16.msra.mxu0 0
    %1357 = vmatprep.mubr.bf16.mxu0 0
    %1358 = vmatmul.mubr.bf16.gmra.mrb[0].mxu0 %v1323
    %v1359 = vpop.f32.mrb[0].mxu0
    %v1360 = vadd.f32 %v1296, %v1359
    %v1361 = vpop.f32.mrb[0].mxu0
    %v1362 = vpop.f32.mrb[0].mxu0
    %v1363 = vadd.f32 %v1296, %v1362
    %v1364 = vpop.f32.mrb[0].mxu0
    %1365 = vdwg.mxu0
    %v1366 = vmul.f32 %v1360, 0.70710677
    %v1367 = vmul.f32 %v1363, 0.70710677
    %v1368 = vand.u32 2147483647, %v1366
    %v1369 = vand.u32 2147483647, %v1367
    %v1370 = vmul.f32 %v1368, 0.3275911
    %v1371 = vmul.f32 %v1369, 0.3275911
    %v1372 = vadd.f32 %v1370, 1.0
    %v1373 = vadd.f32 %v1371, 1.0
    %v1374 = vrcp.pop %v1372
    %v1375 = vmul.f32 1.0, %v1374
    %v1376 = vrcp.pop %v1373
    %v1377 = vmul.f32 1.0, %v1376
    %v1378 = vmul.f32 %v1375, 1.0614054
    %v1379 = vmul.f32 %v1377, 1.0614054
    %v1380 = vadd.f32 %v1378, -1.4531521
    %v1381 = vadd.f32 %v1379, -1.4531521
    %v1382 = vmul.f32 %v1375, %v1380
    %v1383 = vmul.f32 %v1377, %v1381
    %v1384 = vadd.f32 %v1382, 1.4214138
    %v1385 = vadd.f32 %v1383, 1.4214138
    %v1386 = vmul.f32 %v1375, %v1384
    %v1387 = vmul.f32 %v1377, %v1385
    %v1388 = vadd.f32 %v1386, -0.28449672
    %v1389 = vadd.f32 %v1387, -0.28449672
    %v1390 = vmul.f32 %v1375, %v1388
    %v1391 = vmul.f32 %v1377, %v1389
    %v1392 = vadd.f32 %v1390, 0.2548296
    %v1393 = vadd.f32 %v1391, 0.2548296
    %v1394 = vmul.f32 %v1375, %v1392
    %v1395 = vmul.f32 %v1377, %v1393
    %v1396 = vsub.f32 0.0, %v1368
    %v1397 = vsub.f32 0.0, %v1369
    %v1398 = vmul.f32 %v1396, %v1368
    %v1399 = vmul.f32 %v1397, %v1369
    %v1400 = vmul.f32 %v1398, 1.442695
    %v1401 = vpow.pop %v1400
    %v1402 = vmul.f32 %v1399, 1.442695
    %v1403 = vpow.pop %v1402
    %v1404 = vmul.f32 %v1394, %v1401
    %v1405 = vmul.f32 %v1395, %v1403
    %v1406 = vsub.f32 1.0, %v1404
    %v1407 = vsub.f32 1.0, %v1405
    %vm1408 = vcmp.ge.f32.partialorder %v1366, 0.0
    %vm1409 = vcmp.ge.f32.partialorder %v1367, 0.0
    %v1410 = vsub.f32 0.0, %v1406
    %v1411 = vsub.f32 0.0, %v1407
    %v1412 = vsel %vm1408, %v1406, %v1410
    %v1413 = vsel %vm1409, %v1407, %v1411
    %v1414 = vmul.f32 %v1360, 0.5
    %v1415 = vmul.f32 %v1363, 0.5
    %v1416 = vadd.f32 %v1412, 1.0
    %v1417 = vadd.f32 %v1413, 1.0
    %v1418 = vmul.f32 %v1414, %v1416
    %v1419 = vmul.f32 %v1415, %v1417
    %v1420 = vpack.c.bf16 %v1419, %v1418
    %v1421 = vld [vmem:[%s13] sm:$0xf]
    %v1422 = vld [vmem:[%s13 + $0x4] sm:$0xf]
    %v1423 = vld [vmem:[%s13 + $0x8] sm:$0xf]
    %v1424 = vld [vmem:[%s13 + $0xc] sm:$0xf]
    %v1425 = vld [vmem:[%s13 + $0x10] sm:$0xf]
    %v1426 = vld [vmem:[%s13 + $0x14] sm:$0xf]
    %v1427 = vld [vmem:[%s13 + $0x18] sm:$0xf]
    %v1428 = vld [vmem:[%s13 + $0x1c] sm:$0xf]
    %v1429 = vld [vmem:[%s13 + $0x20] sm:$0xf]
    %v1430 = vld [vmem:[%s13 + $0x24] sm:$0xf]
    %v1431 = vld [vmem:[%s13 + $0x28] sm:$0xf]
    %v1432 = vld [vmem:[%s13 + $0x2c] sm:$0xf]
    %v1433 = vld [vmem:[%s13 + $0x30] sm:$0xf]
    %v1434 = vld [vmem:[%s13 + $0x34] sm:$0xf]
    %v1435 = vld [vmem:[%s13 + $0x38] sm:$0xf]
    %v1436 = vld [vmem:[%s13 + $0x3c] sm:$0xf]
    %v1437 = vld [vmem:[%s14] sm:$0x1]
    %v1439 = vlaneseq
    %v1440 = vshrl.u32 %v1439, 7
    %v1441 = vsub.s32 0, %v1440
    %v1442 = vrot.slane %v1437, %v1441
    %v1460 = vunpack.c.l.b16 %v1421
    %v1461 = vunpack.c.l.b16 %v1422
    %v1462 = vunpack.c.l.b16 %v1423
    %v1463 = vunpack.c.l.b16 %v1424
    %v1464 = vunpack.c.l.b16 %v1425
    %v1465 = vunpack.c.l.b16 %v1426
    %v1466 = vunpack.c.l.b16 %v1427
    %v1467 = vunpack.c.l.b16 %v1428
    %v1468 = vunpack.c.l.b16 %v1429
    %v1469 = vunpack.c.l.b16 %v1430
    %v1470 = vunpack.c.l.b16 %v1431
    %v1471 = vunpack.c.l.b16 %v1432
    %v1472 = vunpack.c.l.b16 %v1433
    %v1473 = vunpack.c.l.b16 %v1434
    %v1474 = vunpack.c.l.b16 %v1435
    %v1475 = vunpack.c.l.b16 %v1436
    %v1476 = vpack.c.b16 %v1461, %v1460
    %v1477 = vpack.c.b16 %v1463, %v1462
    %v1478 = vpack.c.b16 %v1465, %v1464
    %v1479 = vpack.c.b16 %v1467, %v1466
    %v1480 = vpack.c.b16 %v1469, %v1468
    %v1481 = vpack.c.b16 %v1471, %v1470
    %v1482 = vpack.c.b16 %v1473, %v1472
    %v1483 = vpack.c.b16 %v1475, %v1474
    %1492 = vmatprep.subr.bf16.mxu0 0
    %1493 = vmatpush1.bf16.msra.mxu0 %v1476
    %1494 = vmatprep.subr.bf16.mxu0 0
    %1495 = vmatpush1.bf16.msra.mxu0 %v1477
    %1496 = vmatprep.subr.bf16.mxu0 0
    %1497 = vmatpush1.bf16.msra.mxu0 %v1478
    %1498 = vmatprep.subr.bf16.mxu0 0
    %1499 = vmatpush1.bf16.msra.mxu0 %v1479
    %1500 = vmatprep.subr.bf16.mxu0 0
    %1501 = vmatpush1.bf16.msra.mxu0 %v1480
    %1502 = vmatprep.subr.bf16.mxu0 0
    %1503 = vmatpush1.bf16.msra.mxu0 %v1481
    %1504 = vmatprep.subr.bf16.mxu0 0
    %1505 = vmatpush1.bf16.msra.mxu0 %v1482
    %1506 = vmatprep.subr.bf16.mxu0 0
    %1507 = vmatpush1.bf16.msra.mxu0 %v1483
    %1508 = vmatprep.subr.bf16.mxu0 0
    %1509 = vmatpush1.bf16.msra.mxu0 0
    %1510 = vmatprep.subr.bf16.mxu0 0
    %1511 = vmatpush1.bf16.msra.mxu0 0
    %1512 = vmatprep.subr.bf16.mxu0 0
    %1513 = vmatpush1.bf16.msra.mxu0 0
    %1514 = vmatprep.subr.bf16.mxu0 0
    %1515 = vmatpush1.bf16.msra.mxu0 0
    %1516 = vmatprep.subr.bf16.mxu0 0
    %1517 = vmatpush1.bf16.msra.mxu0 0
    %1518 = vmatprep.subr.bf16.mxu0 0
    %1519 = vmatpush1.bf16.msra.mxu0 0
    %1520 = vmatprep.subr.bf16.mxu0 0
    %1521 = vmatpush1.bf16.msra.mxu0 0
    %1522 = vmatprep.subr.bf16.mxu0 0
    %1523 = vmatpush1.bf16.msra.mxu0 0
    %1524 = vmatprep.mubr.bf16.mxu0 0
    %1525 = vmatmul.mubr.bf16.gmra.mrb[0].mxu0 %v1420
    %v1526 = vpop.f32.mrb[0].mxu0
    %v1527 = vadd.f32 %v1442, %v1526
    %v1528 = vpop.f32.mrb[0].mxu0
    %v1529 = vpop.f32.mrb[0].mxu0
    %v1530 = vadd.f32 %v1442, %v1529
    %v1531 = vpop.f32.mrb[0].mxu0
    %1532 = vdwg.mxu0
    %v1533 = vadd.f32 %v1280, %v1527
    %v1534 = vadd.f32 %v1281, %v1530
    %v1535 = vld [vmem:[%s15] sm:$0x1]
    %v1536 = vld [vmem:[%s16] sm:$0x1]
    %v1537 = vsel %vm71, %v1533, 0.0
    %1538 = vadd.xlane.f32.xlu0 %v1537
    %v1539 = vpop.xlane.xlu0 %1538
    %v1540 = vsel %vm71, %v1534, 0.0
    %1541 = vadd.xlane.f32.xlu0 %v1540
    %v1542 = vpop.xlane.xlu0 %1541
    %v1543 = vmul.f32 %v1539, %v78
    %v1544 = vmul.f32 %v1542, %v78
    %v1545 = vsub.f32 %v1533, %v1543
    %v1546 = vsub.f32 %v1534, %v1544
    %v1547 = vmul.f32 %v1545, %v1545
    %v1548 = vmul.f32 %v1546, %v1546
    %v1549 = vsel %vm71, %v1547, 0.0
    %1550 = vadd.xlane.f32.xlu0 %v1549
    %v1551 = vpop.xlane.xlu0 %1550
    %v1552 = vsel %vm71, %v1548, 0.0
    %1553 = vadd.xlane.f32.xlu0 %v1552
    %v1554 = vpop.xlane.xlu0 %1553
    %v1555 = vmul.f32 %v1551, %v78
    %v1556 = vmul.f32 %v1554, %v78
    %v1557 = vadd.f32 %v1555, 1e-12
    %v1558 = vadd.f32 %v1556, 1e-12
    %v1559 = vrsqrt.pop %v1557
    %v1560 = vrsqrt.pop %v1558
    %v1561 = vmul.f32 %v1545, %v1559
    %v1562 = vmul.f32 %v1546, %v1560
    %v1564 = vlaneseq
    %v1565 = vshrl.u32 %v1564, 7
    %v1566 = vsub.s32 0, %v1565
    %v1567 = vrot.slane %v1535, %v1566
    %v1569 = vmul.f32 %v1561, %v1567
    %v1570 = vmul.f32 %v1562, %v1567
    %v1572 = vlaneseq
    %v1573 = vshrl.u32 %v1572, 7
    %v1574 = vsub.s32 0, %v1573
    %v1575 = vrot.slane %v1536, %v1574
    %v1577 = vadd.f32 %v1569, %v1575
    %v1578 = vadd.f32 %v1570, %v1575
    %v1579 = vpack.c.bf16 %v1578, %v1577
    %s1580 = scalar_lea.vmem %s5, 64
    %v1581 = vld [vmem:[%s1580] sm:$0xff]
    %v1582 = vld [vmem:[%s1580 + $0x8] sm:$0xff]
    %v1583 = vld [vmem:[%s1580 + $0x10] sm:$0xff]
    %v1584 = vld [vmem:[%s1580 + $0x18] sm:$0xff]
    %v1585 = vld [vmem:[%s1580 + $0x20] sm:$0xff]
    %v1586 = vld [vmem:[%s1580 + $0x28] sm:$0xff]
    %v1587 = vld [vmem:[%s1580 + $0x30] sm:$0xff]
    %v1588 = vld [vmem:[%s1580 + $0x38] sm:$0xff]
    %s1589 = scalar_lea.vmem %s6, 2
    %v1590 = vld [vmem:[%s1589] sm:$0x3]
    %v1592 = vlaneseq
    %v1593 = vshrl.u32 %v1592, 7
    %v1594 = vsub.s32 0, %v1593
    %v1595 = vrot.slane %v1590, %v1594
    %v1596 = vlaneseq
    %v1597 = vshrl.u32 %v1596, 7
    %v1598 = vsub.s32 1, %v1597
    %v1599 = vrot.slane %v1590, %v1598
    %v1610 = vunpack.c.l.b16 %v1581
    %v1611 = vunpack.c.h.b16 %v1581
    %v1612 = vunpack.c.l.b16 %v1582
    %v1613 = vunpack.c.h.b16 %v1582
    %v1614 = vunpack.c.l.b16 %v1583
    %v1615 = vunpack.c.h.b16 %v1583
    %v1616 = vunpack.c.l.b16 %v1584
    %v1617 = vunpack.c.h.b16 %v1584
    %v1618 = vunpack.c.l.b16 %v1585
    %v1619 = vunpack.c.h.b16 %v1585
    %v1620 = vunpack.c.l.b16 %v1586
    %v1621 = vunpack.c.h.b16 %v1586
    %v1622 = vunpack.c.l.b16 %v1587
    %v1623 = vunpack.c.h.b16 %v1587
    %v1624 = vunpack.c.l.b16 %v1588
    %v1625 = vunpack.c.h.b16 %v1588
    %v1626 = vpack.c.b16 %v1612, %v1610
    %v1627 = vpack.c.b16 %v1613, %v1611
    %v1628 = vpack.c.b16 %v1616, %v1614
    %v1629 = vpack.c.b16 %v1617, %v1615
    %v1630 = vpack.c.b16 %v1620, %v1618
    %v1631 = vpack.c.b16 %v1621, %v1619
    %v1632 = vpack.c.b16 %v1624, %v1622
    %v1633 = vpack.c.b16 %v1625, %v1623
    %v1643 = vsel %vm71, %v1579, 0
    %1645 = vmatprep.subr.bf16.mxu0 %v1627
    %1646 = vmatpush1.bf16.msra.mxu0 %v1626
    %1647 = vmatprep.subr.bf16.mxu0 %v1629
    %1648 = vmatpush1.bf16.msra.mxu0 %v1628
    %1649 = vmatprep.subr.bf16.mxu0 %v1631
    %1650 = vmatpush1.bf16.msra.mxu0 %v1630
    %1651 = vmatprep.subr.bf16.mxu0 %v1633
    %1652 = vmatpush1.bf16.msra.mxu0 %v1632
    %1653 = vmatprep.subr.bf16.mxu0 0
    %1654 = vmatpush1.bf16.msra.mxu0 0
    %1655 = vmatprep.subr.bf16.mxu0 0
    %1656 = vmatpush1.bf16.msra.mxu0 0
    %1657 = vmatprep.subr.bf16.mxu0 0
    %1658 = vmatpush1.bf16.msra.mxu0 0
    %1659 = vmatprep.subr.bf16.mxu0 0
    %1660 = vmatpush1.bf16.msra.mxu0 0
    %1661 = vmatprep.subr.bf16.mxu0 0
    %1662 = vmatpush1.bf16.msra.mxu0 0
    %1663 = vmatprep.subr.bf16.mxu0 0
    %1664 = vmatpush1.bf16.msra.mxu0 0
    %1665 = vmatprep.subr.bf16.mxu0 0
    %1666 = vmatpush1.bf16.msra.mxu0 0
    %1667 = vmatprep.subr.bf16.mxu0 0
    %1668 = vmatpush1.bf16.msra.mxu0 0
    %1669 = vmatprep.subr.bf16.mxu0 0
    %1670 = vmatpush1.bf16.msra.mxu0 0
    %1671 = vmatprep.subr.bf16.mxu0 0
    %1672 = vmatpush1.bf16.msra.mxu0 0
    %1673 = vmatprep.subr.bf16.mxu0 0
    %1674 = vmatpush1.bf16.msra.mxu0 0
    %1675 = vmatprep.subr.bf16.mxu0 0
    %1676 = vmatpush1.bf16.msra.mxu0 0
    %1677 = vmatprep.mubr.bf16.mxu0 0
    %1678 = vmatmul.mubr.bf16.gmra.mrb[0].mxu0 %v1643
    %v1679 = vpop.f32.mrb[0].mxu0
    %v1680 = vadd.f32 %v1595, %v1679
    %v1681 = vpop.f32.mrb[0].mxu0
    %v1682 = vadd.f32 %v1599, %v1681
    %v1683 = vpop.f32.mrb[0].mxu0
    %v1684 = vadd.f32 %v1595, %v1683
    %v1685 = vpop.f32.mrb[0].mxu0
    %v1686 = vadd.f32 %v1599, %v1685
    %1687 = vdwg.mxu0
    %v1688 = vpack.c.bf16 %v1684, %v1680
    %v1689 = vpack.c.bf16 %v1686, %v1682
    %1691 = vrot.lane.b32.xlu0 %v1688, 64
    %v1692 = vpop.permute.xlu0 %1691
    %v1694 = vsel %vm236, %v1688, 0
    %v1697 = vsel %vm236, %v1692, 0
    %1699 = vmatprep.subr.bf16.mxu0 0
    %1700 = vmatpush1.bf16.xpose.msra.mxu0 %v1697
    %1701 = vmatprep.subr.bf16.mxu0 0
    %1702 = vmatpush1.bf16.xpose.msra.mxu0 0
    %1703 = vmatprep.subr.bf16.mxu0 0
    %1704 = vmatpush1.bf16.xpose.msra.mxu0 0
    %1705 = vmatprep.subr.bf16.mxu0 0
    %1706 = vmatpush1.bf16.xpose.msra.mxu0 0
    %1707 = vmatprep.subr.bf16.mxu0 0
    %1708 = vmatpush1.bf16.xpose.msra.mxu0 0
    %1709 = vmatprep.subr.bf16.mxu0 0
    %1710 = vmatpush1.bf16.xpose.msra.mxu0 0
    %1711 = vmatprep.subr.bf16.mxu0 0
    %1712 = vmatpush1.bf16.xpose.msra.mxu0 0
    %1713 = vmatprep.subr.bf16.mxu0 0
    %1714 = vmatpush1.bf16.xpose.msra.mxu0 0
    %1715 = vmatprep.subr.bf16.mxu0 0
    %1716 = vmatpush1.bf16.xpose.msra.mxu0 0
    %1717 = vmatprep.subr.bf16.mxu0 0
    %1718 = vmatpush1.bf16.xpose.msra.mxu0 0
    %1719 = vmatprep.subr.bf16.mxu0 0
    %1720 = vmatpush1.bf16.xpose.msra.mxu0 0
    %1721 = vmatprep.subr.bf16.mxu0 0
    %1722 = vmatpush1.bf16.xpose.msra.mxu0 0
    %1723 = vmatprep.subr.bf16.mxu0 0
    %1724 = vmatpush1.bf16.xpose.msra.mxu0 0
    %1725 = vmatprep.subr.bf16.mxu0 0
    %1726 = vmatpush1.bf16.xpose.msra.mxu0 0
    %1727 = vmatprep.subr.bf16.mxu0 0
    %1728 = vmatpush1.bf16.xpose.msra.mxu0 0
    %1729 = vmatprep.subr.bf16.mxu0 0
    %1730 = vmatpush1.bf16.xpose.msra.mxu0 0
    %1731 = vmatprep.mubr.bf16.mxu0 0
    %1732 = vmatmul.mubr.bf16.gmra.mrb[0].mxu0 %v1694
    %v1733 = vpop.f32.mrb[0].mxu0
    %v1734 = vadd.f32 0.0, %v1733
    %v1735 = vpop.f32.mrb[0].mxu0
    %v1736 = vpop.f32.mrb[0].mxu0
    %v1737 = vpop.f32.mrb[0].mxu0
    %1738 = vdwg.mxu0
    %1739 = vrot.lane.b32.xlu0 %v1688, 112
    %v1740 = vpop.permute.xlu0 %1739
    %1741 = vrot.lane.b32.xlu0 %v1688, 48
    %v1742 = vpop.permute.xlu0 %1741
    %v1744 = vsel %vm236, %v1740, 0
    %v1747 = vsel %vm236, %v1742, 0
    %1749 = vmatprep.subr.bf16.mxu0 0
    %1750 = vmatpush1.bf16.xpose.msra.mxu0 %v1747
    %1751 = vmatprep.subr.bf16.mxu0 0
    %1752 = vmatpush1.bf16.xpose.msra.mxu0 0
    %1753 = vmatprep.subr.bf16.mxu0 0
    %1754 = vmatpush1.bf16.xpose.msra.mxu0 0
    %1755 = vmatprep.subr.bf16.mxu0 0
    %1756 = vmatpush1.bf16.xpose.msra.mxu0 0
    %1757 = vmatprep.subr.bf16.mxu0 0
    %1758 = vmatpush1.bf16.xpose.msra.mxu0 0
    %1759 = vmatprep.subr.bf16.mxu0 0
    %1760 = vmatpush1.bf16.xpose.msra.mxu0 0
    %1761 = vmatprep.subr.bf16.mxu0 0
    %1762 = vmatpush1.bf16.xpose.msra.mxu0 0
    %1763 = vmatprep.subr.bf16.mxu0 0
    %1764 = vmatpush1.bf16.xpose.msra.mxu0 0
    %1765 = vmatprep.subr.bf16.mxu0 0
    %1766 = vmatpush1.bf16.xpose.msra.mxu0 0
    %1767 = vmatprep.subr.bf16.mxu0 0
    %1768 = vmatpush1.bf16.xpose.msra.mxu0 0
    %1769 = vmatprep.subr.bf16.mxu0 0
    %1770 = vmatpush1.bf16.xpose.msra.mxu0 0
    %1771 = vmatprep.subr.bf16.mxu0 0
    %1772 = vmatpush1.bf16.xpose.msra.mxu0 0
    %1773 = vmatprep.subr.bf16.mxu0 0
    %1774 = vmatpush1.bf16.xpose.msra.mxu0 0
    %1775 = vmatprep.subr.bf16.mxu0 0
    %1776 = vmatpush1.bf16.xpose.msra.mxu0 0
    %1777 = vmatprep.subr.bf16.mxu0 0
    %1778 = vmatpush1.bf16.xpose.msra.mxu0 0
    %1779 = vmatprep.subr.bf16.mxu0 0
    %1780 = vmatpush1.bf16.xpose.msra.mxu0 0
    %1781 = vmatprep.mubr.bf16.mxu0 0
    %1782 = vmatmul.mubr.bf16.gmra.mrb[0].mxu0 %v1744
    %v1783 = vpop.f32.mrb[0].mxu0
    %v1784 = vadd.f32 0.0, %v1783
    %v1785 = vpop.f32.mrb[0].mxu0
    %v1786 = vpop.f32.mrb[0].mxu0
    %v1787 = vpop.f32.mrb[0].mxu0
    %1788 = vdwg.mxu0
    %1789 = vrot.lane.b32.xlu0 %v1688, 96
    %v1790 = vpop.permute.xlu0 %1789
    %1791 = vrot.lane.b32.xlu0 %v1688, 32
    %v1792 = vpop.permute.xlu0 %1791
    %v1794 = vsel %vm236, %v1790, 0
    %v1797 = vsel %vm236, %v1792, 0
    %1799 = vmatprep.subr.bf16.mxu0 0
    %1800 = vmatpush1.bf16.xpose.msra.mxu0 %v1797
    %1801 = vmatprep.subr.bf16.mxu0 0
    %1802 = vmatpush1.bf16.xpose.msra.mxu0 0
    %1803 = vmatprep.subr.bf16.mxu0 0
    %1804 = vmatpush1.bf16.xpose.msra.mxu0 0
    %1805 = vmatprep.subr.bf16.mxu0 0
    %1806 = vmatpush1.bf16.xpose.msra.mxu0 0
    %1807 = vmatprep.subr.bf16.mxu0 0
    %1808 = vmatpush1.bf16.xpose.msra.mxu0 0
    %1809 = vmatprep.subr.bf16.mxu0 0
    %1810 = vmatpush1.bf16.xpose.msra.mxu0 0
    %1811 = vmatprep.subr.bf16.mxu0 0
    %1812 = vmatpush1.bf16.xpose.msra.mxu0 0
    %1813 = vmatprep.subr.bf16.mxu0 0
    %1814 = vmatpush1.bf16.xpose.msra.mxu0 0
    %1815 = vmatprep.subr.bf16.mxu0 0
    %1816 = vmatpush1.bf16.xpose.msra.mxu0 0
    %1817 = vmatprep.subr.bf16.mxu0 0
    %1818 = vmatpush1.bf16.xpose.msra.mxu0 0
    %1819 = vmatprep.subr.bf16.mxu0 0
    %1820 = vmatpush1.bf16.xpose.msra.mxu0 0
    %1821 = vmatprep.subr.bf16.mxu0 0
    %1822 = vmatpush1.bf16.xpose.msra.mxu0 0
    %1823 = vmatprep.subr.bf16.mxu0 0
    %1824 = vmatpush1.bf16.xpose.msra.mxu0 0
    %1825 = vmatprep.subr.bf16.mxu0 0
    %1826 = vmatpush1.bf16.xpose.msra.mxu0 0
    %1827 = vmatprep.subr.bf16.mxu0 0
    %1828 = vmatpush1.bf16.xpose.msra.mxu0 0
    %1829 = vmatprep.subr.bf16.mxu0 0
    %1830 = vmatpush1.bf16.xpose.msra.mxu0 0
    %1831 = vmatprep.mubr.bf16.mxu0 0
    %1832 = vmatmul.mubr.bf16.gmra.mrb[0].mxu0 %v1794
    %v1833 = vpop.f32.mrb[0].mxu0
    %v1834 = vadd.f32 0.0, %v1833
    %v1835 = vpop.f32.mrb[0].mxu0
    %v1836 = vpop.f32.mrb[0].mxu0
    %v1837 = vpop.f32.mrb[0].mxu0
    %1838 = vdwg.mxu0
    %1839 = vrot.lane.b32.xlu0 %v1688, 80
    %v1840 = vpop.permute.xlu0 %1839
    %1841 = vrot.lane.b32.xlu0 %v1688, 16
    %v1842 = vpop.permute.xlu0 %1841
    %v1844 = vsel %vm236, %v1840, 0
    %v1847 = vsel %vm236, %v1842, 0
    %1849 = vmatprep.subr.bf16.mxu0 0
    %1850 = vmatpush1.bf16.xpose.msra.mxu0 %v1847
    %1851 = vmatprep.subr.bf16.mxu0 0
    %1852 = vmatpush1.bf16.xpose.msra.mxu0 0
    %1853 = vmatprep.subr.bf16.mxu0 0
    %1854 = vmatpush1.bf16.xpose.msra.mxu0 0
    %1855 = vmatprep.subr.bf16.mxu0 0
    %1856 = vmatpush1.bf16.xpose.msra.mxu0 0
    %1857 = vmatprep.subr.bf16.mxu0 0
    %1858 = vmatpush1.bf16.xpose.msra.mxu0 0
    %1859 = vmatprep.subr.bf16.mxu0 0
    %1860 = vmatpush1.bf16.xpose.msra.mxu0 0
    %1861 = vmatprep.subr.bf16.mxu0 0
    %1862 = vmatpush1.bf16.xpose.msra.mxu0 0
    %1863 = vmatprep.subr.bf16.mxu0 0
    %1864 = vmatpush1.bf16.xpose.msra.mxu0 0
    %1865 = vmatprep.subr.bf16.mxu0 0
    %1866 = vmatpush1.bf16.xpose.msra.mxu0 0
    %1867 = vmatprep.subr.bf16.mxu0 0
    %1868 = vmatpush1.bf16.xpose.msra.mxu0 0
    %1869 = vmatprep.subr.bf16.mxu0 0
    %1870 = vmatpush1.bf16.xpose.msra.mxu0 0
    %1871 = vmatprep.subr.bf16.mxu0 0
    %1872 = vmatpush1.bf16.xpose.msra.mxu0 0
    %1873 = vmatprep.subr.bf16.mxu0 0
    %1874 = vmatpush1.bf16.xpose.msra.mxu0 0
    %1875 = vmatprep.subr.bf16.mxu0 0
    %1876 = vmatpush1.bf16.xpose.msra.mxu0 0
    %1877 = vmatprep.subr.bf16.mxu0 0
    %1878 = vmatpush1.bf16.xpose.msra.mxu0 0
    %1879 = vmatprep.subr.bf16.mxu0 0
    %1880 = vmatpush1.bf16.xpose.msra.mxu0 0
    %1881 = vmatprep.mubr.bf16.mxu0 0
    %1882 = vmatmul.mubr.bf16.gmra.mrb[0].mxu0 %v1844
    %v1883 = vpop.f32.mrb[0].mxu0
    %v1884 = vadd.f32 0.0, %v1883
    %v1885 = vpop.f32.mrb[0].mxu0
    %v1886 = vpop.f32.mrb[0].mxu0
    %v1887 = vpop.f32.mrb[0].mxu0
    %1888 = vdwg.mxu0
    %v1889 = vrot.slane %v1688, 4
    %1890 = vrot.lane.b32.xlu0 %v1889, 64
    %v1891 = vpop.permute.xlu0 %1890
    %v1893 = vsel %vm236, %v1889, 0
    %v1896 = vsel %vm236, %v1891, 0
    %1898 = vmatprep.subr.bf16.mxu0 0
    %1899 = vmatpush1.bf16.xpose.msra.mxu0 %v1896
    %1900 = vmatprep.subr.bf16.mxu0 0
    %1901 = vmatpush1.bf16.xpose.msra.mxu0 0
    %1902 = vmatprep.subr.bf16.mxu0 0
    %1903 = vmatpush1.bf16.xpose.msra.mxu0 0
    %1904 = vmatprep.subr.bf16.mxu0 0
    %1905 = vmatpush1.bf16.xpose.msra.mxu0 0
    %1906 = vmatprep.subr.bf16.mxu0 0
    %1907 = vmatpush1.bf16.xpose.msra.mxu0 0
    %1908 = vmatprep.subr.bf16.mxu0 0
    %1909 = vmatpush1.bf16.xpose.msra.mxu0 0
    %1910 = vmatprep.subr.bf16.mxu0 0
    %1911 = vmatpush1.bf16.xpose.msra.mxu0 0
    %1912 = vmatprep.subr.bf16.mxu0 0
    %1913 = vmatpush1.bf16.xpose.msra.mxu0 0
    %1914 = vmatprep.subr.bf16.mxu0 0
    %1915 = vmatpush1.bf16.xpose.msra.mxu0 0
    %1916 = vmatprep.subr.bf16.mxu0 0
    %1917 = vmatpush1.bf16.xpose.msra.mxu0 0
    %1918 = vmatprep.subr.bf16.mxu0 0
    %1919 = vmatpush1.bf16.xpose.msra.mxu0 0
    %1920 = vmatprep.subr.bf16.mxu0 0
    %1921 = vmatpush1.bf16.xpose.msra.mxu0 0
    %1922 = vmatprep.subr.bf16.mxu0 0
    %1923 = vmatpush1.bf16.xpose.msra.mxu0 0
    %1924 = vmatprep.subr.bf16.mxu0 0
    %1925 = vmatpush1.bf16.xpose.msra.mxu0 0
    %1926 = vmatprep.subr.bf16.mxu0 0
    %1927 = vmatpush1.bf16.xpose.msra.mxu0 0
    %1928 = vmatprep.subr.bf16.mxu0 0
    %1929 = vmatpush1.bf16.xpose.msra.mxu0 0
    %1930 = vmatprep.mubr.bf16.mxu0 0
    %1931 = vmatmul.mubr.bf16.gmra.mrb[0].mxu0 %v1893
    %v1932 = vpop.f32.mrb[0].mxu0
    %v1933 = vadd.f32 0.0, %v1932
    %v1934 = vpop.f32.mrb[0].mxu0
    %v1935 = vpop.f32.mrb[0].mxu0
    %v1936 = vpop.f32.mrb[0].mxu0
    %1937 = vdwg.mxu0
    %1938 = vrot.lane.b32.xlu0 %v1889, 112
    %v1939 = vpop.permute.xlu0 %1938
    %1940 = vrot.lane.b32.xlu0 %v1889, 48
    %v1941 = vpop.permute.xlu0 %1940
    %v1943 = vsel %vm236, %v1939, 0
    %v1946 = vsel %vm236, %v1941, 0
    %1948 = vmatprep.subr.bf16.mxu0 0
    %1949 = vmatpush1.bf16.xpose.msra.mxu0 %v1946
    %1950 = vmatprep.subr.bf16.mxu0 0
    %1951 = vmatpush1.bf16.xpose.msra.mxu0 0
    %1952 = vmatprep.subr.bf16.mxu0 0
    %1953 = vmatpush1.bf16.xpose.msra.mxu0 0
    %1954 = vmatprep.subr.bf16.mxu0 0
    %1955 = vmatpush1.bf16.xpose.msra.mxu0 0
    %1956 = vmatprep.subr.bf16.mxu0 0
    %1957 = vmatpush1.bf16.xpose.msra.mxu0 0
    %1958 = vmatprep.subr.bf16.mxu0 0
    %1959 = vmatpush1.bf16.xpose.msra.mxu0 0
    %1960 = vmatprep.subr.bf16.mxu0 0
    %1961 = vmatpush1.bf16.xpose.msra.mxu0 0
    %1962 = vmatprep.subr.bf16.mxu0 0
    %1963 = vmatpush1.bf16.xpose.msra.mxu0 0
    %1964 = vmatprep.subr.bf16.mxu0 0
    %1965 = vmatpush1.bf16.xpose.msra.mxu0 0
    %1966 = vmatprep.subr.bf16.mxu0 0
    %1967 = vmatpush1.bf16.xpose.msra.mxu0 0
    %1968 = vmatprep.subr.bf16.mxu0 0
    %1969 = vmatpush1.bf16.xpose.msra.mxu0 0
    %1970 = vmatprep.subr.bf16.mxu0 0
    %1971 = vmatpush1.bf16.xpose.msra.mxu0 0
    %1972 = vmatprep.subr.bf16.mxu0 0
    %1973 = vmatpush1.bf16.xpose.msra.mxu0 0
    %1974 = vmatprep.subr.bf16.mxu0 0
    %1975 = vmatpush1.bf16.xpose.msra.mxu0 0
    %1976 = vmatprep.subr.bf16.mxu0 0
    %1977 = vmatpush1.bf16.xpose.msra.mxu0 0
    %1978 = vmatprep.subr.bf16.mxu0 0
    %1979 = vmatpush1.bf16.xpose.msra.mxu0 0
    %1980 = vmatprep.mubr.bf16.mxu0 0
    %1981 = vmatmul.mubr.bf16.gmra.mrb[0].mxu0 %v1943
    %v1982 = vpop.f32.mrb[0].mxu0
    %v1983 = vadd.f32 0.0, %v1982
    %v1984 = vpop.f32.mrb[0].mxu0
    %v1985 = vpop.f32.mrb[0].mxu0
    %v1986 = vpop.f32.mrb[0].mxu0
    %1987 = vdwg.mxu0
    %1988 = vrot.lane.b32.xlu0 %v1889, 96
    %v1989 = vpop.permute.xlu0 %1988
    %1990 = vrot.lane.b32.xlu0 %v1889, 32
    %v1991 = vpop.permute.xlu0 %1990
    %v1993 = vsel %vm236, %v1989, 0
    %v1996 = vsel %vm236, %v1991, 0
    %1998 = vmatprep.subr.bf16.mxu0 0
    %1999 = vmatpush1.bf16.xpose.msra.mxu0 %v1996
    %2000 = vmatprep.subr.bf16.mxu0 0
    %2001 = vmatpush1.bf16.xpose.msra.mxu0 0
    %2002 = vmatprep.subr.bf16.mxu0 0
    %2003 = vmatpush1.bf16.xpose.msra.mxu0 0
    %2004 = vmatprep.subr.bf16.mxu0 0
    %2005 = vmatpush1.bf16.xpose.msra.mxu0 0
    %2006 = vmatprep.subr.bf16.mxu0 0
    %2007 = vmatpush1.bf16.xpose.msra.mxu0 0
    %2008 = vmatprep.subr.bf16.mxu0 0
    %2009 = vmatpush1.bf16.xpose.msra.mxu0 0
    %2010 = vmatprep.subr.bf16.mxu0 0
    %2011 = vmatpush1.bf16.xpose.msra.mxu0 0
    %2012 = vmatprep.subr.bf16.mxu0 0
    %2013 = vmatpush1.bf16.xpose.msra.mxu0 0
    %2014 = vmatprep.subr.bf16.mxu0 0
    %2015 = vmatpush1.bf16.xpose.msra.mxu0 0
    %2016 = vmatprep.subr.bf16.mxu0 0
    %2017 = vmatpush1.bf16.xpose.msra.mxu0 0
    %2018 = vmatprep.subr.bf16.mxu0 0
    %2019 = vmatpush1.bf16.xpose.msra.mxu0 0
    %2020 = vmatprep.subr.bf16.mxu0 0
    %2021 = vmatpush1.bf16.xpose.msra.mxu0 0
    %2022 = vmatprep.subr.bf16.mxu0 0
    %2023 = vmatpush1.bf16.xpose.msra.mxu0 0
    %2024 = vmatprep.subr.bf16.mxu0 0
    %2025 = vmatpush1.bf16.xpose.msra.mxu0 0
    %2026 = vmatprep.subr.bf16.mxu0 0
    %2027 = vmatpush1.bf16.xpose.msra.mxu0 0
    %2028 = vmatprep.subr.bf16.mxu0 0
    %2029 = vmatpush1.bf16.xpose.msra.mxu0 0
    %2030 = vmatprep.mubr.bf16.mxu0 0
    %2031 = vmatmul.mubr.bf16.gmra.mrb[0].mxu0 %v1993
    %v2032 = vpop.f32.mrb[0].mxu0
    %v2033 = vadd.f32 0.0, %v2032
    %v2034 = vpop.f32.mrb[0].mxu0
    %v2035 = vpop.f32.mrb[0].mxu0
    %v2036 = vpop.f32.mrb[0].mxu0
    %2037 = vdwg.mxu0
    %2038 = vrot.lane.b32.xlu0 %v1889, 80
    %v2039 = vpop.permute.xlu0 %2038
    %2040 = vrot.lane.b32.xlu0 %v1889, 16
    %v2041 = vpop.permute.xlu0 %2040
    %v2043 = vsel %vm236, %v2039, 0
    %v2046 = vsel %vm236, %v2041, 0
    %2048 = vmatprep.subr.bf16.mxu0 0
    %2049 = vmatpush1.bf16.xpose.msra.mxu0 %v2046
    %2050 = vmatprep.subr.bf16.mxu0 0
    %2051 = vmatpush1.bf16.xpose.msra.mxu0 0
    %2052 = vmatprep.subr.bf16.mxu0 0
    %2053 = vmatpush1.bf16.xpose.msra.mxu0 0
    %2054 = vmatprep.subr.bf16.mxu0 0
    %2055 = vmatpush1.bf16.xpose.msra.mxu0 0
    %2056 = vmatprep.subr.bf16.mxu0 0
    %2057 = vmatpush1.bf16.xpose.msra.mxu0 0
    %2058 = vmatprep.subr.bf16.mxu0 0
    %2059 = vmatpush1.bf16.xpose.msra.mxu0 0
    %2060 = vmatprep.subr.bf16.mxu0 0
    %2061 = vmatpush1.bf16.xpose.msra.mxu0 0
    %2062 = vmatprep.subr.bf16.mxu0 0
    %2063 = vmatpush1.bf16.xpose.msra.mxu0 0
    %2064 = vmatprep.subr.bf16.mxu0 0
    %2065 = vmatpush1.bf16.xpose.msra.mxu0 0
    %2066 = vmatprep.subr.bf16.mxu0 0
    %2067 = vmatpush1.bf16.xpose.msra.mxu0 0
    %2068 = vmatprep.subr.bf16.mxu0 0
    %2069 = vmatpush1.bf16.xpose.msra.mxu0 0
    %2070 = vmatprep.subr.bf16.mxu0 0
    %2071 = vmatpush1.bf16.xpose.msra.mxu0 0
    %2072 = vmatprep.subr.bf16.mxu0 0
    %2073 = vmatpush1.bf16.xpose.msra.mxu0 0
    %2074 = vmatprep.subr.bf16.mxu0 0
    %2075 = vmatpush1.bf16.xpose.msra.mxu0 0
    %2076 = vmatprep.subr.bf16.mxu0 0
    %2077 = vmatpush1.bf16.xpose.msra.mxu0 0
    %2078 = vmatprep.subr.bf16.mxu0 0
    %2079 = vmatpush1.bf16.xpose.msra.mxu0 0
    %2080 = vmatprep.mubr.bf16.mxu0 0
    %2081 = vmatmul.mubr.bf16.gmra.mrb[0].mxu0 %v2043
    %v2082 = vpop.f32.mrb[0].mxu0
    %v2083 = vadd.f32 0.0, %v2082
    %v2084 = vpop.f32.mrb[0].mxu0
    %v2085 = vpop.f32.mrb[0].mxu0
    %v2086 = vpop.f32.mrb[0].mxu0
    %2087 = vdwg.mxu0
    %v2088 = vadd.f32 %v1734, %v119
    %v2089 = vadd.f32 %v1784, %v119
    %v2090 = vadd.f32 %v1834, %v119
    %v2091 = vadd.f32 %v1884, %v119
    %v2092 = vadd.f32 %v1933, %v123
    %v2093 = vadd.f32 %v1983, %v123
    %v2094 = vadd.f32 %v2033, %v123
    %v2095 = vadd.f32 %v2083, %v123
    %v2096 = vsel %vm640, %v2088, -inf
    %2097 = vmax.xlane.f32.xlu0 %v2096
    %v2098 = vpop.xlane.xlu0 %2097
    %v2099 = vsel %vm640, %v2089, -inf
    %2100 = vmax.xlane.f32.xlu0 %v2099
    %v2101 = vpop.xlane.xlu0 %2100
    %v2102 = vsel %vm640, %v2090, -inf
    %2103 = vmax.xlane.f32.xlu0 %v2102
    %v2104 = vpop.xlane.xlu0 %2103
    %v2105 = vsel %vm640, %v2091, -inf
    %2106 = vmax.xlane.f32.xlu0 %v2105
    %v2107 = vpop.xlane.xlu0 %2106
    %v2108 = vsel %vm640, %v2092, -inf
    %2109 = vmax.xlane.f32.xlu0 %v2108
    %v2110 = vpop.xlane.xlu0 %2109
    %v2111 = vsel %vm640, %v2093, -inf
    %2112 = vmax.xlane.f32.xlu0 %v2111
    %v2113 = vpop.xlane.xlu0 %2112
    %v2114 = vsel %vm640, %v2094, -inf
    %2115 = vmax.xlane.f32.xlu0 %v2114
    %v2116 = vpop.xlane.xlu0 %2115
    %v2117 = vsel %vm640, %v2095, -inf
    %2118 = vmax.xlane.f32.xlu0 %v2117
    %v2119 = vpop.xlane.xlu0 %2118
    %v2120 = vsub.f32 %v2088, %v2098
    %v2121 = vsub.f32 %v2089, %v2101
    %v2122 = vsub.f32 %v2090, %v2104
    %v2123 = vsub.f32 %v2091, %v2107
    %v2124 = vsub.f32 %v2092, %v2110
    %v2125 = vsub.f32 %v2093, %v2113
    %v2126 = vsub.f32 %v2094, %v2116
    %v2127 = vsub.f32 %v2095, %v2119
    %v2128 = vmul.f32 %v2120, 1.442695
    %v2129 = vpow.pop %v2128
    %v2130 = vmul.f32 %v2121, 1.442695
    %v2131 = vpow.pop %v2130
    %v2132 = vmul.f32 %v2122, 1.442695
    %v2133 = vpow.pop %v2132
    %v2134 = vmul.f32 %v2123, 1.442695
    %v2135 = vpow.pop %v2134
    %v2136 = vmul.f32 %v2124, 1.442695
    %v2137 = vpow.pop %v2136
    %v2138 = vmul.f32 %v2125, 1.442695
    %v2139 = vpow.pop %v2138
    %v2140 = vmul.f32 %v2126, 1.442695
    %v2141 = vpow.pop %v2140
    %v2142 = vmul.f32 %v2127, 1.442695
    %v2143 = vpow.pop %v2142
    %v2144 = vsel %vm640, %v2129, 0.0
    %2145 = vadd.xlane.f32.xlu0 %v2144
    %v2146 = vpop.xlane.xlu0 %2145
    %v2147 = vsel %vm640, %v2131, 0.0
    %2148 = vadd.xlane.f32.xlu0 %v2147
    %v2149 = vpop.xlane.xlu0 %2148
    %v2150 = vsel %vm640, %v2133, 0.0
    %2151 = vadd.xlane.f32.xlu0 %v2150
    %v2152 = vpop.xlane.xlu0 %2151
    %v2153 = vsel %vm640, %v2135, 0.0
    %2154 = vadd.xlane.f32.xlu0 %v2153
    %v2155 = vpop.xlane.xlu0 %2154
    %v2156 = vsel %vm640, %v2137, 0.0
    %2157 = vadd.xlane.f32.xlu0 %v2156
    %v2158 = vpop.xlane.xlu0 %2157
    %v2159 = vsel %vm640, %v2139, 0.0
    %2160 = vadd.xlane.f32.xlu0 %v2159
    %v2161 = vpop.xlane.xlu0 %2160
    %v2162 = vsel %vm640, %v2141, 0.0
    %2163 = vadd.xlane.f32.xlu0 %v2162
    %v2164 = vpop.xlane.xlu0 %2163
    %v2165 = vsel %vm640, %v2143, 0.0
    %2166 = vadd.xlane.f32.xlu0 %v2165
    %v2167 = vpop.xlane.xlu0 %2166
    %v2168 = vrcp.pop %v2146
    %v2169 = vrcp.pop %v2149
    %v2170 = vrcp.pop %v2152
    %v2171 = vrcp.pop %v2155
    %v2172 = vrcp.pop %v2158
    %v2173 = vrcp.pop %v2161
    %v2174 = vrcp.pop %v2164
    %v2175 = vrcp.pop %v2167
    %v2176 = vmul.f32 %v2129, %v2168
    %v2177 = vmul.f32 %v2131, %v2169
    %v2178 = vmul.f32 %v2133, %v2170
    %v2179 = vmul.f32 %v2135, %v2171
    %v2180 = vmul.f32 %v2137, %v2172
    %v2181 = vmul.f32 %v2139, %v2173
    %v2182 = vmul.f32 %v2141, %v2174
    %v2183 = vmul.f32 %v2143, %v2175
    %v2184 = vpack.c.bf16 %v2176, %v2176
    %v2186 = vsel %vm640, %v2184, 0
    %v2189 = vsel %vm733, %v1689, 0
    %2191 = vmatprep.subr.bf16.mxu0 0
    %2192 = vmatpush1.bf16.msra.mxu0 %v2189
    %2193 = vmatprep.subr.bf16.mxu0 0
    %2194 = vmatpush1.bf16.msra.mxu0 0
    %2195 = vmatprep.subr.bf16.mxu0 0
    %2196 = vmatpush1.bf16.msra.mxu0 0
    %2197 = vmatprep.subr.bf16.mxu0 0
    %2198 = vmatpush1.bf16.msra.mxu0 0
    %2199 = vmatprep.subr.bf16.mxu0 0
    %2200 = vmatpush1.bf16.msra.mxu0 0
    %2201 = vmatprep.subr.bf16.mxu0 0
    %2202 = vmatpush1.bf16.msra.mxu0 0
    %2203 = vmatprep.subr.bf16.mxu0 0
    %2204 = vmatpush1.bf16.msra.mxu0 0
    %2205 = vmatprep.subr.bf16.mxu0 0
    %2206 = vmatpush1.bf16.msra.mxu0 0
    %2207 = vmatprep.subr.bf16.mxu0 0
    %2208 = vmatpush1.bf16.msra.mxu0 0
    %2209 = vmatprep.subr.bf16.mxu0 0
    %2210 = vmatpush1.bf16.msra.mxu0 0
    %2211 = vmatprep.subr.bf16.mxu0 0
    %2212 = vmatpush1.bf16.msra.mxu0 0
    %2213 = vmatprep.subr.bf16.mxu0 0
    %2214 = vmatpush1.bf16.msra.mxu0 0
    %2215 = vmatprep.subr.bf16.mxu0 0
    %2216 = vmatpush1.bf16.msra.mxu0 0
    %2217 = vmatprep.subr.bf16.mxu0 0
    %2218 = vmatpush1.bf16.msra.mxu0 0
    %2219 = vmatprep.subr.bf16.mxu0 0
    %2220 = vmatpush1.bf16.msra.mxu0 0
    %2221 = vmatprep.subr.bf16.mxu0 0
    %2222 = vmatpush1.bf16.msra.mxu0 0
    %2223 = vmatprep.mubr.bf16.mxu0 0
    %2224 = vmatmul.mubr.bf16.gmra.mrb[0].mxu0 %v2186
    %v2225 = vpop.f32.mrb[0].mxu0
    %v2226 = vadd.f32 0.0, %v2225
    %v2227 = vpop.f32.mrb[0].mxu0
    %v2228 = vpop.f32.mrb[0].mxu0
    %v2229 = vpop.f32.mrb[0].mxu0
    %2230 = vdwg.mxu0
    %v2231 = vpack.c.bf16 %v2177, %v2177
    %2233 = vrot.lane.b32.xlu0 %v1689, 112
    %v2234 = vpop.permute.xlu0 %2233
    %v2236 = vsel %vm640, %v2231, 0
    %v2239 = vsel %vm733, %v2234, 0
    %2241 = vmatprep.subr.bf16.mxu0 0
    %2242 = vmatpush1.bf16.msra.mxu0 %v2239
    %2243 = vmatprep.subr.bf16.mxu0 0
    %2244 = vmatpush1.bf16.msra.mxu0 0
    %2245 = vmatprep.subr.bf16.mxu0 0
    %2246 = vmatpush1.bf16.msra.mxu0 0
    %2247 = vmatprep.subr.bf16.mxu0 0
    %2248 = vmatpush1.bf16.msra.mxu0 0
    %2249 = vmatprep.subr.bf16.mxu0 0
    %2250 = vmatpush1.bf16.msra.mxu0 0
    %2251 = vmatprep.subr.bf16.mxu0 0
    %2252 = vmatpush1.bf16.msra.mxu0 0
    %2253 = vmatprep.subr.bf16.mxu0 0
    %2254 = vmatpush1.bf16.msra.mxu0 0
    %2255 = vmatprep.subr.bf16.mxu0 0
    %2256 = vmatpush1.bf16.msra.mxu0 0
    %2257 = vmatprep.subr.bf16.mxu0 0
    %2258 = vmatpush1.bf16.msra.mxu0 0
    %2259 = vmatprep.subr.bf16.mxu0 0
    %2260 = vmatpush1.bf16.msra.mxu0 0
    %2261 = vmatprep.subr.bf16.mxu0 0
    %2262 = vmatpush1.bf16.msra.mxu0 0
    %2263 = vmatprep.subr.bf16.mxu0 0
    %2264 = vmatpush1.bf16.msra.mxu0 0
    %2265 = vmatprep.subr.bf16.mxu0 0
    %2266 = vmatpush1.bf16.msra.mxu0 0
    %2267 = vmatprep.subr.bf16.mxu0 0
    %2268 = vmatpush1.bf16.msra.mxu0 0
    %2269 = vmatprep.subr.bf16.mxu0 0
    %2270 = vmatpush1.bf16.msra.mxu0 0
    %2271 = vmatprep.subr.bf16.mxu0 0
    %2272 = vmatpush1.bf16.msra.mxu0 0
    %2273 = vmatprep.mubr.bf16.mxu0 0
    %2274 = vmatmul.mubr.bf16.gmra.mrb[0].mxu0 %v2236
    %v2275 = vpop.f32.mrb[0].mxu0
    %v2276 = vadd.f32 0.0, %v2275
    %v2277 = vpop.f32.mrb[0].mxu0
    %v2278 = vpop.f32.mrb[0].mxu0
    %v2279 = vpop.f32.mrb[0].mxu0
    %2280 = vdwg.mxu0
    %v2281 = vpack.c.bf16 %v2178, %v2178
    %2282 = vrot.lane.b32.xlu0 %v1689, 96
    %v2283 = vpop.permute.xlu0 %2282
    %v2285 = vsel %vm640, %v2281, 0
    %v2288 = vsel %vm733, %v2283, 0
    %2290 = vmatprep.subr.bf16.mxu0 0
    %2291 = vmatpush1.bf16.msra.mxu0 %v2288
    %2292 = vmatprep.subr.bf16.mxu0 0
    %2293 = vmatpush1.bf16.msra.mxu0 0
    %2294 = vmatprep.subr.bf16.mxu0 0
    %2295 = vmatpush1.bf16.msra.mxu0 0
    %2296 = vmatprep.subr.bf16.mxu0 0
    %2297 = vmatpush1.bf16.msra.mxu0 0
    %2298 = vmatprep.subr.bf16.mxu0 0
    %2299 = vmatpush1.bf16.msra.mxu0 0
    %2300 = vmatprep.subr.bf16.mxu0 0
    %2301 = vmatpush1.bf16.msra.mxu0 0
    %2302 = vmatprep.subr.bf16.mxu0 0
    %2303 = vmatpush1.bf16.msra.mxu0 0
    %2304 = vmatprep.subr.bf16.mxu0 0
    %2305 = vmatpush1.bf16.msra.mxu0 0
    %2306 = vmatprep.subr.bf16.mxu0 0
    %2307 = vmatpush1.bf16.msra.mxu0 0
    %2308 = vmatprep.subr.bf16.mxu0 0
    %2309 = vmatpush1.bf16.msra.mxu0 0
    %2310 = vmatprep.subr.bf16.mxu0 0
    %2311 = vmatpush1.bf16.msra.mxu0 0
    %2312 = vmatprep.subr.bf16.mxu0 0
    %2313 = vmatpush1.bf16.msra.mxu0 0
    %2314 = vmatprep.subr.bf16.mxu0 0
    %2315 = vmatpush1.bf16.msra.mxu0 0
    %2316 = vmatprep.subr.bf16.mxu0 0
    %2317 = vmatpush1.bf16.msra.mxu0 0
    %2318 = vmatprep.subr.bf16.mxu0 0
    %2319 = vmatpush1.bf16.msra.mxu0 0
    %2320 = vmatprep.subr.bf16.mxu0 0
    %2321 = vmatpush1.bf16.msra.mxu0 0
    %2322 = vmatprep.mubr.bf16.mxu0 0
    %2323 = vmatmul.mubr.bf16.gmra.mrb[0].mxu0 %v2285
    %v2324 = vpop.f32.mrb[0].mxu0
    %v2325 = vadd.f32 0.0, %v2324
    %v2326 = vpop.f32.mrb[0].mxu0
    %v2327 = vpop.f32.mrb[0].mxu0
    %v2328 = vpop.f32.mrb[0].mxu0
    %2329 = vdwg.mxu0
    %v2330 = vpack.c.bf16 %v2179, %v2179
    %2331 = vrot.lane.b32.xlu0 %v1689, 80
    %v2332 = vpop.permute.xlu0 %2331
    %v2334 = vsel %vm640, %v2330, 0
    %v2337 = vsel %vm733, %v2332, 0
    %2339 = vmatprep.subr.bf16.mxu0 0
    %2340 = vmatpush1.bf16.msra.mxu0 %v2337
    %2341 = vmatprep.subr.bf16.mxu0 0
    %2342 = vmatpush1.bf16.msra.mxu0 0
    %2343 = vmatprep.subr.bf16.mxu0 0
    %2344 = vmatpush1.bf16.msra.mxu0 0
    %2345 = vmatprep.subr.bf16.mxu0 0
    %2346 = vmatpush1.bf16.msra.mxu0 0
    %2347 = vmatprep.subr.bf16.mxu0 0
    %2348 = vmatpush1.bf16.msra.mxu0 0
    %2349 = vmatprep.subr.bf16.mxu0 0
    %2350 = vmatpush1.bf16.msra.mxu0 0
    %2351 = vmatprep.subr.bf16.mxu0 0
    %2352 = vmatpush1.bf16.msra.mxu0 0
    %2353 = vmatprep.subr.bf16.mxu0 0
    %2354 = vmatpush1.bf16.msra.mxu0 0
    %2355 = vmatprep.subr.bf16.mxu0 0
    %2356 = vmatpush1.bf16.msra.mxu0 0
    %2357 = vmatprep.subr.bf16.mxu0 0
    %2358 = vmatpush1.bf16.msra.mxu0 0
    %2359 = vmatprep.subr.bf16.mxu0 0
    %2360 = vmatpush1.bf16.msra.mxu0 0
    %2361 = vmatprep.subr.bf16.mxu0 0
    %2362 = vmatpush1.bf16.msra.mxu0 0
    %2363 = vmatprep.subr.bf16.mxu0 0
    %2364 = vmatpush1.bf16.msra.mxu0 0
    %2365 = vmatprep.subr.bf16.mxu0 0
    %2366 = vmatpush1.bf16.msra.mxu0 0
    %2367 = vmatprep.subr.bf16.mxu0 0
    %2368 = vmatpush1.bf16.msra.mxu0 0
    %2369 = vmatprep.subr.bf16.mxu0 0
    %2370 = vmatpush1.bf16.msra.mxu0 0
    %2371 = vmatprep.mubr.bf16.mxu0 0
    %2372 = vmatmul.mubr.bf16.gmra.mrb[0].mxu0 %v2334
    %v2373 = vpop.f32.mrb[0].mxu0
    %v2374 = vadd.f32 0.0, %v2373
    %v2375 = vpop.f32.mrb[0].mxu0
    %v2376 = vpop.f32.mrb[0].mxu0
    %v2377 = vpop.f32.mrb[0].mxu0
    %2378 = vdwg.mxu0
    %2380 = vrot.lane.b32.xlu0 %v2276, 16
    %v2381 = vpop.permute.xlu0 %2380
    %2384 = vrot.lane.b32.xlu0 %v2325, 32
    %v2385 = vpop.permute.xlu0 %2384
    %2388 = vrot.lane.b32.xlu0 %v2374, 48
    %v2389 = vpop.permute.xlu0 %2388
    %v2391 = vsel %vm236, %v2226, %v2381
    %v2392 = vsel %vm938, %v2391, %v2385
    %v2393 = vsel %vm940, %v2392, %v2389
    %v2394 = vpack.c.bf16 %v2180, %v2180
    %v2395 = vrot.slane %v1689, 4
    %v2397 = vsel %vm640, %v2394, 0
    %v2400 = vsel %vm733, %v2395, 0
    %2402 = vmatprep.subr.bf16.mxu0 0
    %2403 = vmatpush1.bf16.msra.mxu0 %v2400
    %2404 = vmatprep.subr.bf16.mxu0 0
    %2405 = vmatpush1.bf16.msra.mxu0 0
    %2406 = vmatprep.subr.bf16.mxu0 0
    %2407 = vmatpush1.bf16.msra.mxu0 0
    %2408 = vmatprep.subr.bf16.mxu0 0
    %2409 = vmatpush1.bf16.msra.mxu0 0
    %2410 = vmatprep.subr.bf16.mxu0 0
    %2411 = vmatpush1.bf16.msra.mxu0 0
    %2412 = vmatprep.subr.bf16.mxu0 0
    %2413 = vmatpush1.bf16.msra.mxu0 0
    %2414 = vmatprep.subr.bf16.mxu0 0
    %2415 = vmatpush1.bf16.msra.mxu0 0
    %2416 = vmatprep.subr.bf16.mxu0 0
    %2417 = vmatpush1.bf16.msra.mxu0 0
    %2418 = vmatprep.subr.bf16.mxu0 0
    %2419 = vmatpush1.bf16.msra.mxu0 0
    %2420 = vmatprep.subr.bf16.mxu0 0
    %2421 = vmatpush1.bf16.msra.mxu0 0
    %2422 = vmatprep.subr.bf16.mxu0 0
    %2423 = vmatpush1.bf16.msra.mxu0 0
    %2424 = vmatprep.subr.bf16.mxu0 0
    %2425 = vmatpush1.bf16.msra.mxu0 0
    %2426 = vmatprep.subr.bf16.mxu0 0
    %2427 = vmatpush1.bf16.msra.mxu0 0
    %2428 = vmatprep.subr.bf16.mxu0 0
    %2429 = vmatpush1.bf16.msra.mxu0 0
    %2430 = vmatprep.subr.bf16.mxu0 0
    %2431 = vmatpush1.bf16.msra.mxu0 0
    %2432 = vmatprep.subr.bf16.mxu0 0
    %2433 = vmatpush1.bf16.msra.mxu0 0
    %2434 = vmatprep.mubr.bf16.mxu0 0
    %2435 = vmatmul.mubr.bf16.gmra.mrb[0].mxu0 %v2397
    %v2436 = vpop.f32.mrb[0].mxu0
    %v2437 = vadd.f32 0.0, %v2436
    %v2438 = vpop.f32.mrb[0].mxu0
    %v2439 = vpop.f32.mrb[0].mxu0
    %v2440 = vpop.f32.mrb[0].mxu0
    %2441 = vdwg.mxu0
    %v2442 = vpack.c.bf16 %v2181, %v2181
    %2443 = vrot.lane.b32.xlu0 %v2395, 112
    %v2444 = vpop.permute.xlu0 %2443
    %v2446 = vsel %vm640, %v2442, 0
    %v2449 = vsel %vm733, %v2444, 0
    %2451 = vmatprep.subr.bf16.mxu0 0
    %2452 = vmatpush1.bf16.msra.mxu0 %v2449
    %2453 = vmatprep.subr.bf16.mxu0 0
    %2454 = vmatpush1.bf16.msra.mxu0 0
    %2455 = vmatprep.subr.bf16.mxu0 0
    %2456 = vmatpush1.bf16.msra.mxu0 0
    %2457 = vmatprep.subr.bf16.mxu0 0
    %2458 = vmatpush1.bf16.msra.mxu0 0
    %2459 = vmatprep.subr.bf16.mxu0 0
    %2460 = vmatpush1.bf16.msra.mxu0 0
    %2461 = vmatprep.subr.bf16.mxu0 0
    %2462 = vmatpush1.bf16.msra.mxu0 0
    %2463 = vmatprep.subr.bf16.mxu0 0
    %2464 = vmatpush1.bf16.msra.mxu0 0
    %2465 = vmatprep.subr.bf16.mxu0 0
    %2466 = vmatpush1.bf16.msra.mxu0 0
    %2467 = vmatprep.subr.bf16.mxu0 0
    %2468 = vmatpush1.bf16.msra.mxu0 0
    %2469 = vmatprep.subr.bf16.mxu0 0
    %2470 = vmatpush1.bf16.msra.mxu0 0
    %2471 = vmatprep.subr.bf16.mxu0 0
    %2472 = vmatpush1.bf16.msra.mxu0 0
    %2473 = vmatprep.subr.bf16.mxu0 0
    %2474 = vmatpush1.bf16.msra.mxu0 0
    %2475 = vmatprep.subr.bf16.mxu0 0
    %2476 = vmatpush1.bf16.msra.mxu0 0
    %2477 = vmatprep.subr.bf16.mxu0 0
    %2478 = vmatpush1.bf16.msra.mxu0 0
    %2479 = vmatprep.subr.bf16.mxu0 0
    %2480 = vmatpush1.bf16.msra.mxu0 0
    %2481 = vmatprep.subr.bf16.mxu0 0
    %2482 = vmatpush1.bf16.msra.mxu0 0
    %2483 = vmatprep.mubr.bf16.mxu0 0
    %2484 = vmatmul.mubr.bf16.gmra.mrb[0].mxu0 %v2446
    %v2485 = vpop.f32.mrb[0].mxu0
    %v2486 = vadd.f32 0.0, %v2485
    %v2487 = vpop.f32.mrb[0].mxu0
    %v2488 = vpop.f32.mrb[0].mxu0
    %v2489 = vpop.f32.mrb[0].mxu0
    %2490 = vdwg.mxu0
    %v2491 = vpack.c.bf16 %v2182, %v2182
    %2492 = vrot.lane.b32.xlu0 %v2395, 96
    %v2493 = vpop.permute.xlu0 %2492
    %v2495 = vsel %vm640, %v2491, 0
    %v2498 = vsel %vm733, %v2493, 0
    %2500 = vmatprep.subr.bf16.mxu0 0
    %2501 = vmatpush1.bf16.msra.mxu0 %v2498
    %2502 = vmatprep.subr.bf16.mxu0 0
    %2503 = vmatpush1.bf16.msra.mxu0 0
    %2504 = vmatprep.subr.bf16.mxu0 0
    %2505 = vmatpush1.bf16.msra.mxu0 0
    %2506 = vmatprep.subr.bf16.mxu0 0
    %2507 = vmatpush1.bf16.msra.mxu0 0
    %2508 = vmatprep.subr.bf16.mxu0 0
    %2509 = vmatpush1.bf16.msra.mxu0 0
    %2510 = vmatprep.subr.bf16.mxu0 0
    %2511 = vmatpush1.bf16.msra.mxu0 0
    %2512 = vmatprep.subr.bf16.mxu0 0
    %2513 = vmatpush1.bf16.msra.mxu0 0
    %2514 = vmatprep.subr.bf16.mxu0 0
    %2515 = vmatpush1.bf16.msra.mxu0 0
    %2516 = vmatprep.subr.bf16.mxu0 0
    %2517 = vmatpush1.bf16.msra.mxu0 0
    %2518 = vmatprep.subr.bf16.mxu0 0
    %2519 = vmatpush1.bf16.msra.mxu0 0
    %2520 = vmatprep.subr.bf16.mxu0 0
    %2521 = vmatpush1.bf16.msra.mxu0 0
    %2522 = vmatprep.subr.bf16.mxu0 0
    %2523 = vmatpush1.bf16.msra.mxu0 0
    %2524 = vmatprep.subr.bf16.mxu0 0
    %2525 = vmatpush1.bf16.msra.mxu0 0
    %2526 = vmatprep.subr.bf16.mxu0 0
    %2527 = vmatpush1.bf16.msra.mxu0 0
    %2528 = vmatprep.subr.bf16.mxu0 0
    %2529 = vmatpush1.bf16.msra.mxu0 0
    %2530 = vmatprep.subr.bf16.mxu0 0
    %2531 = vmatpush1.bf16.msra.mxu0 0
    %2532 = vmatprep.mubr.bf16.mxu0 0
    %2533 = vmatmul.mubr.bf16.gmra.mrb[0].mxu0 %v2495
    %v2534 = vpop.f32.mrb[0].mxu0
    %v2535 = vadd.f32 0.0, %v2534
    %v2536 = vpop.f32.mrb[0].mxu0
    %v2537 = vpop.f32.mrb[0].mxu0
    %v2538 = vpop.f32.mrb[0].mxu0
    %2539 = vdwg.mxu0
    %v2540 = vpack.c.bf16 %v2183, %v2183
    %2541 = vrot.lane.b32.xlu0 %v2395, 80
    %v2542 = vpop.permute.xlu0 %2541
    %v2544 = vsel %vm640, %v2540, 0
    %v2547 = vsel %vm733, %v2542, 0
    %2549 = vmatprep.subr.bf16.mxu0 0
    %2550 = vmatpush1.bf16.msra.mxu0 %v2547
    %2551 = vmatprep.subr.bf16.mxu0 0
    %2552 = vmatpush1.bf16.msra.mxu0 0
    %2553 = vmatprep.subr.bf16.mxu0 0
    %2554 = vmatpush1.bf16.msra.mxu0 0
    %2555 = vmatprep.subr.bf16.mxu0 0
    %2556 = vmatpush1.bf16.msra.mxu0 0
    %2557 = vmatprep.subr.bf16.mxu0 0
    %2558 = vmatpush1.bf16.msra.mxu0 0
    %2559 = vmatprep.subr.bf16.mxu0 0
    %2560 = vmatpush1.bf16.msra.mxu0 0
    %2561 = vmatprep.subr.bf16.mxu0 0
    %2562 = vmatpush1.bf16.msra.mxu0 0
    %2563 = vmatprep.subr.bf16.mxu0 0
    %2564 = vmatpush1.bf16.msra.mxu0 0
    %2565 = vmatprep.subr.bf16.mxu0 0
    %2566 = vmatpush1.bf16.msra.mxu0 0
    %2567 = vmatprep.subr.bf16.mxu0 0
    %2568 = vmatpush1.bf16.msra.mxu0 0
    %2569 = vmatprep.subr.bf16.mxu0 0
    %2570 = vmatpush1.bf16.msra.mxu0 0
    %2571 = vmatprep.subr.bf16.mxu0 0
    %2572 = vmatpush1.bf16.msra.mxu0 0
    %2573 = vmatprep.subr.bf16.mxu0 0
    %2574 = vmatpush1.bf16.msra.mxu0 0
    %2575 = vmatprep.subr.bf16.mxu0 0
    %2576 = vmatpush1.bf16.msra.mxu0 0
    %2577 = vmatprep.subr.bf16.mxu0 0
    %2578 = vmatpush1.bf16.msra.mxu0 0
    %2579 = vmatprep.subr.bf16.mxu0 0
    %2580 = vmatpush1.bf16.msra.mxu0 0
    %2581 = vmatprep.mubr.bf16.mxu0 0
    %2582 = vmatmul.mubr.bf16.gmra.mrb[0].mxu0 %v2544
    %v2583 = vpop.f32.mrb[0].mxu0
    %v2584 = vadd.f32 0.0, %v2583
    %v2585 = vpop.f32.mrb[0].mxu0
    %v2586 = vpop.f32.mrb[0].mxu0
    %v2587 = vpop.f32.mrb[0].mxu0
    %2588 = vdwg.mxu0
    %2590 = vrot.lane.b32.xlu0 %v2486, 16
    %v2591 = vpop.permute.xlu0 %2590
    %2594 = vrot.lane.b32.xlu0 %v2535, 32
    %v2595 = vpop.permute.xlu0 %2594
    %2598 = vrot.lane.b32.xlu0 %v2584, 48
    %v2599 = vpop.permute.xlu0 %2598
    %v2601 = vsel %vm236, %v2437, %v2591
    %v2602 = vsel %vm938, %v2601, %v2595
    %v2603 = vsel %vm940, %v2602, %v2599
    %v2604 = vpack.c.bf16 %v2603, %v2393
    %s2605 = scalar_lea.vmem %s7, 32
    %v2606 = vld [vmem:[%s2605] sm:$0xf]
    %v2607 = vld [vmem:[%s2605 + $0x4] sm:$0xf]
    %v2608 = vld [vmem:[%s2605 + $0x8] sm:$0xf]
    %v2609 = vld [vmem:[%s2605 + $0xc] sm:$0xf]
    %v2610 = vld [vmem:[%s2605 + $0x10] sm:$0xf]
    %v2611 = vld [vmem:[%s2605 + $0x14] sm:$0xf]
    %v2612 = vld [vmem:[%s2605 + $0x18] sm:$0xf]
    %v2613 = vld [vmem:[%s2605 + $0x1c] sm:$0xf]
    %s2614 = scalar_lea.vmem %s8, 1
    %v2615 = vld [vmem:[%s2614] sm:$0x1]
    %v2617 = vlaneseq
    %v2618 = vshrl.u32 %v2617, 7
    %v2619 = vsub.s32 0, %v2618
    %v2620 = vrot.slane %v2615, %v2619
    %v2630 = vunpack.c.l.b16 %v2606
    %v2631 = vunpack.c.l.b16 %v2607
    %v2632 = vunpack.c.l.b16 %v2608
    %v2633 = vunpack.c.l.b16 %v2609
    %v2634 = vunpack.c.l.b16 %v2610
    %v2635 = vunpack.c.l.b16 %v2611
    %v2636 = vunpack.c.l.b16 %v2612
    %v2637 = vunpack.c.l.b16 %v2613
    %v2638 = vpack.c.b16 %v2631, %v2630
    %v2639 = vpack.c.b16 %v2633, %v2632
    %v2640 = vpack.c.b16 %v2635, %v2634
    %v2641 = vpack.c.b16 %v2637, %v2636
    %v2647 = vsel %vm71, %v2604, 0
    %2649 = vmatprep.subr.bf16.mxu0 0
    %2650 = vmatpush1.bf16.msra.mxu0 %v2638
    %2651 = vmatprep.subr.bf16.mxu0 0
    %2652 = vmatpush1.bf16.msra.mxu0 %v2639
    %2653 = vmatprep.subr.bf16.mxu0 0
    %2654 = vmatpush1.bf16.msra.mxu0 %v2640
    %2655 = vmatprep.subr.bf16.mxu0 0
    %2656 = vmatpush1.bf16.msra.mxu0 %v2641
    %2657 = vmatprep.subr.bf16.mxu0 0
    %2658 = vmatpush1.bf16.msra.mxu0 0
    %2659 = vmatprep.subr.bf16.mxu0 0
    %2660 = vmatpush1.bf16.msra.mxu0 0
    %2661 = vmatprep.subr.bf16.mxu0 0
    %2662 = vmatpush1.bf16.msra.mxu0 0
    %2663 = vmatprep.subr.bf16.mxu0 0
    %2664 = vmatpush1.bf16.msra.mxu0 0
    %2665 = vmatprep.subr.bf16.mxu0 0
    %2666 = vmatpush1.bf16.msra.mxu0 0
    %2667 = vmatprep.subr.bf16.mxu0 0
    %2668 = vmatpush1.bf16.msra.mxu0 0
    %2669 = vmatprep.subr.bf16.mxu0 0
    %2670 = vmatpush1.bf16.msra.mxu0 0
    %2671 = vmatprep.subr.bf16.mxu0 0
    %2672 = vmatpush1.bf16.msra.mxu0 0
    %2673 = vmatprep.subr.bf16.mxu0 0
    %2674 = vmatpush1.bf16.msra.mxu0 0
    %2675 = vmatprep.subr.bf16.mxu0 0
    %2676 = vmatpush1.bf16.msra.mxu0 0
    %2677 = vmatprep.subr.bf16.mxu0 0
    %2678 = vmatpush1.bf16.msra.mxu0 0
    %2679 = vmatprep.subr.bf16.mxu0 0
    %2680 = vmatpush1.bf16.msra.mxu0 0
    %2681 = vmatprep.mubr.bf16.mxu0 0
    %2682 = vmatmul.mubr.bf16.gmra.mrb[0].mxu0 %v2647
    %v2683 = vpop.f32.mrb[0].mxu0
    %v2684 = vadd.f32 %v2620, %v2683
    %v2685 = vpop.f32.mrb[0].mxu0
    %v2686 = vpop.f32.mrb[0].mxu0
    %v2687 = vadd.f32 %v2620, %v2686
    %v2688 = vpop.f32.mrb[0].mxu0
    %2689 = vdwg.mxu0
    %v2690 = vadd.f32 %v1577, %v2684
    %v2691 = vadd.f32 %v1578, %v2687
    %s2692 = scalar_lea.vmem %s9, 1
    %v2693 = vld [vmem:[%s2692] sm:$0x1]
    %s2694 = scalar_lea.vmem %s10, 1
    %v2695 = vld [vmem:[%s2694] sm:$0x1]
    %v2696 = vsel %vm71, %v2690, 0.0
    %2697 = vadd.xlane.f32.xlu0 %v2696
    %v2698 = vpop.xlane.xlu0 %2697
    %v2699 = vsel %vm71, %v2691, 0.0
    %2700 = vadd.xlane.f32.xlu0 %v2699
    %v2701 = vpop.xlane.xlu0 %2700
    %v2702 = vmul.f32 %v2698, %v78
    %v2703 = vmul.f32 %v2701, %v78
    %v2704 = vsub.f32 %v2690, %v2702
    %v2705 = vsub.f32 %v2691, %v2703
    %v2706 = vmul.f32 %v2704, %v2704
    %v2707 = vmul.f32 %v2705, %v2705
    %v2708 = vsel %vm71, %v2706, 0.0
    %2709 = vadd.xlane.f32.xlu0 %v2708
    %v2710 = vpop.xlane.xlu0 %2709
    %v2711 = vsel %vm71, %v2707, 0.0
    %2712 = vadd.xlane.f32.xlu0 %v2711
    %v2713 = vpop.xlane.xlu0 %2712
    %v2714 = vmul.f32 %v2710, %v78
    %v2715 = vmul.f32 %v2713, %v78
    %v2716 = vadd.f32 %v2714, 1e-12
    %v2717 = vadd.f32 %v2715, 1e-12
    %v2718 = vrsqrt.pop %v2716
    %v2719 = vrsqrt.pop %v2717
    %v2720 = vmul.f32 %v2704, %v2718
    %v2721 = vmul.f32 %v2705, %v2719
    %v2723 = vlaneseq
    %v2724 = vshrl.u32 %v2723, 7
    %v2725 = vsub.s32 0, %v2724
    %v2726 = vrot.slane %v2693, %v2725
    %v2728 = vmul.f32 %v2720, %v2726
    %v2729 = vmul.f32 %v2721, %v2726
    %v2731 = vlaneseq
    %v2732 = vshrl.u32 %v2731, 7
    %v2733 = vsub.s32 0, %v2732
    %v2734 = vrot.slane %v2695, %v2733
    %v2736 = vadd.f32 %v2728, %v2734
    %v2737 = vadd.f32 %v2729, %v2734
    %v2738 = vpack.c.bf16 %v2737, %v2736
    %s2739 = scalar_lea.vmem %s11, 32
    %v2740 = vld [vmem:[%s2739] sm:$0xf]
    %v2741 = vld [vmem:[%s2739 + $0x4] sm:$0xf]
    %v2742 = vld [vmem:[%s2739 + $0x8] sm:$0xf]
    %v2743 = vld [vmem:[%s2739 + $0xc] sm:$0xf]
    %v2744 = vld [vmem:[%s2739 + $0x10] sm:$0xf]
    %v2745 = vld [vmem:[%s2739 + $0x14] sm:$0xf]
    %v2746 = vld [vmem:[%s2739 + $0x18] sm:$0xf]
    %v2747 = vld [vmem:[%s2739 + $0x1c] sm:$0xf]
    %s2748 = scalar_lea.vmem %s12, 1
    %v2749 = vld [vmem:[%s2748] sm:$0x1]
    %v2751 = vlaneseq
    %v2752 = vshrl.u32 %v2751, 7
    %v2753 = vsub.s32 0, %v2752
    %v2754 = vrot.slane %v2749, %v2753
    %v2764 = vunpack.c.l.b16 %v2740
    %v2765 = vunpack.c.l.b16 %v2741
    %v2766 = vunpack.c.l.b16 %v2742
    %v2767 = vunpack.c.l.b16 %v2743
    %v2768 = vunpack.c.l.b16 %v2744
    %v2769 = vunpack.c.l.b16 %v2745
    %v2770 = vunpack.c.l.b16 %v2746
    %v2771 = vunpack.c.l.b16 %v2747
    %v2772 = vpack.c.b16 %v2765, %v2764
    %v2773 = vpack.c.b16 %v2767, %v2766
    %v2774 = vpack.c.b16 %v2769, %v2768
    %v2775 = vpack.c.b16 %v2771, %v2770
    %v2781 = vsel %vm71, %v2738, 0
    %2783 = vmatprep.subr.bf16.mxu0 0
    %2784 = vmatpush1.bf16.msra.mxu0 %v2772
    %2785 = vmatprep.subr.bf16.mxu0 0
    %2786 = vmatpush1.bf16.msra.mxu0 %v2773
    %2787 = vmatprep.subr.bf16.mxu0 0
    %2788 = vmatpush1.bf16.msra.mxu0 %v2774
    %2789 = vmatprep.subr.bf16.mxu0 0
    %2790 = vmatpush1.bf16.msra.mxu0 %v2775
    %2791 = vmatprep.subr.bf16.mxu0 0
    %2792 = vmatpush1.bf16.msra.mxu0 0
    %2793 = vmatprep.subr.bf16.mxu0 0
    %2794 = vmatpush1.bf16.msra.mxu0 0
    %2795 = vmatprep.subr.bf16.mxu0 0
    %2796 = vmatpush1.bf16.msra.mxu0 0
    %2797 = vmatprep.subr.bf16.mxu0 0
    %2798 = vmatpush1.bf16.msra.mxu0 0
    %2799 = vmatprep.subr.bf16.mxu0 0
    %2800 = vmatpush1.bf16.msra.mxu0 0
    %2801 = vmatprep.subr.bf16.mxu0 0
    %2802 = vmatpush1.bf16.msra.mxu0 0
    %2803 = vmatprep.subr.bf16.mxu0 0
    %2804 = vmatpush1.bf16.msra.mxu0 0
    %2805 = vmatprep.subr.bf16.mxu0 0
    %2806 = vmatpush1.bf16.msra.mxu0 0
    %2807 = vmatprep.subr.bf16.mxu0 0
    %2808 = vmatpush1.bf16.msra.mxu0 0
    %2809 = vmatprep.subr.bf16.mxu0 0
    %2810 = vmatpush1.bf16.msra.mxu0 0
    %2811 = vmatprep.subr.bf16.mxu0 0
    %2812 = vmatpush1.bf16.msra.mxu0 0
    %2813 = vmatprep.subr.bf16.mxu0 0
    %2814 = vmatpush1.bf16.msra.mxu0 0
    %2815 = vmatprep.mubr.bf16.mxu0 0
    %2816 = vmatmul.mubr.bf16.gmra.mrb[0].mxu0 %v2781
    %v2817 = vpop.f32.mrb[0].mxu0
    %v2818 = vadd.f32 %v2754, %v2817
    %v2819 = vpop.f32.mrb[0].mxu0
    %v2820 = vpop.f32.mrb[0].mxu0
    %v2821 = vadd.f32 %v2754, %v2820
    %v2822 = vpop.f32.mrb[0].mxu0
    %2823 = vdwg.mxu0
    %v2824 = vmul.f32 %v2818, 0.70710677
    %v2825 = vmul.f32 %v2821, 0.70710677
    %v2826 = vand.u32 2147483647, %v2824
    %v2827 = vand.u32 2147483647, %v2825
    %v2828 = vmul.f32 %v2826, 0.3275911
    %v2829 = vmul.f32 %v2827, 0.3275911
    %v2830 = vadd.f32 %v2828, 1.0
    %v2831 = vadd.f32 %v2829, 1.0
    %v2832 = vrcp.pop %v2830
    %v2833 = vmul.f32 1.0, %v2832
    %v2834 = vrcp.pop %v2831
    %v2835 = vmul.f32 1.0, %v2834
    %v2836 = vmul.f32 %v2833, 1.0614054
    %v2837 = vmul.f32 %v2835, 1.0614054
    %v2838 = vadd.f32 %v2836, -1.4531521
    %v2839 = vadd.f32 %v2837, -1.4531521
    %v2840 = vmul.f32 %v2833, %v2838
    %v2841 = vmul.f32 %v2835, %v2839
    %v2842 = vadd.f32 %v2840, 1.4214138
    %v2843 = vadd.f32 %v2841, 1.4214138
    %v2844 = vmul.f32 %v2833, %v2842
    %v2845 = vmul.f32 %v2835, %v2843
    %v2846 = vadd.f32 %v2844, -0.28449672
    %v2847 = vadd.f32 %v2845, -0.28449672
    %v2848 = vmul.f32 %v2833, %v2846
    %v2849 = vmul.f32 %v2835, %v2847
    %v2850 = vadd.f32 %v2848, 0.2548296
    %v2851 = vadd.f32 %v2849, 0.2548296
    %v2852 = vmul.f32 %v2833, %v2850
    %v2853 = vmul.f32 %v2835, %v2851
    %v2854 = vsub.f32 0.0, %v2826
    %v2855 = vsub.f32 0.0, %v2827
    %v2856 = vmul.f32 %v2854, %v2826
    %v2857 = vmul.f32 %v2855, %v2827
    %v2858 = vmul.f32 %v2856, 1.442695
    %v2859 = vpow.pop %v2858
    %v2860 = vmul.f32 %v2857, 1.442695
    %v2861 = vpow.pop %v2860
    %v2862 = vmul.f32 %v2852, %v2859
    %v2863 = vmul.f32 %v2853, %v2861
    %v2864 = vsub.f32 1.0, %v2862
    %v2865 = vsub.f32 1.0, %v2863
    %vm2866 = vcmp.ge.f32.partialorder %v2824, 0.0
    %vm2867 = vcmp.ge.f32.partialorder %v2825, 0.0
    %v2868 = vsub.f32 0.0, %v2864
    %v2869 = vsub.f32 0.0, %v2865
    %v2870 = vsel %vm2866, %v2864, %v2868
    %v2871 = vsel %vm2867, %v2865, %v2869
    %v2872 = vmul.f32 %v2818, 0.5
    %v2873 = vmul.f32 %v2821, 0.5
    %v2874 = vadd.f32 %v2870, 1.0
    %v2875 = vadd.f32 %v2871, 1.0
    %v2876 = vmul.f32 %v2872, %v2874
    %v2877 = vmul.f32 %v2873, %v2875
    %v2878 = vpack.c.bf16 %v2877, %v2876
    %s2879 = scalar_lea.vmem %s13, 64
    %v2880 = vld [vmem:[%s2879] sm:$0xf]
    %v2881 = vld [vmem:[%s2879 + $0x4] sm:$0xf]
    %v2882 = vld [vmem:[%s2879 + $0x8] sm:$0xf]
    %v2883 = vld [vmem:[%s2879 + $0xc] sm:$0xf]
    %v2884 = vld [vmem:[%s2879 + $0x10] sm:$0xf]
    %v2885 = vld [vmem:[%s2879 + $0x14] sm:$0xf]
    %v2886 = vld [vmem:[%s2879 + $0x18] sm:$0xf]
    %v2887 = vld [vmem:[%s2879 + $0x1c] sm:$0xf]
    %v2888 = vld [vmem:[%s2879 + $0x20] sm:$0xf]
    %v2889 = vld [vmem:[%s2879 + $0x24] sm:$0xf]
    %v2890 = vld [vmem:[%s2879 + $0x28] sm:$0xf]
    %v2891 = vld [vmem:[%s2879 + $0x2c] sm:$0xf]
    %v2892 = vld [vmem:[%s2879 + $0x30] sm:$0xf]
    %v2893 = vld [vmem:[%s2879 + $0x34] sm:$0xf]
    %v2894 = vld [vmem:[%s2879 + $0x38] sm:$0xf]
    %v2895 = vld [vmem:[%s2879 + $0x3c] sm:$0xf]
    %s2896 = scalar_lea.vmem %s14, 1
    %v2897 = vld [vmem:[%s2896] sm:$0x1]
    %v2899 = vlaneseq
    %v2900 = vshrl.u32 %v2899, 7
    %v2901 = vsub.s32 0, %v2900
    %v2902 = vrot.slane %v2897, %v2901
    %v2920 = vunpack.c.l.b16 %v2880
    %v2921 = vunpack.c.l.b16 %v2881
    %v2922 = vunpack.c.l.b16 %v2882
    %v2923 = vunpack.c.l.b16 %v2883
    %v2924 = vunpack.c.l.b16 %v2884
    %v2925 = vunpack.c.l.b16 %v2885
    %v2926 = vunpack.c.l.b16 %v2886
    %v2927 = vunpack.c.l.b16 %v2887
    %v2928 = vunpack.c.l.b16 %v2888
    %v2929 = vunpack.c.l.b16 %v2889
    %v2930 = vunpack.c.l.b16 %v2890
    %v2931 = vunpack.c.l.b16 %v2891
    %v2932 = vunpack.c.l.b16 %v2892
    %v2933 = vunpack.c.l.b16 %v2893
    %v2934 = vunpack.c.l.b16 %v2894
    %v2935 = vunpack.c.l.b16 %v2895
    %v2936 = vpack.c.b16 %v2921, %v2920
    %v2937 = vpack.c.b16 %v2923, %v2922
    %v2938 = vpack.c.b16 %v2925, %v2924
    %v2939 = vpack.c.b16 %v2927, %v2926
    %v2940 = vpack.c.b16 %v2929, %v2928
    %v2941 = vpack.c.b16 %v2931, %v2930
    %v2942 = vpack.c.b16 %v2933, %v2932
    %v2943 = vpack.c.b16 %v2935, %v2934
    %2952 = vmatprep.subr.bf16.mxu0 0
    %2953 = vmatpush1.bf16.msra.mxu0 %v2936
    %2954 = vmatprep.subr.bf16.mxu0 0
    %2955 = vmatpush1.bf16.msra.mxu0 %v2937
    %2956 = vmatprep.subr.bf16.mxu0 0
    %2957 = vmatpush1.bf16.msra.mxu0 %v2938
    %2958 = vmatprep.subr.bf16.mxu0 0
    %2959 = vmatpush1.bf16.msra.mxu0 %v2939
    %2960 = vmatprep.subr.bf16.mxu0 0
    %2961 = vmatpush1.bf16.msra.mxu0 %v2940
    %2962 = vmatprep.subr.bf16.mxu0 0
    %2963 = vmatpush1.bf16.msra.mxu0 %v2941
    %2964 = vmatprep.subr.bf16.mxu0 0
    %2965 = vmatpush1.bf16.msra.mxu0 %v2942
    %2966 = vmatprep.subr.bf16.mxu0 0
    %2967 = vmatpush1.bf16.msra.mxu0 %v2943
    %2968 = vmatprep.subr.bf16.mxu0 0
    %2969 = vmatpush1.bf16.msra.mxu0 0
    %2970 = vmatprep.subr.bf16.mxu0 0
    %2971 = vmatpush1.bf16.msra.mxu0 0
    %2972 = vmatprep.subr.bf16.mxu0 0
    %2973 = vmatpush1.bf16.msra.mxu0 0
    %2974 = vmatprep.subr.bf16.mxu0 0
    %2975 = vmatpush1.bf16.msra.mxu0 0
    %2976 = vmatprep.subr.bf16.mxu0 0
    %2977 = vmatpush1.bf16.msra.mxu0 0
    %2978 = vmatprep.subr.bf16.mxu0 0
    %2979 = vmatpush1.bf16.msra.mxu0 0
    %2980 = vmatprep.subr.bf16.mxu0 0
    %2981 = vmatpush1.bf16.msra.mxu0 0
    %2982 = vmatprep.subr.bf16.mxu0 0
    %2983 = vmatpush1.bf16.msra.mxu0 0
    %2984 = vmatprep.mubr.bf16.mxu0 0
    %2985 = vmatmul.mubr.bf16.gmra.mrb[0].mxu0 %v2878
    %v2986 = vpop.f32.mrb[0].mxu0
    %v2987 = vadd.f32 %v2902, %v2986
    %v2988 = vpop.f32.mrb[0].mxu0
    %v2989 = vpop.f32.mrb[0].mxu0
    %v2990 = vadd.f32 %v2902, %v2989
    %v2991 = vpop.f32.mrb[0].mxu0
    %2992 = vdwg.mxu0
    %v2993 = vadd.f32 %v2736, %v2987
    %v2994 = vadd.f32 %v2737, %v2990
    %s2995 = scalar_lea.vmem %s15, 1
    %v2996 = vld [vmem:[%s2995] sm:$0x1]
    %s2997 = scalar_lea.vmem %s16, 1
    %v2998 = vld [vmem:[%s2997] sm:$0x1]
    %v2999 = vsel %vm71, %v2993, 0.0
    %3000 = vadd.xlane.f32.xlu0 %v2999
    %v3001 = vpop.xlane.xlu0 %3000
    %v3002 = vsel %vm71, %v2994, 0.0
    %3003 = vadd.xlane.f32.xlu0 %v3002
    %v3004 = vpop.xlane.xlu0 %3003
    %v3005 = vmul.f32 %v3001, %v78
    %v3006 = vmul.f32 %v3004, %v78
    %v3007 = vsub.f32 %v2993, %v3005
    %v3008 = vsub.f32 %v2994, %v3006
    %v3009 = vmul.f32 %v3007, %v3007
    %v3010 = vmul.f32 %v3008, %v3008
    %v3011 = vsel %vm71, %v3009, 0.0
    %3012 = vadd.xlane.f32.xlu0 %v3011
    %v3013 = vpop.xlane.xlu0 %3012
    %v3014 = vsel %vm71, %v3010, 0.0
    %3015 = vadd.xlane.f32.xlu0 %v3014
    %v3016 = vpop.xlane.xlu0 %3015
    %v3017 = vmul.f32 %v3013, %v78
    %v3018 = vmul.f32 %v3016, %v78
    %v3019 = vadd.f32 %v3017, 1e-12
    %v3020 = vadd.f32 %v3018, 1e-12
    %v3021 = vrsqrt.pop %v3019
    %v3022 = vrsqrt.pop %v3020
    %v3023 = vmul.f32 %v3007, %v3021
    %v3024 = vmul.f32 %v3008, %v3022
    %v3026 = vlaneseq
    %v3027 = vshrl.u32 %v3026, 7
    %v3028 = vsub.s32 0, %v3027
    %v3029 = vrot.slane %v2996, %v3028
    %v3031 = vmul.f32 %v3023, %v3029
    %v3032 = vmul.f32 %v3024, %v3029
    %v3034 = vlaneseq
    %v3035 = vshrl.u32 %v3034, 7
    %v3036 = vsub.s32 0, %v3035
    %v3037 = vrot.slane %v2998, %v3036
    %v3039 = vadd.f32 %v3031, %v3037
    %v3040 = vadd.f32 %v3032, %v3037
    %v3042 = vrot.slane %v3040, 7
    %vm3044 = vcmask 1040384
    %v3045 = vsel %vm3044, %v3039, %v3042
    %v3046 = vpack.c.bf16 %v3045, %v3045
    %v3047 = vld [vmem:[%s17] sm:$0xf]
    %v3048 = vld [vmem:[%s17 + $0x4] sm:$0xf]
    %v3049 = vld [vmem:[%s17 + $0x8] sm:$0xf]
    %v3050 = vld [vmem:[%s17 + $0xc] sm:$0xf]
    %v3051 = vld [vmem:[%s17 + $0x10] sm:$0xf]
    %v3052 = vld [vmem:[%s17 + $0x14] sm:$0xf]
    %v3053 = vld [vmem:[%s17 + $0x18] sm:$0xf]
    %v3054 = vld [vmem:[%s17 + $0x1c] sm:$0xf]
    %v3055 = vld [vmem:[%s18] sm:$0x1]
    %v3057 = vlaneseq
    %v3058 = vshrl.u32 %v3057, 7
    %v3059 = vsub.s32 0, %v3058
    %v3060 = vrot.slane %v3055, %v3059
    %v3070 = vunpack.c.l.b16 %v3047
    %v3071 = vunpack.c.l.b16 %v3048
    %v3072 = vunpack.c.l.b16 %v3049
    %v3073 = vunpack.c.l.b16 %v3050
    %v3074 = vunpack.c.l.b16 %v3051
    %v3075 = vunpack.c.l.b16 %v3052
    %v3076 = vunpack.c.l.b16 %v3053
    %v3077 = vunpack.c.l.b16 %v3054
    %v3078 = vpack.c.b16 %v3071, %v3070
    %v3079 = vpack.c.b16 %v3073, %v3072
    %v3080 = vpack.c.b16 %v3075, %v3074
    %v3081 = vpack.c.b16 %v3077, %v3076
    %v3087 = vsel %vm71, %v3046, 0
    %3089 = vmatprep.subr.bf16.mxu0 0
    %3090 = vmatpush1.bf16.msra.mxu0 %v3078
    %3091 = vmatprep.subr.bf16.mxu0 0
    %3092 = vmatpush1.bf16.msra.mxu0 %v3079
    %3093 = vmatprep.subr.bf16.mxu0 0
    %3094 = vmatpush1.bf16.msra.mxu0 %v3080
    %3095 = vmatprep.subr.bf16.mxu0 0
    %3096 = vmatpush1.bf16.msra.mxu0 %v3081
    %3097 = vmatprep.subr.bf16.mxu0 0
    %3098 = vmatpush1.bf16.msra.mxu0 0
    %3099 = vmatprep.subr.bf16.mxu0 0
    %3100 = vmatpush1.bf16.msra.mxu0 0
    %3101 = vmatprep.subr.bf16.mxu0 0
    %3102 = vmatpush1.bf16.msra.mxu0 0
    %3103 = vmatprep.subr.bf16.mxu0 0
    %3104 = vmatpush1.bf16.msra.mxu0 0
    %3105 = vmatprep.subr.bf16.mxu0 0
    %3106 = vmatpush1.bf16.msra.mxu0 0
    %3107 = vmatprep.subr.bf16.mxu0 0
    %3108 = vmatpush1.bf16.msra.mxu0 0
    %3109 = vmatprep.subr.bf16.mxu0 0
    %3110 = vmatpush1.bf16.msra.mxu0 0
    %3111 = vmatprep.subr.bf16.mxu0 0
    %3112 = vmatpush1.bf16.msra.mxu0 0
    %3113 = vmatprep.subr.bf16.mxu0 0
    %3114 = vmatpush1.bf16.msra.mxu0 0
    %3115 = vmatprep.subr.bf16.mxu0 0
    %3116 = vmatpush1.bf16.msra.mxu0 0
    %3117 = vmatprep.subr.bf16.mxu0 0
    %3118 = vmatpush1.bf16.msra.mxu0 0
    %3119 = vmatprep.subr.bf16.mxu0 0
    %3120 = vmatpush1.bf16.msra.mxu0 0
    %3121 = vmatprep.mubr.bf16.mxu0 0
    %3122 = vmatmul.mubr.bf16.gmra.mrb[0].mxu0 %v3087
    %v3123 = vpop.f32.mrb[0].mxu0
    %v3124 = vadd.f32 %v3060, %v3123
    %v3125 = vpop.f32.mrb[0].mxu0
    %v3126 = vpop.f32.mrb[0].mxu0
    %v3127 = vpop.f32.mrb[0].mxu0
    %3128 = vdwg.mxu0
    %3129 = vst [vmem:[#allocation2] sm:$0x3] %v3124
    // Predicated region
    $region78: #{text_classifier_forward.1} parent=1 // pred_check
      _
    $region79: #{text_classifier_forward.1} parent=1 // pred_check_branch
      %3131 = sbr.rel (0) target = $region81
    $region80: #{text_classifier_forward.1} parent=1 // pred_region
      %s3133 = ssub.s32 32, 32
      %3134 = vsyncadd [#allocation3], %s3133
      %s3136 = sshll.u32 [#allocation2], 4
      %s3137 = int_to_ptr.vmem [resolvable:$true] %s3136
      %3139 = dma.vmem_to_hbm [thread:$0]  %s3137, 32, %s19, [#allocation3]
    $region81: #{text_classifier_forward.1} parent=1 // pred_fallthru
      _
    // Predicated region
    $region82: #{text_classifier_forward.1} parent=1 // pred_check
      _
    $region83: #{text_classifier_forward.1} parent=1 // pred_check_branch
      %3141 = sbr.rel (0) target = $region85
    $region84: #{text_classifier_forward.1} parent=1 // pred_region
      %3142 = dma.done [#allocation3], 32
    $region85: #{text_classifier_forward.1} parent=1 // pred_fallthru
      _
    %3143 = vsyncpa [#allocation3], 1

</llo_original>
